<compile_context>
chip_gen: v6e
topology: v6e:2x2x1
jax: 0.10.0
libtpu: 0.0.40
codegen_flags: <defaults>
</compile_context>

<pallas_src>
import functools

import numpy as np
import jax
import jax.numpy as jnp
from jax.experimental import pallas as pl
from jax.experimental.pallas import tpu as pltpu


# ----------------------------------------------------------------------------
# Fused EffStage kernel: all MBConv blocks, B batch elements per grid step
# ----------------------------------------------------------------------------
def _effstage_kernel(*refs, metas, B):
    x_ref = refs[0]
    o_ref = refs[-1]
    consts = refs[1:-1]
    ci = 0

    def take(n):
        nonlocal ci
        out = consts[ci:ci + n]
        ci += n
        return out

    x = x_ref[0]                                      # (Cin, B*HWin) f32, spatial+batch on lanes

    for meta in metas:                                # static unroll over blocks
        hw_in, hw_out, kk = meta["hw_in"], meta["hw_out"], meta["k"] * meta["k"]

        # ---- expand 1x1 conv (BN scale folded into bf16 weight) + bias + swish
        if meta["has_exp"]:
            exp_w_ref, exp_b_ref = take(2)
            f = jnp.dot(exp_w_ref[...], x.astype(jnp.bfloat16),
                        preferred_element_type=jnp.float32)       # (Cexp, B*HWin)
            f = f + exp_b_ref[...]
            f = f * jax.nn.sigmoid(f)
        else:
            f = x

        dw_w_ref, dw_b_ref, sel_ref = take(3)
        se_w1_ref, se_b1_ref, se_w2_ref, se_b2_ref = take(4)
        proj_w_ref, proj_b_ref = take(2)

        dw_w = dw_w_ref[...]                          # (Cexp, k*k), BN scale folded
        dw_b = dw_b_ref[...]                          # (Cexp, 1)
        sel = sel_ref[...]                            # (k*k*HWin, HWout) bf16 0/1
        se_w1 = se_w1_ref[...]                        # (Cexp, Cse)
        se_b1 = se_b1_ref[...]                        # (1, Cse)
        se_w2 = se_w2_ref[...]                        # (Cexp, Cse)
        se_b2 = se_b2_ref[...]                        # (Cexp, 1)

        y_parts = []
        for b in range(B):                            # static unroll over batch tile
            f_b = f[:, b * hw_in:(b + 1) * hw_in]     # (Cexp, HWin)

            # ---- depthwise kxk: pre-scale per tap on the VPU, then ONE bf16
            #      gather matmul on the MXU (pad + stride folded into sel).
            stacked = jnp.concatenate(
                [(f_b * dw_w[:, t:t + 1]).astype(jnp.bfloat16) for t in range(kk)],
                axis=1)                               # (Cexp, k*k*HWin)
            y_b = jnp.dot(stacked, sel,
                          preferred_element_type=jnp.float32) + dw_b   # (Cexp, HWout)
            y_b = y_b * jax.nn.sigmoid(y_b)

            # ---- squeeze-and-excitation (tiny per-element VPU reductions)
            m = jnp.mean(y_b, axis=1, keepdims=True)                             # (Cexp, 1)
            s = jnp.sum(se_w1 * m, axis=0, keepdims=True) + se_b1                # (1, Cse)
            s = s * jax.nn.sigmoid(s)
            g = jnp.sum(se_w2 * s, axis=1, keepdims=True) + se_b2                # (Cexp, 1)
            y_parts.append(y_b * jax.nn.sigmoid(g))

        y = jnp.concatenate(y_parts, axis=1)          # (Cexp, B*HWout) lane-dense

        # ---- linear projection (BN scale folded into bf16 weight) + bias + skip
        out = jnp.dot(proj_w_ref[...], y.astype(jnp.bfloat16),
                      preferred_element_type=jnp.float32) + proj_b_ref[...]      # (Cout, B*HWout)
        if meta["has_skip"]:
            out = out + x                             # stride==1 and Cin==Cout guaranteed
        x = out

    o_ref[0] = x


def effstage_forward(x_nchw, stage, *, B):
    """Run the whole stage as one pallas_call.

    x_nchw: (N, Cin, H, W).  B batch elements are folded into the lane axis of
    each grid step; grid = N // B.
    """
    N, cin, H, W = x_nchw.shape
    assert N % B == 0, "batch must be divisible by the per-step batch tile B"
    metas = tuple(blk["meta"] for blk in stage)
    cout = stage[-1]["cout"]
    hw_in0 = H * W
    hw_out = metas[-1]["hw_out"]
    Ho, Wo = metas[-1]["Ho"], metas[-1]["Wo"]

    # Host-side layout: (N, Cin, H*W) -> (N/B, Cin, B*H*W), batch contiguous on lanes.
    x_t = (x_nchw.reshape(N // B, B, cin, hw_in0)
                 .transpose(0, 2, 1, 3)
                 .reshape(N // B, cin, B * hw_in0))

    inputs = [x_t]
    in_specs = [pl.BlockSpec((1, cin, B * hw_in0), lambda g: (g, 0, 0))]

    def add_const(arr):
        # Constant blocks: grid-invariant index_map, so Pallas fetches them once.
        assert arr.ndim == 2
        inputs.append(arr)
        in_specs.append(pl.BlockSpec(arr.shape, lambda g: (0, 0)))

    for blk in stage:
        fp = blk["fused"]
        if blk["meta"]["has_exp"]:
            add_const(fp["exp_w_t"])
            add_const(fp["exp_b"])
        add_const(fp["dw_w_t"])
        add_const(fp["dw_b"])
        add_const(fp["sel_flat"])
        add_const(fp["se_w1"])
        add_const(fp["se_b1"])
        add_const(fp["se_w2_t"])
        add_const(fp["se_b2"])
        add_const(fp["proj_w_t"])
        add_const(fp["proj_b"])

    kernel_fn = functools.partial(_effstage_kernel, metas=metas, B=B)

    out = pl.pallas_call(
        kernel_fn,
        out_shape=jax.ShapeDtypeStruct((N // B, cout, B * hw_out), jnp.float32),
        grid=(N // B,),
        in_specs=in_specs,
        out_specs=pl.BlockSpec((1, cout, B * hw_out), lambda g: (g, 0, 0)),
        compiler_params=pltpu.CompilerParams(dimension_semantics=("parallel",)),
    )(*inputs)

    return (out.reshape(N // B, cout, B, hw_out)
               .transpose(0, 2, 1, 3)
               .reshape(N, cout, Ho, Wo))


# ----------------------------------------------------------------------------
# Offline parameter preparation: BN folding, weight transposes, tap gather mats
# ----------------------------------------------------------------------------
def _make_dw_selection(H, W, k, stride):
    """sel[t, yi*W+xi, yo*Wo+xo] = 1 iff input pixel (yi, xi) is the tap-t source
    of strided output pixel (yo, xo) for a zero-padded depthwise conv."""
    pad = (k - 1) // 2
    Ho = (H + 2 * pad - k) // stride + 1
    Wo = (W + 2 * pad - k) // stride + 1
    sel = np.zeros((k * k, H * W, Ho * Wo), np.float32)
    for dy in range(k):
        for dx in range(k):
            t = dy * k + dx
            for yo in range(Ho):
                yi = yo * stride + dy - pad
                if yi < 0 or yi >= H:
                    continue
                for xo in range(Wo):
                    xi = xo * stride + dx - pad
                    if 0 <= xi < W:
                        sel[t, yi * W + xi, yo * Wo + xo] = 1.0
    return sel, Ho, Wo


def prepare_block(p, w_in_b, w_out_b, k, stride, H, W, *, has_exp, has_skip):
    sel, Ho, Wo = _make_dw_selection(H, W, k, stride)
    kk = k * k
    cexp = p["dw_w"].shape[1]
    meta = dict(k=k, hw_in=H * W, hw_out=Ho * Wo, Ho=Ho, Wo=Wo,
                cexp=cexp, has_exp=has_exp, has_skip=has_skip)
    fp = {}
    if has_exp:
        fp["exp_w_t"] = (p["exp_w"].T * p["exp_scale"].reshape(-1, 1)).astype(jnp.bfloat16)
        fp["exp_b"] = p["exp_bias"].reshape(-1, 1).astype(jnp.float32)
    fp["dw_w_t"] = (p["dw_w"].T * p["dw_scale"].reshape(-1, 1)).astype(jnp.float32)
    fp["dw_b"] = p["dw_bias"].reshape(-1, 1).astype(jnp.float32)
    # 0/1 entries -> exact in bf16; flattened so the k*k taps are one contraction.
    fp["sel_flat"] = jnp.asarray(sel.reshape(kk * H * W, Ho * Wo), dtype=jnp.bfloat16)
    fp["se_w1"] = p["se_w1"].astype(jnp.float32)                    # (Cexp, Cse)
    fp["se_b1"] = p["se_b1"].astype(jnp.float32)                    # (1, Cse)
    fp["se_w2_t"] = p["se_w2"].T.astype(jnp.float32)                # (Cexp, Cse)
    fp["se_b2"] = p["se_b2"].reshape(-1, 1).astype(jnp.float32)     # (Cexp, 1)
    fp["proj_w_t"] = (p["proj_w"].T * p["proj_scale"].reshape(-1, 1)).astype(jnp.bfloat16)
    fp["proj_b"] = p["proj_bias"].reshape(-1, 1).astype(jnp.float32)
    return dict(meta=meta, fused=fp, cin=w_in_b, cout=w_out_b)


# ----------------------------------------------------------------------------
# Pure-JAX reference (mirrors PyTorch eval-mode semantics) for validation
# ----------------------------------------------------------------------------
def ref_mbconv(x, p, kernel, stride, has_skip, has_exp):
    f = x
    if has_exp:
        f = jnp.einsum("nhwc,cd->nhwd", f, p["exp_w"])
        f = f * p["exp_scale"][0] + p["exp_bias"][0]
        f = f * jax.nn.sigmoid(f)
    pad = (kernel - 1) // 2
    C = f.shape[-1]
    dw = p["dw_w"].reshape(kernel, kernel, 1, C)
    f = jax.lax.conv_general_dilated(
        f, dw, (stride, stride), ((pad, pad), (pad, pad)),
        dimension_numbers=("NHWC", "HWIO", "NHWC"), feature_group_count=C)
    f = f * p["dw_scale"][0] + p["dw_bias"][0]
    f = f * jax.nn.sigmoid(f)
    m = jnp.mean(f, axis=(1, 2), keepdims=True)
    s = jnp.einsum("nijc,cd->nijd", m, p["se_w1"]) + p["se_b1"][0]
    s = s * jax.nn.sigmoid(s)
    s = jnp.einsum("nijc,cd->nijd", s, p["se_w2"]) + p["se_b2"][0]
    f = f * jax.nn.sigmoid(s)
    y = jnp.einsum("nhwc,cd->nhwd", f, p["proj_w"])
    y = y * p["proj_scale"][0] + p["proj_bias"][0]
    if has_skip:
        y = y + x
    return y


# ----------------------------------------------------------------------------
# Deterministic parameter construction (BN folded to scale/bias, eval mode)
# ----------------------------------------------------------------------------
def fold_bn(key, C, eps=1e-5):
    k1, k2, k3, k4 = jax.random.split(key, 4)
    gamma = jax.random.uniform(k1, (C,), minval=0.5, maxval=1.5)
    beta = 0.1 * jax.random.normal(k2, (C,))
    mean = 0.1 * jax.random.normal(k3, (C,))
    var = jax.random.uniform(k4, (C,), minval=0.5, maxval=1.5)
    scale = gamma / jnp.sqrt(var + eps)
    bias = beta - mean * scale
    return (scale.reshape(1, C).astype(jnp.float32),
            bias.reshape(1, C).astype(jnp.float32))


def make_mbconv_params(key, w_in, w_exp, w_se, w_out, k):
    ks = jax.random.split(key, 10)
    p = {}
    p["exp_w"] = 0.1 * jax.random.normal(ks[0], (w_in, w_exp), dtype=jnp.float32)
    p["exp_scale"], p["exp_bias"] = fold_bn(ks[1], w_exp)
    p["dw_w"] = 0.1 * jax.random.normal(ks[2], (k * k, w_exp), dtype=jnp.float32)
    p["dw_scale"], p["dw_bias"] = fold_bn(ks[3], w_exp)
    p["se_w1"] = 0.1 * jax.random.normal(ks[4], (w_exp, w_se), dtype=jnp.float32)
    p["se_b1"] = 0.1 * jax.random.normal(ks[5], (1, w_se), dtype=jnp.float32)
    p["se_w2"] = 0.1 * jax.random.normal(ks[6], (w_se, w_exp), dtype=jnp.float32)
    p["se_b2"] = 0.1 * jax.random.normal(ks[7], (1, w_exp), dtype=jnp.float32)
    p["proj_w"] = 0.1 * jax.random.normal(ks[8], (w_exp, w_out), dtype=jnp.float32)
    p["proj_scale"], p["proj_bias"] = fold_bn(ks[9], w_out)
    return p


# ----------------------------------------------------------------------------
if __name__ == "__main__":
    key = jax.random.PRNGKey(0)
    kx, kp = jax.random.split(key)

    # EffStage(w_in=8, exp_r=2.0, kernel=3, stride=2, se_r=0.25, w_out=16, d=2)
    N, C_in, H, W = 4, 8, 16, 16
    B = 2   # batch elements folded into the lane axis per grid step
            # -> output lane width B*HWout = 128 (lane-dense store) and grid = 2
            #    (both v7x TensorCores used).  On v6e, B=4 would give 256 lanes.
    w_in, exp_r, kernel, stride, se_r, w_out, d = 8, 2.0, 3, 2, 0.25, 16, 2

    x_nchw = jax.random.normal(kx, (N, C_in, H, W), dtype=jnp.float32)

    # Build the stage (BN-folded fused params + raw params for the reference).
    stage = []
    bkeys = jax.random.split(kp, d)
    cur_h, cur_w = H, W
    for i in range(d):
        b_stride = stride if i == 0 else 1
        b_w_in = w_in if i == 0 else w_out
        w_exp = int(b_w_in * exp_r)
        w_se = int(b_w_in * se_r)
        has_exp = (w_exp != b_w_in)
        has_skip = (b_stride == 1 and b_w_in == w_out)
        raw = make_mbconv_params(bkeys[i], b_w_in, w_exp, w_se, w_out, kernel)
        blk = prepare_block(raw, b_w_in, w_out, kernel, b_stride, cur_h, cur_w,
                            has_exp=has_exp, has_skip=has_skip)
        blk["raw"] = raw
        blk["stride"] = b_stride
        stage.append(blk)
        cur_h, cur_w = blk["meta"]["Ho"], blk["meta"]["Wo"]
    # TODO(synk): drop_connect is a training-only op (effnet_cfg.EN.DC_RATIO); eval mode assumed.

    # ---- Pallas path: whole stage in one fused kernel ----
    out_nchw = effstage_forward(x_nchw, stage, B=B)
    out_nchw = jax.block_until_ready(out_nchw)
    assert out_nchw.shape == (N, w_out, H // stride, W // stride), out_nchw.shape

    # ---- pure-JAX reference (NHWC) ----
    y_ref = jnp.transpose(x_nchw, (0, 2, 3, 1))
    for blk in stage:
        y_ref = ref_mbconv(y_ref, blk["raw"], kernel, blk["stride"],
                           blk["meta"]["has_skip"], blk["meta"]["has_exp"])
    y_ref_nchw = jnp.transpose(y_ref, (0, 3, 1, 2))

    err = float(jnp.max(jnp.abs(out_nchw - y_ref_nchw)))
    # Tolerance accounts for bf16 MXU operands in the kernel vs the f32
    # (default-precision) reference; logic errors would be >> this.
    assert err < 3e-2, f"max abs err {err}"
    print("KERNEL_OK")
</pallas_src>

<mosaic_0001>
module attributes {stable_mosaic.version = 11 : i64} {
  func.func @_effstage_kernel(%arg0: i32, %arg1: memref<1x8x512xf32, #tpu.memory_space<vmem>>, %arg2: memref<16x8xbf16, #tpu.memory_space<vmem>>, %arg3: memref<16x1xf32, #tpu.memory_space<vmem>>, %arg4: memref<16x9xf32, #tpu.memory_space<vmem>>, %arg5: memref<16x1xf32, #tpu.memory_space<vmem>>, %arg6: memref<2304x64xbf16, #tpu.memory_space<vmem>>, %arg7: memref<16x2xf32, #tpu.memory_space<vmem>>, %arg8: memref<1x2xf32, #tpu.memory_space<vmem>>, %arg9: memref<16x2xf32, #tpu.memory_space<vmem>>, %arg10: memref<16x1xf32, #tpu.memory_space<vmem>>, %arg11: memref<16x16xbf16, #tpu.memory_space<vmem>>, %arg12: memref<16x1xf32, #tpu.memory_space<vmem>>, %arg13: memref<32x16xbf16, #tpu.memory_space<vmem>>, %arg14: memref<32x1xf32, #tpu.memory_space<vmem>>, %arg15: memref<32x9xf32, #tpu.memory_space<vmem>>, %arg16: memref<32x1xf32, #tpu.memory_space<vmem>>, %arg17: memref<576x64xbf16, #tpu.memory_space<vmem>>, %arg18: memref<32x4xf32, #tpu.memory_space<vmem>>, %arg19: memref<1x4xf32, #tpu.memory_space<vmem>>, %arg20: memref<32x4xf32, #tpu.memory_space<vmem>>, %arg21: memref<32x1xf32, #tpu.memory_space<vmem>>, %arg22: memref<16x32xbf16, #tpu.memory_space<vmem>>, %arg23: memref<16x1xf32, #tpu.memory_space<vmem>>, %arg24: memref<1x16x128xf32, #tpu.memory_space<vmem>>) attributes {dimension_semantics = [#tpu.dimension_semantics<parallel>], iteration_bounds = array<i64: 2>, scalar_prefetch = 0 : i64, scratch_operands = 0 : i64, tpu.core_type = #tpu.core_type<tc>, window_params = [{transform_indices = @transform_0, window_bounds = array<i64: 1, 8, 512>}, {pipeline_mode = #tpu.pipeline_mode<synchronous>, transform_indices = @transform_1, window_bounds = array<i64: 16, 8>}, {pipeline_mode = #tpu.pipeline_mode<synchronous>, transform_indices = @transform_2, window_bounds = array<i64: 16, 1>}, {pipeline_mode = #tpu.pipeline_mode<synchronous>, transform_indices = @transform_3, window_bounds = array<i64: 16, 9>}, {pipeline_mode = #tpu.pipeline_mode<synchronous>, transform_indices = @transform_4, window_bounds = array<i64: 16, 1>}, {pipeline_mode = #tpu.pipeline_mode<synchronous>, transform_indices = @transform_5, window_bounds = array<i64: 2304, 64>}, {pipeline_mode = #tpu.pipeline_mode<synchronous>, transform_indices = @transform_6, window_bounds = array<i64: 16, 2>}, {pipeline_mode = #tpu.pipeline_mode<synchronous>, transform_indices = @transform_7, window_bounds = array<i64: 1, 2>}, {pipeline_mode = #tpu.pipeline_mode<synchronous>, transform_indices = @transform_8, window_bounds = array<i64: 16, 2>}, {pipeline_mode = #tpu.pipeline_mode<synchronous>, transform_indices = @transform_9, window_bounds = array<i64: 16, 1>}, {pipeline_mode = #tpu.pipeline_mode<synchronous>, transform_indices = @transform_10, window_bounds = array<i64: 16, 16>}, {pipeline_mode = #tpu.pipeline_mode<synchronous>, transform_indices = @transform_11, window_bounds = array<i64: 16, 1>}, {pipeline_mode = #tpu.pipeline_mode<synchronous>, transform_indices = @transform_12, window_bounds = array<i64: 32, 16>}, {pipeline_mode = #tpu.pipeline_mode<synchronous>, transform_indices = @transform_13, window_bounds = array<i64: 32, 1>}, {pipeline_mode = #tpu.pipeline_mode<synchronous>, transform_indices = @transform_14, window_bounds = array<i64: 32, 9>}, {pipeline_mode = #tpu.pipeline_mode<synchronous>, transform_indices = @transform_15, window_bounds = array<i64: 32, 1>}, {pipeline_mode = #tpu.pipeline_mode<synchronous>, transform_indices = @transform_16, window_bounds = array<i64: 576, 64>}, {pipeline_mode = #tpu.pipeline_mode<synchronous>, transform_indices = @transform_17, window_bounds = array<i64: 32, 4>}, {pipeline_mode = #tpu.pipeline_mode<synchronous>, transform_indices = @transform_18, window_bounds = array<i64: 1, 4>}, {pipeline_mode = #tpu.pipeline_mode<synchronous>, transform_indices = @transform_19, window_bounds = array<i64: 32, 4>}, {pipeline_mode = #tpu.pipeline_mode<synchronous>, transform_indices = @transform_20, window_bounds = array<i64: 32, 1>}, {pipeline_mode = #tpu.pipeline_mode<synchronous>, transform_indices = @transform_21, window_bounds = array<i64: 16, 32>}, {pipeline_mode = #tpu.pipeline_mode<synchronous>, transform_indices = @transform_22, window_bounds = array<i64: 16, 1>}, {transform_indices = @transform_23, window_bounds = array<i64: 1, 16, 128>}]} {
    %c0 = arith.constant 0 : index
    %c0_0 = arith.constant 0 : index
    %c0_1 = arith.constant 0 : index
    %0 = vector.load %arg1[%c0, %c0_0, %c0_1] : memref<1x8x512xf32, #tpu.memory_space<vmem>>, vector<1x8x512xf32>
    %1 = vector.shape_cast %0 : vector<1x8x512xf32> to vector<8x512xf32>
    %c0_2 = arith.constant 0 : index
    %c0_3 = arith.constant 0 : index
    %2 = vector.load %arg2[%c0_2, %c0_3] : memref<16x8xbf16, #tpu.memory_space<vmem>>, vector<16x8xbf16>
    %3 = arith.truncf %1 : vector<8x512xf32> to vector<8x512xbf16>
    %cst = arith.constant dense<0.000000e+00> : vector<16x512xf32>
    %4 = tpu.matmul %2, %3, %cst {dimension_numbers = #tpu.dot_dimension_numbers<[1], [0], [0], [1], [0, 0, 1, 1], [], []>} : vector<16x8xbf16>, vector<8x512xbf16>, vector<16x512xf32> -> vector<16x512xf32>
    %c0_4 = arith.constant 0 : index
    %c0_5 = arith.constant 0 : index
    %5 = vector.load %arg3[%c0_4, %c0_5] : memref<16x1xf32, #tpu.memory_space<vmem>>, vector<16x1xf32>
    %6 = vector.broadcast %5 : vector<16x1xf32> to vector<16x512xf32>
    %7 = arith.addf %4, %6 : vector<16x512xf32>
    %8 = arith.negf %7 : vector<16x512xf32>
    %9 = math.exp %8 : vector<16x512xf32>
    %cst_6 = arith.constant 1.000000e+00 : f32
    %10 = vector.broadcast %cst_6 : f32 to vector<16x512xf32>
    %11 = arith.addf %10, %9 : vector<16x512xf32>
    %12 = arith.divf %10, %11 : vector<16x512xf32>
    %13 = arith.mulf %7, %12 : vector<16x512xf32>
    %c0_7 = arith.constant 0 : index
    %c0_8 = arith.constant 0 : index
    %14 = vector.load %arg4[%c0_7, %c0_8] : memref<16x9xf32, #tpu.memory_space<vmem>>, vector<16x9xf32>
    %c0_9 = arith.constant 0 : index
    %c0_10 = arith.constant 0 : index
    %15 = vector.load %arg5[%c0_9, %c0_10] : memref<16x1xf32, #tpu.memory_space<vmem>>, vector<16x1xf32>
    %c0_11 = arith.constant 0 : index
    %c0_12 = arith.constant 0 : index
    %16 = vector.load %arg6[%c0_11, %c0_12] : memref<2304x64xbf16, #tpu.memory_space<vmem>>, vector<2304x64xbf16>
    %c0_13 = arith.constant 0 : index
    %c0_14 = arith.constant 0 : index
    %17 = vector.load %arg7[%c0_13, %c0_14] : memref<16x2xf32, #tpu.memory_space<vmem>>, vector<16x2xf32>
    %c0_15 = arith.constant 0 : index
    %c0_16 = arith.constant 0 : index
    %18 = vector.load %arg8[%c0_15, %c0_16] : memref<1x2xf32, #tpu.memory_space<vmem>>, vector<1x2xf32>
    %c0_17 = arith.constant 0 : index
    %c0_18 = arith.constant 0 : index
    %19 = vector.load %arg9[%c0_17, %c0_18] : memref<16x2xf32, #tpu.memory_space<vmem>>, vector<16x2xf32>
    %c0_19 = arith.constant 0 : index
    %c0_20 = arith.constant 0 : index
    %20 = vector.load %arg10[%c0_19, %c0_20] : memref<16x1xf32, #tpu.memory_space<vmem>>, vector<16x1xf32>
    %21 = vector.extract_strided_slice %13 {offsets = [0, 0], sizes = [16, 256], strides = [1, 1]} : vector<16x512xf32> to vector<16x256xf32>
    %22 = vector.extract_strided_slice %14 {offsets = [0, 0], sizes = [16, 1], strides = [1, 1]} : vector<16x9xf32> to vector<16x1xf32>
    %23 = vector.broadcast %22 : vector<16x1xf32> to vector<16x256xf32>
    %24 = arith.mulf %21, %23 : vector<16x256xf32>
    %25 = arith.truncf %24 : vector<16x256xf32> to vector<16x256xbf16>
    %26 = vector.extract_strided_slice %14 {offsets = [0, 1], sizes = [16, 1], strides = [1, 1]} : vector<16x9xf32> to vector<16x1xf32>
    %27 = vector.broadcast %26 : vector<16x1xf32> to vector<16x256xf32>
    %28 = arith.mulf %21, %27 : vector<16x256xf32>
    %29 = arith.truncf %28 : vector<16x256xf32> to vector<16x256xbf16>
    %30 = vector.extract_strided_slice %14 {offsets = [0, 2], sizes = [16, 1], strides = [1, 1]} : vector<16x9xf32> to vector<16x1xf32>
    %31 = vector.broadcast %30 : vector<16x1xf32> to vector<16x256xf32>
    %32 = arith.mulf %21, %31 : vector<16x256xf32>
    %33 = arith.truncf %32 : vector<16x256xf32> to vector<16x256xbf16>
    %34 = vector.extract_strided_slice %14 {offsets = [0, 3], sizes = [16, 1], strides = [1, 1]} : vector<16x9xf32> to vector<16x1xf32>
    %35 = vector.broadcast %34 : vector<16x1xf32> to vector<16x256xf32>
    %36 = arith.mulf %21, %35 : vector<16x256xf32>
    %37 = arith.truncf %36 : vector<16x256xf32> to vector<16x256xbf16>
    %38 = vector.extract_strided_slice %14 {offsets = [0, 4], sizes = [16, 1], strides = [1, 1]} : vector<16x9xf32> to vector<16x1xf32>
    %39 = vector.broadcast %38 : vector<16x1xf32> to vector<16x256xf32>
    %40 = arith.mulf %21, %39 : vector<16x256xf32>
    %41 = arith.truncf %40 : vector<16x256xf32> to vector<16x256xbf16>
    %42 = vector.extract_strided_slice %14 {offsets = [0, 5], sizes = [16, 1], strides = [1, 1]} : vector<16x9xf32> to vector<16x1xf32>
    %43 = vector.broadcast %42 : vector<16x1xf32> to vector<16x256xf32>
    %44 = arith.mulf %21, %43 : vector<16x256xf32>
    %45 = arith.truncf %44 : vector<16x256xf32> to vector<16x256xbf16>
    %46 = vector.extract_strided_slice %14 {offsets = [0, 6], sizes = [16, 1], strides = [1, 1]} : vector<16x9xf32> to vector<16x1xf32>
    %47 = vector.broadcast %46 : vector<16x1xf32> to vector<16x256xf32>
    %48 = arith.mulf %21, %47 : vector<16x256xf32>
    %49 = arith.truncf %48 : vector<16x256xf32> to vector<16x256xbf16>
    %50 = vector.extract_strided_slice %14 {offsets = [0, 7], sizes = [16, 1], strides = [1, 1]} : vector<16x9xf32> to vector<16x1xf32>
    %51 = vector.broadcast %50 : vector<16x1xf32> to vector<16x256xf32>
    %52 = arith.mulf %21, %51 : vector<16x256xf32>
    %53 = arith.truncf %52 : vector<16x256xf32> to vector<16x256xbf16>
    %54 = vector.extract_strided_slice %14 {offsets = [0, 8], sizes = [16, 1], strides = [1, 1]} : vector<16x9xf32> to vector<16x1xf32>
    %55 = vector.broadcast %54 : vector<16x1xf32> to vector<16x256xf32>
    %56 = arith.mulf %21, %55 : vector<16x256xf32>
    %57 = arith.truncf %56 : vector<16x256xf32> to vector<16x256xbf16>
    %58 = tpu.concatenate %25, %29, %33, %37, %41, %45, %49, %53, %57 in 1 : vector<16x256xbf16>, vector<16x256xbf16>, vector<16x256xbf16>, vector<16x256xbf16>, vector<16x256xbf16>, vector<16x256xbf16>, vector<16x256xbf16>, vector<16x256xbf16>, vector<16x256xbf16> -> vector<16x2304xbf16>
    %cst_21 = arith.constant dense<0.000000e+00> : vector<16x64xf32>
    %59 = tpu.matmul %58, %16, %cst_21 {dimension_numbers = #tpu.dot_dimension_numbers<[1], [0], [0], [1], [0, 0, 1, 1], [], []>} : vector<16x2304xbf16>, vector<2304x64xbf16>, vector<16x64xf32> -> vector<16x64xf32>
    %60 = vector.broadcast %15 : vector<16x1xf32> to vector<16x64xf32>
    %61 = arith.addf %59, %60 : vector<16x64xf32>
    %62 = arith.negf %61 : vector<16x64xf32>
    %63 = math.exp %62 : vector<16x64xf32>
    %cst_22 = arith.constant 1.000000e+00 : f32
    %64 = vector.broadcast %cst_22 : f32 to vector<16x64xf32>
    %65 = arith.addf %64, %63 : vector<16x64xf32>
    %66 = arith.divf %64, %65 : vector<16x64xf32>
    %67 = arith.mulf %61, %66 : vector<16x64xf32>
    %cst_23 = arith.constant dense<0.000000e+00> : vector<16xf32>
    %68 = vector.multi_reduction <add>, %67, %cst_23 [1] : vector<16x64xf32> to vector<16xf32>
    %69 = vector.shape_cast %68 : vector<16xf32> to vector<16x1xf32>
    %cst_24 = arith.constant 6.400000e+01 : f32
    %70 = vector.broadcast %cst_24 : f32 to vector<16x1xf32>
    %71 = arith.divf %69, %70 : vector<16x1xf32>
    %72 = vector.broadcast %71 : vector<16x1xf32> to vector<16x2xf32>
    %73 = arith.mulf %17, %72 : vector<16x2xf32>
    %cst_25 = arith.constant dense<0.000000e+00> : vector<2xf32>
    %74 = vector.multi_reduction <add>, %73, %cst_25 [0] : vector<16x2xf32> to vector<2xf32>
    %75 = vector.shape_cast %74 : vector<2xf32> to vector<1x2xf32>
    %76 = arith.addf %75, %18 : vector<1x2xf32>
    %77 = arith.negf %76 : vector<1x2xf32>
    %78 = math.exp %77 : vector<1x2xf32>
    %cst_26 = arith.constant 1.000000e+00 : f32
    %79 = vector.broadcast %cst_26 : f32 to vector<1x2xf32>
    %80 = arith.addf %79, %78 : vector<1x2xf32>
    %81 = arith.divf %79, %80 : vector<1x2xf32>
    %82 = arith.mulf %76, %81 : vector<1x2xf32>
    %83 = vector.broadcast %82 : vector<1x2xf32> to vector<16x2xf32>
    %84 = arith.mulf %19, %83 : vector<16x2xf32>
    %cst_27 = arith.constant dense<0.000000e+00> : vector<16xf32>
    %85 = vector.multi_reduction <add>, %84, %cst_27 [1] : vector<16x2xf32> to vector<16xf32>
    %86 = vector.shape_cast %85 : vector<16xf32> to vector<16x1xf32>
    %87 = arith.addf %86, %20 : vector<16x1xf32>
    %88 = arith.negf %87 : vector<16x1xf32>
    %89 = math.exp %88 : vector<16x1xf32>
    %cst_28 = arith.constant 1.000000e+00 : f32
    %90 = vector.broadcast %cst_28 : f32 to vector<16x1xf32>
    %91 = arith.addf %90, %89 : vector<16x1xf32>
    %92 = arith.divf %90, %91 : vector<16x1xf32>
    %93 = vector.broadcast %92 : vector<16x1xf32> to vector<16x64xf32>
    %94 = arith.mulf %67, %93 : vector<16x64xf32>
    %95 = vector.extract_strided_slice %13 {offsets = [0, 256], sizes = [16, 256], strides = [1, 1]} : vector<16x512xf32> to vector<16x256xf32>
    %96 = vector.extract_strided_slice %14 {offsets = [0, 0], sizes = [16, 1], strides = [1, 1]} : vector<16x9xf32> to vector<16x1xf32>
    %97 = vector.broadcast %96 : vector<16x1xf32> to vector<16x256xf32>
    %98 = arith.mulf %95, %97 : vector<16x256xf32>
    %99 = arith.truncf %98 : vector<16x256xf32> to vector<16x256xbf16>
    %100 = vector.extract_strided_slice %14 {offsets = [0, 1], sizes = [16, 1], strides = [1, 1]} : vector<16x9xf32> to vector<16x1xf32>
    %101 = vector.broadcast %100 : vector<16x1xf32> to vector<16x256xf32>
    %102 = arith.mulf %95, %101 : vector<16x256xf32>
    %103 = arith.truncf %102 : vector<16x256xf32> to vector<16x256xbf16>
    %104 = vector.extract_strided_slice %14 {offsets = [0, 2], sizes = [16, 1], strides = [1, 1]} : vector<16x9xf32> to vector<16x1xf32>
    %105 = vector.broadcast %104 : vector<16x1xf32> to vector<16x256xf32>
    %106 = arith.mulf %95, %105 : vector<16x256xf32>
    %107 = arith.truncf %106 : vector<16x256xf32> to vector<16x256xbf16>
    %108 = vector.extract_strided_slice %14 {offsets = [0, 3], sizes = [16, 1], strides = [1, 1]} : vector<16x9xf32> to vector<16x1xf32>
    %109 = vector.broadcast %108 : vector<16x1xf32> to vector<16x256xf32>
    %110 = arith.mulf %95, %109 : vector<16x256xf32>
    %111 = arith.truncf %110 : vector<16x256xf32> to vector<16x256xbf16>
    %112 = vector.extract_strided_slice %14 {offsets = [0, 4], sizes = [16, 1], strides = [1, 1]} : vector<16x9xf32> to vector<16x1xf32>
    %113 = vector.broadcast %112 : vector<16x1xf32> to vector<16x256xf32>
    %114 = arith.mulf %95, %113 : vector<16x256xf32>
    %115 = arith.truncf %114 : vector<16x256xf32> to vector<16x256xbf16>
    %116 = vector.extract_strided_slice %14 {offsets = [0, 5], sizes = [16, 1], strides = [1, 1]} : vector<16x9xf32> to vector<16x1xf32>
    %117 = vector.broadcast %116 : vector<16x1xf32> to vector<16x256xf32>
    %118 = arith.mulf %95, %117 : vector<16x256xf32>
    %119 = arith.truncf %118 : vector<16x256xf32> to vector<16x256xbf16>
    %120 = vector.extract_strided_slice %14 {offsets = [0, 6], sizes = [16, 1], strides = [1, 1]} : vector<16x9xf32> to vector<16x1xf32>
    %121 = vector.broadcast %120 : vector<16x1xf32> to vector<16x256xf32>
    %122 = arith.mulf %95, %121 : vector<16x256xf32>
    %123 = arith.truncf %122 : vector<16x256xf32> to vector<16x256xbf16>
    %124 = vector.extract_strided_slice %14 {offsets = [0, 7], sizes = [16, 1], strides = [1, 1]} : vector<16x9xf32> to vector<16x1xf32>
    %125 = vector.broadcast %124 : vector<16x1xf32> to vector<16x256xf32>
    %126 = arith.mulf %95, %125 : vector<16x256xf32>
    %127 = arith.truncf %126 : vector<16x256xf32> to vector<16x256xbf16>
    %128 = vector.extract_strided_slice %14 {offsets = [0, 8], sizes = [16, 1], strides = [1, 1]} : vector<16x9xf32> to vector<16x1xf32>
    %129 = vector.broadcast %128 : vector<16x1xf32> to vector<16x256xf32>
    %130 = arith.mulf %95, %129 : vector<16x256xf32>
    %131 = arith.truncf %130 : vector<16x256xf32> to vector<16x256xbf16>
    %132 = tpu.concatenate %99, %103, %107, %111, %115, %119, %123, %127, %131 in 1 : vector<16x256xbf16>, vector<16x256xbf16>, vector<16x256xbf16>, vector<16x256xbf16>, vector<16x256xbf16>, vector<16x256xbf16>, vector<16x256xbf16>, vector<16x256xbf16>, vector<16x256xbf16> -> vector<16x2304xbf16>
    %cst_29 = arith.constant dense<0.000000e+00> : vector<16x64xf32>
    %133 = tpu.matmul %132, %16, %cst_29 {dimension_numbers = #tpu.dot_dimension_numbers<[1], [0], [0], [1], [0, 0, 1, 1], [], []>} : vector<16x2304xbf16>, vector<2304x64xbf16>, vector<16x64xf32> -> vector<16x64xf32>
    %134 = vector.broadcast %15 : vector<16x1xf32> to vector<16x64xf32>
    %135 = arith.addf %133, %134 : vector<16x64xf32>
    %136 = arith.negf %135 : vector<16x64xf32>
    %137 = math.exp %136 : vector<16x64xf32>
    %cst_30 = arith.constant 1.000000e+00 : f32
    %138 = vector.broadcast %cst_30 : f32 to vector<16x64xf32>
    %139 = arith.addf %138, %137 : vector<16x64xf32>
    %140 = arith.divf %138, %139 : vector<16x64xf32>
    %141 = arith.mulf %135, %140 : vector<16x64xf32>
    %cst_31 = arith.constant dense<0.000000e+00> : vector<16xf32>
    %142 = vector.multi_reduction <add>, %141, %cst_31 [1] : vector<16x64xf32> to vector<16xf32>
    %143 = vector.shape_cast %142 : vector<16xf32> to vector<16x1xf32>
    %cst_32 = arith.constant 6.400000e+01 : f32
    %144 = vector.broadcast %cst_32 : f32 to vector<16x1xf32>
    %145 = arith.divf %143, %144 : vector<16x1xf32>
    %146 = vector.broadcast %145 : vector<16x1xf32> to vector<16x2xf32>
    %147 = arith.mulf %17, %146 : vector<16x2xf32>
    %cst_33 = arith.constant dense<0.000000e+00> : vector<2xf32>
    %148 = vector.multi_reduction <add>, %147, %cst_33 [0] : vector<16x2xf32> to vector<2xf32>
    %149 = vector.shape_cast %148 : vector<2xf32> to vector<1x2xf32>
    %150 = arith.addf %149, %18 : vector<1x2xf32>
    %151 = arith.negf %150 : vector<1x2xf32>
    %152 = math.exp %151 : vector<1x2xf32>
    %cst_34 = arith.constant 1.000000e+00 : f32
    %153 = vector.broadcast %cst_34 : f32 to vector<1x2xf32>
    %154 = arith.addf %153, %152 : vector<1x2xf32>
    %155 = arith.divf %153, %154 : vector<1x2xf32>
    %156 = arith.mulf %150, %155 : vector<1x2xf32>
    %157 = vector.broadcast %156 : vector<1x2xf32> to vector<16x2xf32>
    %158 = arith.mulf %19, %157 : vector<16x2xf32>
    %cst_35 = arith.constant dense<0.000000e+00> : vector<16xf32>
    %159 = vector.multi_reduction <add>, %158, %cst_35 [1] : vector<16x2xf32> to vector<16xf32>
    %160 = vector.shape_cast %159 : vector<16xf32> to vector<16x1xf32>
    %161 = arith.addf %160, %20 : vector<16x1xf32>
    %162 = arith.negf %161 : vector<16x1xf32>
    %163 = math.exp %162 : vector<16x1xf32>
    %cst_36 = arith.constant 1.000000e+00 : f32
    %164 = vector.broadcast %cst_36 : f32 to vector<16x1xf32>
    %165 = arith.addf %164, %163 : vector<16x1xf32>
    %166 = arith.divf %164, %165 : vector<16x1xf32>
    %167 = vector.broadcast %166 : vector<16x1xf32> to vector<16x64xf32>
    %168 = arith.mulf %141, %167 : vector<16x64xf32>
    %169 = tpu.concatenate %94, %168 in 1 : vector<16x64xf32>, vector<16x64xf32> -> vector<16x128xf32>
    %c0_37 = arith.constant 0 : index
    %c0_38 = arith.constant 0 : index
    %170 = vector.load %arg11[%c0_37, %c0_38] : memref<16x16xbf16, #tpu.memory_space<vmem>>, vector<16x16xbf16>
    %171 = arith.truncf %169 : vector<16x128xf32> to vector<16x128xbf16>
    %cst_39 = arith.constant dense<0.000000e+00> : vector<16x128xf32>
    %172 = tpu.matmul %170, %171, %cst_39 {dimension_numbers = #tpu.dot_dimension_numbers<[1], [0], [0], [1], [0, 0, 1, 1], [], []>} : vector<16x16xbf16>, vector<16x128xbf16>, vector<16x128xf32> -> vector<16x128xf32>
    %c0_40 = arith.constant 0 : index
    %c0_41 = arith.constant 0 : index
    %173 = vector.load %arg12[%c0_40, %c0_41] : memref<16x1xf32, #tpu.memory_space<vmem>>, vector<16x1xf32>
    %174 = vector.broadcast %173 : vector<16x1xf32> to vector<16x128xf32>
    %175 = arith.addf %172, %174 : vector<16x128xf32>
    %c0_42 = arith.constant 0 : index
    %c0_43 = arith.constant 0 : index
    %176 = vector.load %arg13[%c0_42, %c0_43] : memref<32x16xbf16, #tpu.memory_space<vmem>>, vector<32x16xbf16>
    %177 = arith.truncf %175 : vector<16x128xf32> to vector<16x128xbf16>
    %cst_44 = arith.constant dense<0.000000e+00> : vector<32x128xf32>
    %178 = tpu.matmul %176, %177, %cst_44 {dimension_numbers = #tpu.dot_dimension_numbers<[1], [0], [0], [1], [0, 0, 1, 1], [], []>} : vector<32x16xbf16>, vector<16x128xbf16>, vector<32x128xf32> -> vector<32x128xf32>
    %c0_45 = arith.constant 0 : index
    %c0_46 = arith.constant 0 : index
    %179 = vector.load %arg14[%c0_45, %c0_46] : memref<32x1xf32, #tpu.memory_space<vmem>>, vector<32x1xf32>
    %180 = vector.broadcast %179 : vector<32x1xf32> to vector<32x128xf32>
    %181 = arith.addf %178, %180 : vector<32x128xf32>
    %182 = arith.negf %181 : vector<32x128xf32>
    %183 = math.exp %182 : vector<32x128xf32>
    %cst_47 = arith.constant 1.000000e+00 : f32
    %184 = vector.broadcast %cst_47 : f32 to vector<32x128xf32>
    %185 = arith.addf %184, %183 : vector<32x128xf32>
    %186 = arith.divf %184, %185 : vector<32x128xf32>
    %187 = arith.mulf %181, %186 : vector<32x128xf32>
    %c0_48 = arith.constant 0 : index
    %c0_49 = arith.constant 0 : index
    %188 = vector.load %arg15[%c0_48, %c0_49] : memref<32x9xf32, #tpu.memory_space<vmem>>, vector<32x9xf32>
    %c0_50 = arith.constant 0 : index
    %c0_51 = arith.constant 0 : index
    %189 = vector.load %arg16[%c0_50, %c0_51] : memref<32x1xf32, #tpu.memory_space<vmem>>, vector<32x1xf32>
    %c0_52 = arith.constant 0 : index
    %c0_53 = arith.constant 0 : index
    %190 = vector.load %arg17[%c0_52, %c0_53] : memref<576x64xbf16, #tpu.memory_space<vmem>>, vector<576x64xbf16>
    %c0_54 = arith.constant 0 : index
    %c0_55 = arith.constant 0 : index
    %191 = vector.load %arg18[%c0_54, %c0_55] : memref<32x4xf32, #tpu.memory_space<vmem>>, vector<32x4xf32>
    %c0_56 = arith.constant 0 : index
    %c0_57 = arith.constant 0 : index
    %192 = vector.load %arg19[%c0_56, %c0_57] : memref<1x4xf32, #tpu.memory_space<vmem>>, vector<1x4xf32>
    %c0_58 = arith.constant 0 : index
    %c0_59 = arith.constant 0 : index
    %193 = vector.load %arg20[%c0_58, %c0_59] : memref<32x4xf32, #tpu.memory_space<vmem>>, vector<32x4xf32>
    %c0_60 = arith.constant 0 : index
    %c0_61 = arith.constant 0 : index
    %194 = vector.load %arg21[%c0_60, %c0_61] : memref<32x1xf32, #tpu.memory_space<vmem>>, vector<32x1xf32>
    %195 = vector.extract_strided_slice %187 {offsets = [0, 0], sizes = [32, 64], strides = [1, 1]} : vector<32x128xf32> to vector<32x64xf32>
    %196 = vector.extract_strided_slice %188 {offsets = [0, 0], sizes = [32, 1], strides = [1, 1]} : vector<32x9xf32> to vector<32x1xf32>
    %197 = vector.broadcast %196 : vector<32x1xf32> to vector<32x64xf32>
    %198 = arith.mulf %195, %197 : vector<32x64xf32>
    %199 = arith.truncf %198 : vector<32x64xf32> to vector<32x64xbf16>
    %200 = vector.extract_strided_slice %188 {offsets = [0, 1], sizes = [32, 1], strides = [1, 1]} : vector<32x9xf32> to vector<32x1xf32>
    %201 = vector.broadcast %200 : vector<32x1xf32> to vector<32x64xf32>
    %202 = arith.mulf %195, %201 : vector<32x64xf32>
    %203 = arith.truncf %202 : vector<32x64xf32> to vector<32x64xbf16>
    %204 = vector.extract_strided_slice %188 {offsets = [0, 2], sizes = [32, 1], strides = [1, 1]} : vector<32x9xf32> to vector<32x1xf32>
    %205 = vector.broadcast %204 : vector<32x1xf32> to vector<32x64xf32>
    %206 = arith.mulf %195, %205 : vector<32x64xf32>
    %207 = arith.truncf %206 : vector<32x64xf32> to vector<32x64xbf16>
    %208 = vector.extract_strided_slice %188 {offsets = [0, 3], sizes = [32, 1], strides = [1, 1]} : vector<32x9xf32> to vector<32x1xf32>
    %209 = vector.broadcast %208 : vector<32x1xf32> to vector<32x64xf32>
    %210 = arith.mulf %195, %209 : vector<32x64xf32>
    %211 = arith.truncf %210 : vector<32x64xf32> to vector<32x64xbf16>
    %212 = vector.extract_strided_slice %188 {offsets = [0, 4], sizes = [32, 1], strides = [1, 1]} : vector<32x9xf32> to vector<32x1xf32>
    %213 = vector.broadcast %212 : vector<32x1xf32> to vector<32x64xf32>
    %214 = arith.mulf %195, %213 : vector<32x64xf32>
    %215 = arith.truncf %214 : vector<32x64xf32> to vector<32x64xbf16>
    %216 = vector.extract_strided_slice %188 {offsets = [0, 5], sizes = [32, 1], strides = [1, 1]} : vector<32x9xf32> to vector<32x1xf32>
    %217 = vector.broadcast %216 : vector<32x1xf32> to vector<32x64xf32>
    %218 = arith.mulf %195, %217 : vector<32x64xf32>
    %219 = arith.truncf %218 : vector<32x64xf32> to vector<32x64xbf16>
    %220 = vector.extract_strided_slice %188 {offsets = [0, 6], sizes = [32, 1], strides = [1, 1]} : vector<32x9xf32> to vector<32x1xf32>
    %221 = vector.broadcast %220 : vector<32x1xf32> to vector<32x64xf32>
    %222 = arith.mulf %195, %221 : vector<32x64xf32>
    %223 = arith.truncf %222 : vector<32x64xf32> to vector<32x64xbf16>
    %224 = vector.extract_strided_slice %188 {offsets = [0, 7], sizes = [32, 1], strides = [1, 1]} : vector<32x9xf32> to vector<32x1xf32>
    %225 = vector.broadcast %224 : vector<32x1xf32> to vector<32x64xf32>
    %226 = arith.mulf %195, %225 : vector<32x64xf32>
    %227 = arith.truncf %226 : vector<32x64xf32> to vector<32x64xbf16>
    %228 = vector.extract_strided_slice %188 {offsets = [0, 8], sizes = [32, 1], strides = [1, 1]} : vector<32x9xf32> to vector<32x1xf32>
    %229 = vector.broadcast %228 : vector<32x1xf32> to vector<32x64xf32>
    %230 = arith.mulf %195, %229 : vector<32x64xf32>
    %231 = arith.truncf %230 : vector<32x64xf32> to vector<32x64xbf16>
    %232 = tpu.concatenate %199, %203, %207, %211, %215, %219, %223, %227, %231 in 1 : vector<32x64xbf16>, vector<32x64xbf16>, vector<32x64xbf16>, vector<32x64xbf16>, vector<32x64xbf16>, vector<32x64xbf16>, vector<32x64xbf16>, vector<32x64xbf16>, vector<32x64xbf16> -> vector<32x576xbf16>
    %cst_62 = arith.constant dense<0.000000e+00> : vector<32x64xf32>
    %233 = tpu.matmul %232, %190, %cst_62 {dimension_numbers = #tpu.dot_dimension_numbers<[1], [0], [0], [1], [0, 0, 1, 1], [], []>} : vector<32x576xbf16>, vector<576x64xbf16>, vector<32x64xf32> -> vector<32x64xf32>
    %234 = vector.broadcast %189 : vector<32x1xf32> to vector<32x64xf32>
    %235 = arith.addf %233, %234 : vector<32x64xf32>
    %236 = arith.negf %235 : vector<32x64xf32>
    %237 = math.exp %236 : vector<32x64xf32>
    %cst_63 = arith.constant 1.000000e+00 : f32
    %238 = vector.broadcast %cst_63 : f32 to vector<32x64xf32>
    %239 = arith.addf %238, %237 : vector<32x64xf32>
    %240 = arith.divf %238, %239 : vector<32x64xf32>
    %241 = arith.mulf %235, %240 : vector<32x64xf32>
    %cst_64 = arith.constant dense<0.000000e+00> : vector<32xf32>
    %242 = vector.multi_reduction <add>, %241, %cst_64 [1] : vector<32x64xf32> to vector<32xf32>
    %243 = vector.shape_cast %242 : vector<32xf32> to vector<32x1xf32>
    %cst_65 = arith.constant 6.400000e+01 : f32
    %244 = vector.broadcast %cst_65 : f32 to vector<32x1xf32>
    %245 = arith.divf %243, %244 : vector<32x1xf32>
    %246 = vector.broadcast %245 : vector<32x1xf32> to vector<32x4xf32>
    %247 = arith.mulf %191, %246 : vector<32x4xf32>
    %cst_66 = arith.constant dense<0.000000e+00> : vector<4xf32>
    %248 = vector.multi_reduction <add>, %247, %cst_66 [0] : vector<32x4xf32> to vector<4xf32>
    %249 = vector.shape_cast %248 : vector<4xf32> to vector<1x4xf32>
    %250 = arith.addf %249, %192 : vector<1x4xf32>
    %251 = arith.negf %250 : vector<1x4xf32>
    %252 = math.exp %251 : vector<1x4xf32>
    %cst_67 = arith.constant 1.000000e+00 : f32
    %253 = vector.broadcast %cst_67 : f32 to vector<1x4xf32>
    %254 = arith.addf %253, %252 : vector<1x4xf32>
    %255 = arith.divf %253, %254 : vector<1x4xf32>
    %256 = arith.mulf %250, %255 : vector<1x4xf32>
    %257 = vector.broadcast %256 : vector<1x4xf32> to vector<32x4xf32>
    %258 = arith.mulf %193, %257 : vector<32x4xf32>
    %cst_68 = arith.constant dense<0.000000e+00> : vector<32xf32>
    %259 = vector.multi_reduction <add>, %258, %cst_68 [1] : vector<32x4xf32> to vector<32xf32>
    %260 = vector.shape_cast %259 : vector<32xf32> to vector<32x1xf32>
    %261 = arith.addf %260, %194 : vector<32x1xf32>
    %262 = arith.negf %261 : vector<32x1xf32>
    %263 = math.exp %262 : vector<32x1xf32>
    %cst_69 = arith.constant 1.000000e+00 : f32
    %264 = vector.broadcast %cst_69 : f32 to vector<32x1xf32>
    %265 = arith.addf %264, %263 : vector<32x1xf32>
    %266 = arith.divf %264, %265 : vector<32x1xf32>
    %267 = vector.broadcast %266 : vector<32x1xf32> to vector<32x64xf32>
    %268 = arith.mulf %241, %267 : vector<32x64xf32>
    %269 = vector.extract_strided_slice %187 {offsets = [0, 64], sizes = [32, 64], strides = [1, 1]} : vector<32x128xf32> to vector<32x64xf32>
    %270 = vector.extract_strided_slice %188 {offsets = [0, 0], sizes = [32, 1], strides = [1, 1]} : vector<32x9xf32> to vector<32x1xf32>
    %271 = vector.broadcast %270 : vector<32x1xf32> to vector<32x64xf32>
    %272 = arith.mulf %269, %271 : vector<32x64xf32>
    %273 = arith.truncf %272 : vector<32x64xf32> to vector<32x64xbf16>
    %274 = vector.extract_strided_slice %188 {offsets = [0, 1], sizes = [32, 1], strides = [1, 1]} : vector<32x9xf32> to vector<32x1xf32>
    %275 = vector.broadcast %274 : vector<32x1xf32> to vector<32x64xf32>
    %276 = arith.mulf %269, %275 : vector<32x64xf32>
    %277 = arith.truncf %276 : vector<32x64xf32> to vector<32x64xbf16>
    %278 = vector.extract_strided_slice %188 {offsets = [0, 2], sizes = [32, 1], strides = [1, 1]} : vector<32x9xf32> to vector<32x1xf32>
    %279 = vector.broadcast %278 : vector<32x1xf32> to vector<32x64xf32>
    %280 = arith.mulf %269, %279 : vector<32x64xf32>
    %281 = arith.truncf %280 : vector<32x64xf32> to vector<32x64xbf16>
    %282 = vector.extract_strided_slice %188 {offsets = [0, 3], sizes = [32, 1], strides = [1, 1]} : vector<32x9xf32> to vector<32x1xf32>
    %283 = vector.broadcast %282 : vector<32x1xf32> to vector<32x64xf32>
    %284 = arith.mulf %269, %283 : vector<32x64xf32>
    %285 = arith.truncf %284 : vector<32x64xf32> to vector<32x64xbf16>
    %286 = vector.extract_strided_slice %188 {offsets = [0, 4], sizes = [32, 1], strides = [1, 1]} : vector<32x9xf32> to vector<32x1xf32>
    %287 = vector.broadcast %286 : vector<32x1xf32> to vector<32x64xf32>
    %288 = arith.mulf %269, %287 : vector<32x64xf32>
    %289 = arith.truncf %288 : vector<32x64xf32> to vector<32x64xbf16>
    %290 = vector.extract_strided_slice %188 {offsets = [0, 5], sizes = [32, 1], strides = [1, 1]} : vector<32x9xf32> to vector<32x1xf32>
    %291 = vector.broadcast %290 : vector<32x1xf32> to vector<32x64xf32>
    %292 = arith.mulf %269, %291 : vector<32x64xf32>
    %293 = arith.truncf %292 : vector<32x64xf32> to vector<32x64xbf16>
    %294 = vector.extract_strided_slice %188 {offsets = [0, 6], sizes = [32, 1], strides = [1, 1]} : vector<32x9xf32> to vector<32x1xf32>
    %295 = vector.broadcast %294 : vector<32x1xf32> to vector<32x64xf32>
    %296 = arith.mulf %269, %295 : vector<32x64xf32>
    %297 = arith.truncf %296 : vector<32x64xf32> to vector<32x64xbf16>
    %298 = vector.extract_strided_slice %188 {offsets = [0, 7], sizes = [32, 1], strides = [1, 1]} : vector<32x9xf32> to vector<32x1xf32>
    %299 = vector.broadcast %298 : vector<32x1xf32> to vector<32x64xf32>
    %300 = arith.mulf %269, %299 : vector<32x64xf32>
    %301 = arith.truncf %300 : vector<32x64xf32> to vector<32x64xbf16>
    %302 = vector.extract_strided_slice %188 {offsets = [0, 8], sizes = [32, 1], strides = [1, 1]} : vector<32x9xf32> to vector<32x1xf32>
    %303 = vector.broadcast %302 : vector<32x1xf32> to vector<32x64xf32>
    %304 = arith.mulf %269, %303 : vector<32x64xf32>
    %305 = arith.truncf %304 : vector<32x64xf32> to vector<32x64xbf16>
    %306 = tpu.concatenate %273, %277, %281, %285, %289, %293, %297, %301, %305 in 1 : vector<32x64xbf16>, vector<32x64xbf16>, vector<32x64xbf16>, vector<32x64xbf16>, vector<32x64xbf16>, vector<32x64xbf16>, vector<32x64xbf16>, vector<32x64xbf16>, vector<32x64xbf16> -> vector<32x576xbf16>
    %cst_70 = arith.constant dense<0.000000e+00> : vector<32x64xf32>
    %307 = tpu.matmul %306, %190, %cst_70 {dimension_numbers = #tpu.dot_dimension_numbers<[1], [0], [0], [1], [0, 0, 1, 1], [], []>} : vector<32x576xbf16>, vector<576x64xbf16>, vector<32x64xf32> -> vector<32x64xf32>
    %308 = vector.broadcast %189 : vector<32x1xf32> to vector<32x64xf32>
    %309 = arith.addf %307, %308 : vector<32x64xf32>
    %310 = arith.negf %309 : vector<32x64xf32>
    %311 = math.exp %310 : vector<32x64xf32>
    %cst_71 = arith.constant 1.000000e+00 : f32
    %312 = vector.broadcast %cst_71 : f32 to vector<32x64xf32>
    %313 = arith.addf %312, %311 : vector<32x64xf32>
    %314 = arith.divf %312, %313 : vector<32x64xf32>
    %315 = arith.mulf %309, %314 : vector<32x64xf32>
    %cst_72 = arith.constant dense<0.000000e+00> : vector<32xf32>
    %316 = vector.multi_reduction <add>, %315, %cst_72 [1] : vector<32x64xf32> to vector<32xf32>
    %317 = vector.shape_cast %316 : vector<32xf32> to vector<32x1xf32>
    %cst_73 = arith.constant 6.400000e+01 : f32
    %318 = vector.broadcast %cst_73 : f32 to vector<32x1xf32>
    %319 = arith.divf %317, %318 : vector<32x1xf32>
    %320 = vector.broadcast %319 : vector<32x1xf32> to vector<32x4xf32>
    %321 = arith.mulf %191, %320 : vector<32x4xf32>
    %cst_74 = arith.constant dense<0.000000e+00> : vector<4xf32>
    %322 = vector.multi_reduction <add>, %321, %cst_74 [0] : vector<32x4xf32> to vector<4xf32>
    %323 = vector.shape_cast %322 : vector<4xf32> to vector<1x4xf32>
    %324 = arith.addf %323, %192 : vector<1x4xf32>
    %325 = arith.negf %324 : vector<1x4xf32>
    %326 = math.exp %325 : vector<1x4xf32>
    %cst_75 = arith.constant 1.000000e+00 : f32
    %327 = vector.broadcast %cst_75 : f32 to vector<1x4xf32>
    %328 = arith.addf %327, %326 : vector<1x4xf32>
    %329 = arith.divf %327, %328 : vector<1x4xf32>
    %330 = arith.mulf %324, %329 : vector<1x4xf32>
    %331 = vector.broadcast %330 : vector<1x4xf32> to vector<32x4xf32>
    %332 = arith.mulf %193, %331 : vector<32x4xf32>
    %cst_76 = arith.constant dense<0.000000e+00> : vector<32xf32>
    %333 = vector.multi_reduction <add>, %332, %cst_76 [1] : vector<32x4xf32> to vector<32xf32>
    %334 = vector.shape_cast %333 : vector<32xf32> to vector<32x1xf32>
    %335 = arith.addf %334, %194 : vector<32x1xf32>
    %336 = arith.negf %335 : vector<32x1xf32>
    %337 = math.exp %336 : vector<32x1xf32>
    %cst_77 = arith.constant 1.000000e+00 : f32
    %338 = vector.broadcast %cst_77 : f32 to vector<32x1xf32>
    %339 = arith.addf %338, %337 : vector<32x1xf32>
    %340 = arith.divf %338, %339 : vector<32x1xf32>
    %341 = vector.broadcast %340 : vector<32x1xf32> to vector<32x64xf32>
    %342 = arith.mulf %315, %341 : vector<32x64xf32>
    %343 = tpu.concatenate %268, %342 in 1 : vector<32x64xf32>, vector<32x64xf32> -> vector<32x128xf32>
    %c0_78 = arith.constant 0 : index
    %c0_79 = arith.constant 0 : index
    %344 = vector.load %arg22[%c0_78, %c0_79] : memref<16x32xbf16, #tpu.memory_space<vmem>>, vector<16x32xbf16>
    %345 = arith.truncf %343 : vector<32x128xf32> to vector<32x128xbf16>
    %cst_80 = arith.constant dense<0.000000e+00> : vector<16x128xf32>
    %346 = tpu.matmul %344, %345, %cst_80 {dimension_numbers = #tpu.dot_dimension_numbers<[1], [0], [0], [1], [0, 0, 1, 1], [], []>} : vector<16x32xbf16>, vector<32x128xbf16>, vector<16x128xf32> -> vector<16x128xf32>
    %c0_81 = arith.constant 0 : index
    %c0_82 = arith.constant 0 : index
    %347 = vector.load %arg23[%c0_81, %c0_82] : memref<16x1xf32, #tpu.memory_space<vmem>>, vector<16x1xf32>
    %348 = vector.broadcast %347 : vector<16x1xf32> to vector<16x128xf32>
    %349 = arith.addf %346, %348 : vector<16x128xf32>
    %350 = arith.addf %349, %175 : vector<16x128xf32>
    %c0_83 = arith.constant 0 : index
    %c0_84 = arith.constant 0 : index
    %c0_85 = arith.constant 0 : index
    %351 = vector.load %arg24[%c0_83, %c0_84, %c0_85] : memref<1x16x128xf32, #tpu.memory_space<vmem>>, vector<1x16x128xf32>
    %352 = vector.shape_cast %351 : vector<1x16x128xf32> to vector<16x128xf32>
    %353 = vector.shape_cast %350 : vector<16x128xf32> to vector<1x16x128xf32>
    tpu.vector_store %arg24[%c0_83, %c0_84, %c0_85], %353 {strides = array<i32>} : memref<1x16x128xf32, #tpu.memory_space<vmem>>, vector<1x16x128xf32>,
    return
  }
  func.func @transform_0(%arg0: i32) -> (i32, i32, i32) {
    %c0_i32 = arith.constant 0 : i32
    %c0_i32_0 = arith.constant 0 : i32
    %c0_i32_1 = arith.constant 0 : i32
    return %arg0, %c0_i32, %c0_i32_0 : i32, i32, i32
  }
  func.func @transform_1(%arg0: i32) -> (i32, i32) {
    %c0_i32 = arith.constant 0 : i32
    %c0_i32_0 = arith.constant 0 : i32
    %c0_i32_1 = arith.constant 0 : i32
    return %c0_i32, %c0_i32_0 : i32, i32
  }
  func.func @transform_2(%arg0: i32) -> (i32, i32) {
    %c0_i32 = arith.constant 0 : i32
    %c0_i32_0 = arith.constant 0 : i32
    %c0_i32_1 = arith.constant 0 : i32
    return %c0_i32, %c0_i32_0 : i32, i32
  }
  func.func @transform_3(%arg0: i32) -> (i32, i32) {
    %c0_i32 = arith.constant 0 : i32
    %c0_i32_0 = arith.constant 0 : i32
    %c0_i32_1 = arith.constant 0 : i32
    return %c0_i32, %c0_i32_0 : i32, i32
  }
  func.func @transform_4(%arg0: i32) -> (i32, i32) {
    %c0_i32 = arith.constant 0 : i32
    %c0_i32_0 = arith.constant 0 : i32
    %c0_i32_1 = arith.constant 0 : i32
    return %c0_i32, %c0_i32_0 : i32, i32
  }
  func.func @transform_5(%arg0: i32) -> (i32, i32) {
    %c0_i32 = arith.constant 0 : i32
    %c0_i32_0 = arith.constant 0 : i32
    %c0_i32_1 = arith.constant 0 : i32
    return %c0_i32, %c0_i32_0 : i32, i32
  }
  func.func @transform_6(%arg0: i32) -> (i32, i32) {
    %c0_i32 = arith.constant 0 : i32
    %c0_i32_0 = arith.constant 0 : i32
    %c0_i32_1 = arith.constant 0 : i32
    return %c0_i32, %c0_i32_0 : i32, i32
  }
  func.func @transform_7(%arg0: i32) -> (i32, i32) {
    %c0_i32 = arith.constant 0 : i32
    %c0_i32_0 = arith.constant 0 : i32
    %c0_i32_1 = arith.constant 0 : i32
    return %c0_i32, %c0_i32_0 : i32, i32
  }
  func.func @transform_8(%arg0: i32) -> (i32, i32) {
    %c0_i32 = arith.constant 0 : i32
    %c0_i32_0 = arith.constant 0 : i32
    %c0_i32_1 = arith.constant 0 : i32
    return %c0_i32, %c0_i32_0 : i32, i32
  }
  func.func @transform_9(%arg0: i32) -> (i32, i32) {
    %c0_i32 = arith.constant 0 : i32
    %c0_i32_0 = arith.constant 0 : i32
    %c0_i32_1 = arith.constant 0 : i32
    return %c0_i32, %c0_i32_0 : i32, i32
  }
  func.func @transform_10(%arg0: i32) -> (i32, i32) {
    %c0_i32 = arith.constant 0 : i32
    %c0_i32_0 = arith.constant 0 : i32
    %c0_i32_1 = arith.constant 0 : i32
    return %c0_i32, %c0_i32_0 : i32, i32
  }
  func.func @transform_11(%arg0: i32) -> (i32, i32) {
    %c0_i32 = arith.constant 0 : i32
    %c0_i32_0 = arith.constant 0 : i32
    %c0_i32_1 = arith.constant 0 : i32
    return %c0_i32, %c0_i32_0 : i32, i32
  }
  func.func @transform_12(%arg0: i32) -> (i32, i32) {
    %c0_i32 = arith.constant 0 : i32
    %c0_i32_0 = arith.constant 0 : i32
    %c0_i32_1 = arith.constant 0 : i32
    return %c0_i32, %c0_i32_0 : i32, i32
  }
  func.func @transform_13(%arg0: i32) -> (i32, i32) {
    %c0_i32 = arith.constant 0 : i32
    %c0_i32_0 = arith.constant 0 : i32
    %c0_i32_1 = arith.constant 0 : i32
    return %c0_i32, %c0_i32_0 : i32, i32
  }
  func.func @transform_14(%arg0: i32) -> (i32, i32) {
    %c0_i32 = arith.constant 0 : i32
    %c0_i32_0 = arith.constant 0 : i32
    %c0_i32_1 = arith.constant 0 : i32
    return %c0_i32, %c0_i32_0 : i32, i32
  }
  func.func @transform_15(%arg0: i32) -> (i32, i32) {
    %c0_i32 = arith.constant 0 : i32
    %c0_i32_0 = arith.constant 0 : i32
    %c0_i32_1 = arith.constant 0 : i32
    return %c0_i32, %c0_i32_0 : i32, i32
  }
  func.func @transform_16(%arg0: i32) -> (i32, i32) {
    %c0_i32 = arith.constant 0 : i32
    %c0_i32_0 = arith.constant 0 : i32
    %c0_i32_1 = arith.constant 0 : i32
    return %c0_i32, %c0_i32_0 : i32, i32
  }
  func.func @transform_17(%arg0: i32) -> (i32, i32) {
    %c0_i32 = arith.constant 0 : i32
    %c0_i32_0 = arith.constant 0 : i32
    %c0_i32_1 = arith.constant 0 : i32
    return %c0_i32, %c0_i32_0 : i32, i32
  }
  func.func @transform_18(%arg0: i32) -> (i32, i32) {
    %c0_i32 = arith.constant 0 : i32
    %c0_i32_0 = arith.constant 0 : i32
    %c0_i32_1 = arith.constant 0 : i32
    return %c0_i32, %c0_i32_0 : i32, i32
  }
  func.func @transform_19(%arg0: i32) -> (i32, i32) {
    %c0_i32 = arith.constant 0 : i32
    %c0_i32_0 = arith.constant 0 : i32
    %c0_i32_1 = arith.constant 0 : i32
    return %c0_i32, %c0_i32_0 : i32, i32
  }
  func.func @transform_20(%arg0: i32) -> (i32, i32) {
    %c0_i32 = arith.constant 0 : i32
    %c0_i32_0 = arith.constant 0 : i32
    %c0_i32_1 = arith.constant 0 : i32
    return %c0_i32, %c0_i32_0 : i32, i32
  }
  func.func @transform_21(%arg0: i32) -> (i32, i32) {
    %c0_i32 = arith.constant 0 : i32
    %c0_i32_0 = arith.constant 0 : i32
    %c0_i32_1 = arith.constant 0 : i32
    return %c0_i32, %c0_i32_0 : i32, i32
  }
  func.func @transform_22(%arg0: i32) -> (i32, i32) {
    %c0_i32 = arith.constant 0 : i32
    %c0_i32_0 = arith.constant 0 : i32
    %c0_i32_1 = arith.constant 0 : i32
    return %c0_i32, %c0_i32_0 : i32, i32
  }
  func.func @transform_23(%arg0: i32) -> (i32, i32, i32) {
    %c0_i32 = arith.constant 0 : i32
    %c0_i32_0 = arith.constant 0 : i32
    %c0_i32_1 = arith.constant 0 : i32
    return %arg0, %c0_i32, %c0_i32_0 : i32, i32, i32
  }
}

</mosaic_0001>

<llo_original>
// kernel: tpu_custom_call.1
$region0: #{tpu_custom_call.1}
  #allocation0 [shape = 'u32[]', space=smem, size = 0x4, offset = 0x4, fixed_abs, tag = 'smem constant byte address 0x4 - core index']
  #allocation1 [shape = 'u32[144,128]{1,0:T(1,128)}', space=vmem, size = 0x12000, scoped, tag = 'internal scratch']
  %s0 = inlined_call_operand.vmem [shape: f32[2,8,512], index: 0, kind: input, shape index: {}]
  %s1 = inlined_call_operand.vmem [shape: bf16[16,8], index: 1, kind: input, shape index: {}]
  %s2 = inlined_call_operand.vmem [shape: f32[16,1], index: 2, kind: input, shape index: {}]
  %s3 = inlined_call_operand.vmem [shape: f32[16,9], index: 3, kind: input, shape index: {}]
  %s4 = inlined_call_operand.vmem [shape: f32[16,1], index: 4, kind: input, shape index: {}]
  %s5 = inlined_call_operand.vmem [shape: bf16[2304,64], index: 5, kind: input, shape index: {}]
  %s6 = inlined_call_operand.vmem [shape: f32[16,2], index: 6, kind: input, shape index: {}]
  %s7 = inlined_call_operand.vmem [shape: f32[1,2], index: 7, kind: input, shape index: {}]
  %s8 = inlined_call_operand.vmem [shape: f32[16,2], index: 8, kind: input, shape index: {}]
  %s9 = inlined_call_operand.vmem [shape: f32[16,1], index: 9, kind: input, shape index: {}]
  %s10 = inlined_call_operand.vmem [shape: bf16[16,16], index: 10, kind: input, shape index: {}]
  %s11 = inlined_call_operand.vmem [shape: f32[16,1], index: 11, kind: input, shape index: {}]
  %s12 = inlined_call_operand.vmem [shape: bf16[32,16], index: 12, kind: input, shape index: {}]
  %s13 = inlined_call_operand.vmem [shape: f32[32,1], index: 13, kind: input, shape index: {}]
  %s14 = inlined_call_operand.vmem [shape: f32[32,9], index: 14, kind: input, shape index: {}]
  %s15 = inlined_call_operand.vmem [shape: f32[32,1], index: 15, kind: input, shape index: {}]
  %s16 = inlined_call_operand.vmem [shape: bf16[576,64], index: 16, kind: input, shape index: {}]
  %s17 = inlined_call_operand.vmem [shape: f32[32,4], index: 17, kind: input, shape index: {}]
  %s18 = inlined_call_operand.vmem [shape: f32[1,4], index: 18, kind: input, shape index: {}]
  %s19 = inlined_call_operand.vmem [shape: f32[32,4], index: 19, kind: input, shape index: {}]
  %s20 = inlined_call_operand.vmem [shape: f32[32,1], index: 20, kind: input, shape index: {}]
  %s21 = inlined_call_operand.vmem [shape: bf16[16,32], index: 21, kind: input, shape index: {}]
  %s22 = inlined_call_operand.vmem [shape: f32[16,1], index: 22, kind: input, shape index: {}]
  %s23 = inlined_call_operand.hbm [shape: f32[2,16,128], index: 23, kind: output, shape index: {}]
  %s24 = sld [smem:[#allocation0]]
  $region125: #{tpu_custom_call.1} parent=0
    _
  %s26 = ssub.s32 1, %s24
  %s27 = scalar_select 0, %s26, %s24
  $region1: #{tpu_custom_call.1} parent=0
    #allocation2 [shape = 'u8[16384]{0}', space=vmem, size = 0x4000, scoped, tag = 'output window, operand 0']
    #allocation3 [shape = 's32[2]{0}', space=sflag, size = 0x8, scoped, tag = 'scoped memory for tpu_custom_call.1']
    %28 = vsyncpa [#allocation3], 0
    %s29 = scalar_lea.sflag [#allocation3], 1
    %30 = vsyncpa %s29, 0
    loop: start=0, step=1, limit=4
    $region2: #{tpu_custom_call.1} parent=1 // loop_pre_header
      _
    $region3: #{tpu_custom_call.1} parent=1 // loop_header
      %s32 = sphi 0, %s36
      %p33 = scmp.ge.s32.totalorder %s32, 4
      %s42 = sphi 0, %s44
      %s45 = sphi 0, %s42
      %s46 = sphi 0, %s45
      %s62 = sphi 0, %s46
      %s66 = sphi 0, %s66
      %s68 = sphi 0, %s66
      %s69 = sphi 0, %s68
      %s83 = sphi 0, %s69
      %s87 = sphi 0, %s87
      %s89 = sphi 0, %s87
      %s90 = sphi 0, %s89
      %s104 = sphi 0, %s90
      %s108 = sphi 0, %s108
      %s110 = sphi 0, %s108
      %s111 = sphi 0, %s110
      %s125 = sphi 0, %s111
      %s129 = sphi 0, %s129
      %s131 = sphi 0, %s129
      %s132 = sphi 0, %s131
      %s146 = sphi 0, %s132
      %s150 = sphi 0, %s150
      %s152 = sphi 0, %s150
      %s153 = sphi 0, %s152
      %s167 = sphi 0, %s153
      %s171 = sphi 0, %s171
      %s173 = sphi 0, %s171
      %s174 = sphi 0, %s173
      %s188 = sphi 0, %s174
      %s192 = sphi 0, %s192
      %s194 = sphi 0, %s192
      %s195 = sphi 0, %s194
      %s209 = sphi 0, %s195
      %s213 = sphi 0, %s213
      %s215 = sphi 0, %s213
      %s216 = sphi 0, %s215
      %s230 = sphi 0, %s216
      %s234 = sphi 0, %s234
      %s236 = sphi 0, %s234
      %s237 = sphi 0, %s236
      %s251 = sphi 0, %s237
      %s255 = sphi 0, %s255
      %s257 = sphi 0, %s255
      %s258 = sphi 0, %s257
      %s272 = sphi 0, %s258
      %s276 = sphi 0, %s276
      %s278 = sphi 0, %s276
      %s279 = sphi 0, %s278
      %s293 = sphi 0, %s279
      %s297 = sphi 0, %s297
      %s299 = sphi 0, %s297
      %s300 = sphi 0, %s299
      %s314 = sphi 0, %s300
      %s318 = sphi 0, %s318
      %s320 = sphi 0, %s318
      %s321 = sphi 0, %s320
      %s335 = sphi 0, %s321
      %s339 = sphi 0, %s339
      %s341 = sphi 0, %s339
      %s342 = sphi 0, %s341
      %s356 = sphi 0, %s342
      %s360 = sphi 0, %s360
      %s362 = sphi 0, %s360
      %s363 = sphi 0, %s362
      %s377 = sphi 0, %s363
      %s381 = sphi 0, %s381
      %s383 = sphi 0, %s381
      %s384 = sphi 0, %s383
      %s398 = sphi 0, %s384
      %s402 = sphi 0, %s402
      %s404 = sphi 0, %s402
      %s405 = sphi 0, %s404
      %s419 = sphi 0, %s405
      %s423 = sphi 0, %s423
      %s425 = sphi 0, %s423
      %s426 = sphi 0, %s425
      %s440 = sphi 0, %s426
      %s444 = sphi 0, %s444
      %s446 = sphi 0, %s444
      %s447 = sphi 0, %s446
      %s461 = sphi 0, %s447
      %s465 = sphi 0, %s465
      %s467 = sphi 0, %s465
      %s468 = sphi 0, %s467
      %s482 = sphi 0, %s468
      %s486 = sphi 0, %s486
      %s488 = sphi 0, %s486
      %s489 = sphi 0, %s488
      %s503 = sphi 0, %s489
      %s507 = sphi 0, %s507
      %s509 = sphi 0, %s507
      %s510 = sphi 0, %s509
      %s524 = sphi 0, %s510
      %s530 = sphi 0, %s532
      %s533 = sphi 0, %s530
      %s534 = sphi 0, %s533
      %s550 = sphi 0, %s534
    $region4: #{tpu_custom_call.1} parent=1 // loop_header_branch
      %35 = sbr.rel (%p33) target = $region8
    $region5: #{tpu_custom_call.1} parent=1 // loop_body
      %s37 = ssub.s32 %s32, 1
      %s38 = ssub.s32 %s32, 2
      %s39 = sadd.s32 %s32, 1
      %s40 = ssub.s32 %s32, %s39
      %p41 = scmp.eq.s32.totalorder %s40, 0
      %s43 = sadd.s32 %s42, 1
      %s44 = scalar_select %p41, %s42, %s43
      %p47 = pneg %p41
      %p48 = scmp.eq.s32.totalorder %s32, 1
      %p49 = por %p47, %p48
      %p50 = scmp.ne.s32.totalorder %s42, %s45
      %p51 = scmp.eq.s32.totalorder %s32, 0
      %p52 = por %p50, %p51
      %p53 = scmp.ne.s32.totalorder %s42, %s45
      %p54 = scmp.eq.s32.totalorder %s37, 1
      %p55 = por %p53, %p54
      %p56 = scmp.ne.s32.totalorder %s45, %s46
      %p57 = scmp.eq.s32.totalorder %s37, 0
      %p58 = por %p56, %p57
      %p59 = scmp.ne.s32.totalorder %s45, %s46
      %p60 = scmp.eq.s32.totalorder %s38, 1
      %p61 = por %p59, %p60
      %p63 = scmp.ne.s32.totalorder %s46, %s62
      %p64 = scmp.eq.s32.totalorder %s38, 0
      %p65 = por %p63, %p64
      %s67 = sadd.s32 %s66, 1
      %p70 = scmp.eq.s32.totalorder %s32, 1
      %p71 = scmp.ne.s32.totalorder %s66, %s68
      %p72 = scmp.eq.s32.totalorder %s32, 0
      %p73 = por %p71, %p72
      %p74 = scmp.ne.s32.totalorder %s66, %s68
      %p75 = scmp.eq.s32.totalorder %s37, 1
      %p76 = por %p74, %p75
      %p77 = scmp.ne.s32.totalorder %s68, %s69
      %p78 = scmp.eq.s32.totalorder %s37, 0
      %p79 = por %p77, %p78
      %p80 = scmp.ne.s32.totalorder %s68, %s69
      %p81 = scmp.eq.s32.totalorder %s38, 1
      %p82 = por %p80, %p81
      %p84 = scmp.ne.s32.totalorder %s69, %s83
      %p85 = scmp.eq.s32.totalorder %s38, 0
      %p86 = por %p84, %p85
      %s88 = sadd.s32 %s87, 1
      %p91 = scmp.eq.s32.totalorder %s32, 1
      %p92 = scmp.ne.s32.totalorder %s87, %s89
      %p93 = scmp.eq.s32.totalorder %s32, 0
      %p94 = por %p92, %p93
      %p95 = scmp.ne.s32.totalorder %s87, %s89
      %p96 = scmp.eq.s32.totalorder %s37, 1
      %p97 = por %p95, %p96
      %p98 = scmp.ne.s32.totalorder %s89, %s90
      %p99 = scmp.eq.s32.totalorder %s37, 0
      %p100 = por %p98, %p99
      %p101 = scmp.ne.s32.totalorder %s89, %s90
      %p102 = scmp.eq.s32.totalorder %s38, 1
      %p103 = por %p101, %p102
      %p105 = scmp.ne.s32.totalorder %s90, %s104
      %p106 = scmp.eq.s32.totalorder %s38, 0
      %p107 = por %p105, %p106
      %s109 = sadd.s32 %s108, 1
      %p112 = scmp.eq.s32.totalorder %s32, 1
      %p113 = scmp.ne.s32.totalorder %s108, %s110
      %p114 = scmp.eq.s32.totalorder %s32, 0
      %p115 = por %p113, %p114
      %p116 = scmp.ne.s32.totalorder %s108, %s110
      %p117 = scmp.eq.s32.totalorder %s37, 1
      %p118 = por %p116, %p117
      %p119 = scmp.ne.s32.totalorder %s110, %s111
      %p120 = scmp.eq.s32.totalorder %s37, 0
      %p121 = por %p119, %p120
      %p122 = scmp.ne.s32.totalorder %s110, %s111
      %p123 = scmp.eq.s32.totalorder %s38, 1
      %p124 = por %p122, %p123
      %p126 = scmp.ne.s32.totalorder %s111, %s125
      %p127 = scmp.eq.s32.totalorder %s38, 0
      %p128 = por %p126, %p127
      %s130 = sadd.s32 %s129, 1
      %p133 = scmp.eq.s32.totalorder %s32, 1
      %p134 = scmp.ne.s32.totalorder %s129, %s131
      %p135 = scmp.eq.s32.totalorder %s32, 0
      %p136 = por %p134, %p135
      %p137 = scmp.ne.s32.totalorder %s129, %s131
      %p138 = scmp.eq.s32.totalorder %s37, 1
      %p139 = por %p137, %p138
      %p140 = scmp.ne.s32.totalorder %s131, %s132
      %p141 = scmp.eq.s32.totalorder %s37, 0
      %p142 = por %p140, %p141
      %p143 = scmp.ne.s32.totalorder %s131, %s132
      %p144 = scmp.eq.s32.totalorder %s38, 1
      %p145 = por %p143, %p144
      %p147 = scmp.ne.s32.totalorder %s132, %s146
      %p148 = scmp.eq.s32.totalorder %s38, 0
      %p149 = por %p147, %p148
      %s151 = sadd.s32 %s150, 1
      %p154 = scmp.eq.s32.totalorder %s32, 1
      %p155 = scmp.ne.s32.totalorder %s150, %s152
      %p156 = scmp.eq.s32.totalorder %s32, 0
      %p157 = por %p155, %p156
      %p158 = scmp.ne.s32.totalorder %s150, %s152
      %p159 = scmp.eq.s32.totalorder %s37, 1
      %p160 = por %p158, %p159
      %p161 = scmp.ne.s32.totalorder %s152, %s153
      %p162 = scmp.eq.s32.totalorder %s37, 0
      %p163 = por %p161, %p162
      %p164 = scmp.ne.s32.totalorder %s152, %s153
      %p165 = scmp.eq.s32.totalorder %s38, 1
      %p166 = por %p164, %p165
      %p168 = scmp.ne.s32.totalorder %s153, %s167
      %p169 = scmp.eq.s32.totalorder %s38, 0
      %p170 = por %p168, %p169
      %s172 = sadd.s32 %s171, 1
      %p175 = scmp.eq.s32.totalorder %s32, 1
      %p176 = scmp.ne.s32.totalorder %s171, %s173
      %p177 = scmp.eq.s32.totalorder %s32, 0
      %p178 = por %p176, %p177
      %p179 = scmp.ne.s32.totalorder %s171, %s173
      %p180 = scmp.eq.s32.totalorder %s37, 1
      %p181 = por %p179, %p180
      %p182 = scmp.ne.s32.totalorder %s173, %s174
      %p183 = scmp.eq.s32.totalorder %s37, 0
      %p184 = por %p182, %p183
      %p185 = scmp.ne.s32.totalorder %s173, %s174
      %p186 = scmp.eq.s32.totalorder %s38, 1
      %p187 = por %p185, %p186
      %p189 = scmp.ne.s32.totalorder %s174, %s188
      %p190 = scmp.eq.s32.totalorder %s38, 0
      %p191 = por %p189, %p190
      %s193 = sadd.s32 %s192, 1
      %p196 = scmp.eq.s32.totalorder %s32, 1
      %p197 = scmp.ne.s32.totalorder %s192, %s194
      %p198 = scmp.eq.s32.totalorder %s32, 0
      %p199 = por %p197, %p198
      %p200 = scmp.ne.s32.totalorder %s192, %s194
      %p201 = scmp.eq.s32.totalorder %s37, 1
      %p202 = por %p200, %p201
      %p203 = scmp.ne.s32.totalorder %s194, %s195
      %p204 = scmp.eq.s32.totalorder %s37, 0
      %p205 = por %p203, %p204
      %p206 = scmp.ne.s32.totalorder %s194, %s195
      %p207 = scmp.eq.s32.totalorder %s38, 1
      %p208 = por %p206, %p207
      %p210 = scmp.ne.s32.totalorder %s195, %s209
      %p211 = scmp.eq.s32.totalorder %s38, 0
      %p212 = por %p210, %p211
      %s214 = sadd.s32 %s213, 1
      %p217 = scmp.eq.s32.totalorder %s32, 1
      %p218 = scmp.ne.s32.totalorder %s213, %s215
      %p219 = scmp.eq.s32.totalorder %s32, 0
      %p220 = por %p218, %p219
      %p221 = scmp.ne.s32.totalorder %s213, %s215
      %p222 = scmp.eq.s32.totalorder %s37, 1
      %p223 = por %p221, %p222
      %p224 = scmp.ne.s32.totalorder %s215, %s216
      %p225 = scmp.eq.s32.totalorder %s37, 0
      %p226 = por %p224, %p225
      %p227 = scmp.ne.s32.totalorder %s215, %s216
      %p228 = scmp.eq.s32.totalorder %s38, 1
      %p229 = por %p227, %p228
      %p231 = scmp.ne.s32.totalorder %s216, %s230
      %p232 = scmp.eq.s32.totalorder %s38, 0
      %p233 = por %p231, %p232
      %s235 = sadd.s32 %s234, 1
      %p238 = scmp.eq.s32.totalorder %s32, 1
      %p239 = scmp.ne.s32.totalorder %s234, %s236
      %p240 = scmp.eq.s32.totalorder %s32, 0
      %p241 = por %p239, %p240
      %p242 = scmp.ne.s32.totalorder %s234, %s236
      %p243 = scmp.eq.s32.totalorder %s37, 1
      %p244 = por %p242, %p243
      %p245 = scmp.ne.s32.totalorder %s236, %s237
      %p246 = scmp.eq.s32.totalorder %s37, 0
      %p247 = por %p245, %p246
      %p248 = scmp.ne.s32.totalorder %s236, %s237
      %p249 = scmp.eq.s32.totalorder %s38, 1
      %p250 = por %p248, %p249
      %p252 = scmp.ne.s32.totalorder %s237, %s251
      %p253 = scmp.eq.s32.totalorder %s38, 0
      %p254 = por %p252, %p253
      %s256 = sadd.s32 %s255, 1
      %p259 = scmp.eq.s32.totalorder %s32, 1
      %p260 = scmp.ne.s32.totalorder %s255, %s257
      %p261 = scmp.eq.s32.totalorder %s32, 0
      %p262 = por %p260, %p261
      %p263 = scmp.ne.s32.totalorder %s255, %s257
      %p264 = scmp.eq.s32.totalorder %s37, 1
      %p265 = por %p263, %p264
      %p266 = scmp.ne.s32.totalorder %s257, %s258
      %p267 = scmp.eq.s32.totalorder %s37, 0
      %p268 = por %p266, %p267
      %p269 = scmp.ne.s32.totalorder %s257, %s258
      %p270 = scmp.eq.s32.totalorder %s38, 1
      %p271 = por %p269, %p270
      %p273 = scmp.ne.s32.totalorder %s258, %s272
      %p274 = scmp.eq.s32.totalorder %s38, 0
      %p275 = por %p273, %p274
      %s277 = sadd.s32 %s276, 1
      %p280 = scmp.eq.s32.totalorder %s32, 1
      %p281 = scmp.ne.s32.totalorder %s276, %s278
      %p282 = scmp.eq.s32.totalorder %s32, 0
      %p283 = por %p281, %p282
      %p284 = scmp.ne.s32.totalorder %s276, %s278
      %p285 = scmp.eq.s32.totalorder %s37, 1
      %p286 = por %p284, %p285
      %p287 = scmp.ne.s32.totalorder %s278, %s279
      %p288 = scmp.eq.s32.totalorder %s37, 0
      %p289 = por %p287, %p288
      %p290 = scmp.ne.s32.totalorder %s278, %s279
      %p291 = scmp.eq.s32.totalorder %s38, 1
      %p292 = por %p290, %p291
      %p294 = scmp.ne.s32.totalorder %s279, %s293
      %p295 = scmp.eq.s32.totalorder %s38, 0
      %p296 = por %p294, %p295
      %s298 = sadd.s32 %s297, 1
      %p301 = scmp.eq.s32.totalorder %s32, 1
      %p302 = scmp.ne.s32.totalorder %s297, %s299
      %p303 = scmp.eq.s32.totalorder %s32, 0
      %p304 = por %p302, %p303
      %p305 = scmp.ne.s32.totalorder %s297, %s299
      %p306 = scmp.eq.s32.totalorder %s37, 1
      %p307 = por %p305, %p306
      %p308 = scmp.ne.s32.totalorder %s299, %s300
      %p309 = scmp.eq.s32.totalorder %s37, 0
      %p310 = por %p308, %p309
      %p311 = scmp.ne.s32.totalorder %s299, %s300
      %p312 = scmp.eq.s32.totalorder %s38, 1
      %p313 = por %p311, %p312
      %p315 = scmp.ne.s32.totalorder %s300, %s314
      %p316 = scmp.eq.s32.totalorder %s38, 0
      %p317 = por %p315, %p316
      %s319 = sadd.s32 %s318, 1
      %p322 = scmp.eq.s32.totalorder %s32, 1
      %p323 = scmp.ne.s32.totalorder %s318, %s320
      %p324 = scmp.eq.s32.totalorder %s32, 0
      %p325 = por %p323, %p324
      %p326 = scmp.ne.s32.totalorder %s318, %s320
      %p327 = scmp.eq.s32.totalorder %s37, 1
      %p328 = por %p326, %p327
      %p329 = scmp.ne.s32.totalorder %s320, %s321
      %p330 = scmp.eq.s32.totalorder %s37, 0
      %p331 = por %p329, %p330
      %p332 = scmp.ne.s32.totalorder %s320, %s321
      %p333 = scmp.eq.s32.totalorder %s38, 1
      %p334 = por %p332, %p333
      %p336 = scmp.ne.s32.totalorder %s321, %s335
      %p337 = scmp.eq.s32.totalorder %s38, 0
      %p338 = por %p336, %p337
      %s340 = sadd.s32 %s339, 1
      %p343 = scmp.eq.s32.totalorder %s32, 1
      %p344 = scmp.ne.s32.totalorder %s339, %s341
      %p345 = scmp.eq.s32.totalorder %s32, 0
      %p346 = por %p344, %p345
      %p347 = scmp.ne.s32.totalorder %s339, %s341
      %p348 = scmp.eq.s32.totalorder %s37, 1
      %p349 = por %p347, %p348
      %p350 = scmp.ne.s32.totalorder %s341, %s342
      %p351 = scmp.eq.s32.totalorder %s37, 0
      %p352 = por %p350, %p351
      %p353 = scmp.ne.s32.totalorder %s341, %s342
      %p354 = scmp.eq.s32.totalorder %s38, 1
      %p355 = por %p353, %p354
      %p357 = scmp.ne.s32.totalorder %s342, %s356
      %p358 = scmp.eq.s32.totalorder %s38, 0
      %p359 = por %p357, %p358
      %s361 = sadd.s32 %s360, 1
      %p364 = scmp.eq.s32.totalorder %s32, 1
      %p365 = scmp.ne.s32.totalorder %s360, %s362
      %p366 = scmp.eq.s32.totalorder %s32, 0
      %p367 = por %p365, %p366
      %p368 = scmp.ne.s32.totalorder %s360, %s362
      %p369 = scmp.eq.s32.totalorder %s37, 1
      %p370 = por %p368, %p369
      %p371 = scmp.ne.s32.totalorder %s362, %s363
      %p372 = scmp.eq.s32.totalorder %s37, 0
      %p373 = por %p371, %p372
      %p374 = scmp.ne.s32.totalorder %s362, %s363
      %p375 = scmp.eq.s32.totalorder %s38, 1
      %p376 = por %p374, %p375
      %p378 = scmp.ne.s32.totalorder %s363, %s377
      %p379 = scmp.eq.s32.totalorder %s38, 0
      %p380 = por %p378, %p379
      %s382 = sadd.s32 %s381, 1
      %p385 = scmp.eq.s32.totalorder %s32, 1
      %p386 = scmp.ne.s32.totalorder %s381, %s383
      %p387 = scmp.eq.s32.totalorder %s32, 0
      %p388 = por %p386, %p387
      %p389 = scmp.ne.s32.totalorder %s381, %s383
      %p390 = scmp.eq.s32.totalorder %s37, 1
      %p391 = por %p389, %p390
      %p392 = scmp.ne.s32.totalorder %s383, %s384
      %p393 = scmp.eq.s32.totalorder %s37, 0
      %p394 = por %p392, %p393
      %p395 = scmp.ne.s32.totalorder %s383, %s384
      %p396 = scmp.eq.s32.totalorder %s38, 1
      %p397 = por %p395, %p396
      %p399 = scmp.ne.s32.totalorder %s384, %s398
      %p400 = scmp.eq.s32.totalorder %s38, 0
      %p401 = por %p399, %p400
      %s403 = sadd.s32 %s402, 1
      %p406 = scmp.eq.s32.totalorder %s32, 1
      %p407 = scmp.ne.s32.totalorder %s402, %s404
      %p408 = scmp.eq.s32.totalorder %s32, 0
      %p409 = por %p407, %p408
      %p410 = scmp.ne.s32.totalorder %s402, %s404
      %p411 = scmp.eq.s32.totalorder %s37, 1
      %p412 = por %p410, %p411
      %p413 = scmp.ne.s32.totalorder %s404, %s405
      %p414 = scmp.eq.s32.totalorder %s37, 0
      %p415 = por %p413, %p414
      %p416 = scmp.ne.s32.totalorder %s404, %s405
      %p417 = scmp.eq.s32.totalorder %s38, 1
      %p418 = por %p416, %p417
      %p420 = scmp.ne.s32.totalorder %s405, %s419
      %p421 = scmp.eq.s32.totalorder %s38, 0
      %p422 = por %p420, %p421
      %s424 = sadd.s32 %s423, 1
      %p427 = scmp.eq.s32.totalorder %s32, 1
      %p428 = scmp.ne.s32.totalorder %s423, %s425
      %p429 = scmp.eq.s32.totalorder %s32, 0
      %p430 = por %p428, %p429
      %p431 = scmp.ne.s32.totalorder %s423, %s425
      %p432 = scmp.eq.s32.totalorder %s37, 1
      %p433 = por %p431, %p432
      %p434 = scmp.ne.s32.totalorder %s425, %s426
      %p435 = scmp.eq.s32.totalorder %s37, 0
      %p436 = por %p434, %p435
      %p437 = scmp.ne.s32.totalorder %s425, %s426
      %p438 = scmp.eq.s32.totalorder %s38, 1
      %p439 = por %p437, %p438
      %p441 = scmp.ne.s32.totalorder %s426, %s440
      %p442 = scmp.eq.s32.totalorder %s38, 0
      %p443 = por %p441, %p442
      %s445 = sadd.s32 %s444, 1
      %p448 = scmp.eq.s32.totalorder %s32, 1
      %p449 = scmp.ne.s32.totalorder %s444, %s446
      %p450 = scmp.eq.s32.totalorder %s32, 0
      %p451 = por %p449, %p450
      %p452 = scmp.ne.s32.totalorder %s444, %s446
      %p453 = scmp.eq.s32.totalorder %s37, 1
      %p454 = por %p452, %p453
      %p455 = scmp.ne.s32.totalorder %s446, %s447
      %p456 = scmp.eq.s32.totalorder %s37, 0
      %p457 = por %p455, %p456
      %p458 = scmp.ne.s32.totalorder %s446, %s447
      %p459 = scmp.eq.s32.totalorder %s38, 1
      %p460 = por %p458, %p459
      %p462 = scmp.ne.s32.totalorder %s447, %s461
      %p463 = scmp.eq.s32.totalorder %s38, 0
      %p464 = por %p462, %p463
      %s466 = sadd.s32 %s465, 1
      %p469 = scmp.eq.s32.totalorder %s32, 1
      %p470 = scmp.ne.s32.totalorder %s465, %s467
      %p471 = scmp.eq.s32.totalorder %s32, 0
      %p472 = por %p470, %p471
      %p473 = scmp.ne.s32.totalorder %s465, %s467
      %p474 = scmp.eq.s32.totalorder %s37, 1
      %p475 = por %p473, %p474
      %p476 = scmp.ne.s32.totalorder %s467, %s468
      %p477 = scmp.eq.s32.totalorder %s37, 0
      %p478 = por %p476, %p477
      %p479 = scmp.ne.s32.totalorder %s467, %s468
      %p480 = scmp.eq.s32.totalorder %s38, 1
      %p481 = por %p479, %p480
      %p483 = scmp.ne.s32.totalorder %s468, %s482
      %p484 = scmp.eq.s32.totalorder %s38, 0
      %p485 = por %p483, %p484
      %s487 = sadd.s32 %s486, 1
      %p490 = scmp.eq.s32.totalorder %s32, 1
      %p491 = scmp.ne.s32.totalorder %s486, %s488
      %p492 = scmp.eq.s32.totalorder %s32, 0
      %p493 = por %p491, %p492
      %p494 = scmp.ne.s32.totalorder %s486, %s488
      %p495 = scmp.eq.s32.totalorder %s37, 1
      %p496 = por %p494, %p495
      %p497 = scmp.ne.s32.totalorder %s488, %s489
      %p498 = scmp.eq.s32.totalorder %s37, 0
      %p499 = por %p497, %p498
      %p500 = scmp.ne.s32.totalorder %s488, %s489
      %p501 = scmp.eq.s32.totalorder %s38, 1
      %p502 = por %p500, %p501
      %p504 = scmp.ne.s32.totalorder %s489, %s503
      %p505 = scmp.eq.s32.totalorder %s38, 0
      %p506 = por %p504, %p505
      %s508 = sadd.s32 %s507, 1
      %p511 = scmp.eq.s32.totalorder %s32, 1
      %p512 = scmp.ne.s32.totalorder %s507, %s509
      %p513 = scmp.eq.s32.totalorder %s32, 0
      %p514 = por %p512, %p513
      %p515 = scmp.ne.s32.totalorder %s507, %s509
      %p516 = scmp.eq.s32.totalorder %s37, 1
      %p517 = por %p515, %p516
      %p518 = scmp.ne.s32.totalorder %s509, %s510
      %p519 = scmp.eq.s32.totalorder %s37, 0
      %p520 = por %p518, %p519
      %p521 = scmp.ne.s32.totalorder %s509, %s510
      %p522 = scmp.eq.s32.totalorder %s38, 1
      %p523 = por %p521, %p522
      %p525 = scmp.ne.s32.totalorder %s510, %s524
      %p526 = scmp.eq.s32.totalorder %s38, 0
      %p527 = por %p525, %p526
      %s528 = ssub.s32 %s32, %s39
      %p529 = scmp.eq.s32.totalorder %s528, 0
      %s531 = sadd.s32 %s530, 1
      %s532 = scalar_select %p529, %s530, %s531
      %p535 = pneg %p529
      %p536 = scmp.eq.s32.totalorder %s32, 1
      %p537 = por %p535, %p536
      %p538 = scmp.ne.s32.totalorder %s530, %s533
      %p539 = scmp.eq.s32.totalorder %s32, 0
      %p540 = por %p538, %p539
      %p541 = scmp.ne.s32.totalorder %s530, %s533
      %p542 = scmp.eq.s32.totalorder %s37, 1
      %p543 = por %p541, %p542
      %p544 = scmp.ne.s32.totalorder %s533, %s534
      %p545 = scmp.eq.s32.totalorder %s37, 0
      %p546 = por %p544, %p545
      %p547 = scmp.ne.s32.totalorder %s533, %s534
      %p548 = scmp.eq.s32.totalorder %s38, 1
      %p549 = por %p547, %p548
      %p551 = scmp.ne.s32.totalorder %s534, %s550
      %p552 = scmp.eq.s32.totalorder %s38, 0
      %p553 = por %p551, %p552
      %p554 = scmp.le.s32.totalorder 1, %s32
      %p555 = scmp.lt.s32.totalorder %s32, 3
      %p556 = pnand %p554, %p555
      %p557 = pneg %p556
      // Predicated region
      $region9: #{tpu_custom_call.1} parent=5 // pred_check
        _
      $region10: #{tpu_custom_call.1} parent=5 // pred_check_branch
        %559 = sbr.rel (%p556) target = $region12
      $region11: #{tpu_custom_call.1} parent=5 // pred_region
        %s560 = ssub.s32 %s32, 1
        // Predicated region
        $region13: #{tpu_custom_call.1} parent=11 // pred_check
          %p561 = pneg %p79
        $region14: #{tpu_custom_call.1} parent=11 // pred_check_branch
          %563 = sbr.rel (%p561) target = $region16
        $region15: #{tpu_custom_call.1} parent=11 // pred_region
          _
        $region16: #{tpu_custom_call.1} parent=11 // pred_fallthru
          _
        // Predicated region
        $region17: #{tpu_custom_call.1} parent=11 // pred_check
          %p564 = pneg %p100
        $region18: #{tpu_custom_call.1} parent=11 // pred_check_branch
          %566 = sbr.rel (%p564) target = $region20
        $region19: #{tpu_custom_call.1} parent=11 // pred_region
          _
        $region20: #{tpu_custom_call.1} parent=11 // pred_fallthru
          _
        // Predicated region
        $region21: #{tpu_custom_call.1} parent=11 // pred_check
          %p567 = pneg %p121
        $region22: #{tpu_custom_call.1} parent=11 // pred_check_branch
          %569 = sbr.rel (%p567) target = $region24
        $region23: #{tpu_custom_call.1} parent=11 // pred_region
          _
        $region24: #{tpu_custom_call.1} parent=11 // pred_fallthru
          _
        // Predicated region
        $region25: #{tpu_custom_call.1} parent=11 // pred_check
          %p570 = pneg %p142
        $region26: #{tpu_custom_call.1} parent=11 // pred_check_branch
          %572 = sbr.rel (%p570) target = $region28
        $region27: #{tpu_custom_call.1} parent=11 // pred_region
          _
        $region28: #{tpu_custom_call.1} parent=11 // pred_fallthru
          _
        // Predicated region
        $region29: #{tpu_custom_call.1} parent=11 // pred_check
          %p573 = pneg %p163
        $region30: #{tpu_custom_call.1} parent=11 // pred_check_branch
          %575 = sbr.rel (%p573) target = $region32
        $region31: #{tpu_custom_call.1} parent=11 // pred_region
          _
        $region32: #{tpu_custom_call.1} parent=11 // pred_fallthru
          _
        // Predicated region
        $region33: #{tpu_custom_call.1} parent=11 // pred_check
          %p576 = pneg %p184
        $region34: #{tpu_custom_call.1} parent=11 // pred_check_branch
          %578 = sbr.rel (%p576) target = $region36
        $region35: #{tpu_custom_call.1} parent=11 // pred_region
          _
        $region36: #{tpu_custom_call.1} parent=11 // pred_fallthru
          _
        // Predicated region
        $region37: #{tpu_custom_call.1} parent=11 // pred_check
          %p579 = pneg %p205
        $region38: #{tpu_custom_call.1} parent=11 // pred_check_branch
          %581 = sbr.rel (%p579) target = $region40
        $region39: #{tpu_custom_call.1} parent=11 // pred_region
          _
        $region40: #{tpu_custom_call.1} parent=11 // pred_fallthru
          _
        // Predicated region
        $region41: #{tpu_custom_call.1} parent=11 // pred_check
          %p582 = pneg %p226
        $region42: #{tpu_custom_call.1} parent=11 // pred_check_branch
          %584 = sbr.rel (%p582) target = $region44
        $region43: #{tpu_custom_call.1} parent=11 // pred_region
          _
        $region44: #{tpu_custom_call.1} parent=11 // pred_fallthru
          _
        // Predicated region
        $region45: #{tpu_custom_call.1} parent=11 // pred_check
          %p585 = pneg %p247
        $region46: #{tpu_custom_call.1} parent=11 // pred_check_branch
          %587 = sbr.rel (%p585) target = $region48
        $region47: #{tpu_custom_call.1} parent=11 // pred_region
          _
        $region48: #{tpu_custom_call.1} parent=11 // pred_fallthru
          _
        // Predicated region
        $region49: #{tpu_custom_call.1} parent=11 // pred_check
          %p588 = pneg %p268
        $region50: #{tpu_custom_call.1} parent=11 // pred_check_branch
          %590 = sbr.rel (%p588) target = $region52
        $region51: #{tpu_custom_call.1} parent=11 // pred_region
          _
        $region52: #{tpu_custom_call.1} parent=11 // pred_fallthru
          _
        // Predicated region
        $region53: #{tpu_custom_call.1} parent=11 // pred_check
          %p591 = pneg %p289
        $region54: #{tpu_custom_call.1} parent=11 // pred_check_branch
          %593 = sbr.rel (%p591) target = $region56
        $region55: #{tpu_custom_call.1} parent=11 // pred_region
          _
        $region56: #{tpu_custom_call.1} parent=11 // pred_fallthru
          _
        // Predicated region
        $region57: #{tpu_custom_call.1} parent=11 // pred_check
          %p594 = pneg %p310
        $region58: #{tpu_custom_call.1} parent=11 // pred_check_branch
          %596 = sbr.rel (%p594) target = $region60
        $region59: #{tpu_custom_call.1} parent=11 // pred_region
          _
        $region60: #{tpu_custom_call.1} parent=11 // pred_fallthru
          _
        // Predicated region
        $region61: #{tpu_custom_call.1} parent=11 // pred_check
          %p597 = pneg %p331
        $region62: #{tpu_custom_call.1} parent=11 // pred_check_branch
          %599 = sbr.rel (%p597) target = $region64
        $region63: #{tpu_custom_call.1} parent=11 // pred_region
          _
        $region64: #{tpu_custom_call.1} parent=11 // pred_fallthru
          _
        // Predicated region
        $region65: #{tpu_custom_call.1} parent=11 // pred_check
          %p600 = pneg %p352
        $region66: #{tpu_custom_call.1} parent=11 // pred_check_branch
          %602 = sbr.rel (%p600) target = $region68
        $region67: #{tpu_custom_call.1} parent=11 // pred_region
          _
        $region68: #{tpu_custom_call.1} parent=11 // pred_fallthru
          _
        // Predicated region
        $region69: #{tpu_custom_call.1} parent=11 // pred_check
          %p603 = pneg %p373
        $region70: #{tpu_custom_call.1} parent=11 // pred_check_branch
          %605 = sbr.rel (%p603) target = $region72
        $region71: #{tpu_custom_call.1} parent=11 // pred_region
          _
        $region72: #{tpu_custom_call.1} parent=11 // pred_fallthru
          _
        // Predicated region
        $region73: #{tpu_custom_call.1} parent=11 // pred_check
          %p606 = pneg %p394
        $region74: #{tpu_custom_call.1} parent=11 // pred_check_branch
          %608 = sbr.rel (%p606) target = $region76
        $region75: #{tpu_custom_call.1} parent=11 // pred_region
          _
        $region76: #{tpu_custom_call.1} parent=11 // pred_fallthru
          _
        // Predicated region
        $region77: #{tpu_custom_call.1} parent=11 // pred_check
          %p609 = pneg %p415
        $region78: #{tpu_custom_call.1} parent=11 // pred_check_branch
          %611 = sbr.rel (%p609) target = $region80
        $region79: #{tpu_custom_call.1} parent=11 // pred_region
          _
        $region80: #{tpu_custom_call.1} parent=11 // pred_fallthru
          _
        // Predicated region
        $region81: #{tpu_custom_call.1} parent=11 // pred_check
          %p612 = pneg %p436
        $region82: #{tpu_custom_call.1} parent=11 // pred_check_branch
          %614 = sbr.rel (%p612) target = $region84
        $region83: #{tpu_custom_call.1} parent=11 // pred_region
          _
        $region84: #{tpu_custom_call.1} parent=11 // pred_fallthru
          _
        // Predicated region
        $region85: #{tpu_custom_call.1} parent=11 // pred_check
          %p615 = pneg %p457
        $region86: #{tpu_custom_call.1} parent=11 // pred_check_branch
          %617 = sbr.rel (%p615) target = $region88
        $region87: #{tpu_custom_call.1} parent=11 // pred_region
          _
        $region88: #{tpu_custom_call.1} parent=11 // pred_fallthru
          _
        // Predicated region
        $region89: #{tpu_custom_call.1} parent=11 // pred_check
          %p618 = pneg %p478
        $region90: #{tpu_custom_call.1} parent=11 // pred_check_branch
          %620 = sbr.rel (%p618) target = $region92
        $region91: #{tpu_custom_call.1} parent=11 // pred_region
          _
        $region92: #{tpu_custom_call.1} parent=11 // pred_fallthru
          _
        // Predicated region
        $region93: #{tpu_custom_call.1} parent=11 // pred_check
          %p621 = pneg %p499
        $region94: #{tpu_custom_call.1} parent=11 // pred_check_branch
          %623 = sbr.rel (%p621) target = $region96
        $region95: #{tpu_custom_call.1} parent=11 // pred_region
          _
        $region96: #{tpu_custom_call.1} parent=11 // pred_fallthru
          _
        // Predicated region
        $region97: #{tpu_custom_call.1} parent=11 // pred_check
          %p624 = pneg %p520
        $region98: #{tpu_custom_call.1} parent=11 // pred_check_branch
          %626 = sbr.rel (%p624) target = $region100
        $region99: #{tpu_custom_call.1} parent=11 // pred_region
          _
        $region100: #{tpu_custom_call.1} parent=11 // pred_fallthru
          _
      $region12: #{tpu_custom_call.1} parent=5 // pred_fallthru
        _
      %p627 = scmp.lt.s32.totalorder %s32, 2
      // Predicated region
      $region101: #{tpu_custom_call.1} parent=5 // pred_check
        %p628 = pneg %p627
      $region102: #{tpu_custom_call.1} parent=5 // pred_check_branch
        %630 = sbr.rel (%p628) target = $region104
      $region103: #{tpu_custom_call.1} parent=5 // pred_region
        // Predicated region
        $region105: #{tpu_custom_call.1} parent=103 // pred_check
          %p631 = pneg %p52
        $region106: #{tpu_custom_call.1} parent=103 // pred_check_branch
          %633 = sbr.rel (%p631) target = $region108
        $region107: #{tpu_custom_call.1} parent=103 // pred_region
          %p634 = scmp.lt.s32.totalorder %s32, 1
          %s635 = scalar_select %p634, %s32, 1
          %s636 = smul.addr %s635, 4
          %s637 = smul.addr %s636, 8
          %s638 = scalar_lea.vmem %s0, %s637
        $region108: #{tpu_custom_call.1} parent=103 // pred_fallthru
          _
      $region104: #{tpu_custom_call.1} parent=5 // pred_fallthru
        _
      %p639 = scmp.le.s32.totalorder 1, %s32
      %p640 = scmp.lt.s32.totalorder %s32, 3
      %p641 = pnand %p639, %p640
      %p642 = pneg %p641
      // Predicated region
      $region109: #{tpu_custom_call.1} parent=5 // pred_check
        _
      $region110: #{tpu_custom_call.1} parent=5 // pred_check_branch
        %644 = sbr.rel (%p641) target = $region112
      $region111: #{tpu_custom_call.1} parent=5 // pred_region
        %s645 = ssub.s32 %s32, 1
        %p646 = scmp.lt.s32.totalorder %s37, 1
        %s647 = scalar_select %p646, %s37, 1
        %s648 = smul.addr %s647, 4
        %s649 = smul.addr %s648, 8
        %s650 = scalar_lea.vmem %s0, %s649
        %p651 = pneg %p58
        %p652 = pneg %p55
        %p653 = pneg %p79
        %p654 = pneg %p76
        %p655 = pneg %p100
        %p656 = pneg %p97
        %p657 = pneg %p121
        %p658 = pneg %p118
        %p659 = pneg %p142
        %p660 = pneg %p139
        %p661 = pneg %p163
        %p662 = pneg %p160
        %p663 = pneg %p184
        %p664 = pneg %p181
        %p665 = pneg %p205
        %p666 = pneg %p202
        %p667 = pneg %p226
        %p668 = pneg %p223
        %p669 = pneg %p247
        %p670 = pneg %p244
        %p671 = pneg %p268
        %p672 = pneg %p265
        %p673 = pneg %p289
        %p674 = pneg %p286
        %p675 = pneg %p310
        %p676 = pneg %p307
        %p677 = pneg %p331
        %p678 = pneg %p328
        %p679 = pneg %p352
        %p680 = pneg %p349
        %p681 = pneg %p373
        %p682 = pneg %p370
        %p683 = pneg %p394
        %p684 = pneg %p391
        %p685 = pneg %p415
        %p686 = pneg %p412
        %p687 = pneg %p436
        %p688 = pneg %p433
        %p689 = pneg %p457
        %p690 = pneg %p454
        %p691 = pneg %p478
        %p692 = pneg %p475
        %p693 = pneg %p499
        %p694 = pneg %p496
        %p695 = pneg %p520
        %p696 = pneg %p517
        %p697 = pneg %p546
        %p698 = pneg %p543
        %s699 = sand.u32 %s533, 1
        %s700 = scalar_lea.sflag [#allocation3], %s699
        %s701 = sand.u32 %s533, 1
        %s702 = smul.addr %s701, 16
        %s703 = scalar_lea.vmem [#allocation2], %s702
        %p704 = scmp.lt.s32.totalorder %s37, 1
        %s705 = scalar_select %p704, %s37, 1
        %s706 = smul.addr %s705, 4
        %s707 = smul.addr %s706, 8
        %s708 = scalar_lea.vmem %s0, %s707
        %v710 = vld [vmem:[%s708] sm:$0xff]
        %v711 = vld [vmem:[%s708 + $0x8] sm:$0xff]
        %v712 = vld [vmem:[%s708 + $0x10] sm:$0xff]
        %v713 = vld [vmem:[%s708 + $0x18] sm:$0xff]
        %v714 = vld [vmem:[%s1] sm:$0xf]
        %v715 = vld [vmem:[%s1 + $0x4] sm:$0xf]
        %v716 = vpack.c.bf16 %v710, %v710
        %v717 = vpack.c.bf16 %v711, %v711
        %v718 = vpack.c.bf16 %v712, %v712
        %v719 = vpack.c.bf16 %v713, %v713
        %v720 = vld [vmem:[%s2] sm:$0xff]
        %v721 = vld [vmem:[%s2 + $0x8] sm:$0xff]
        %723 = vset.pattern.permute.xlu0 0
        %724 = vperm.xlu0 %723, %v720
        %v725 = vpop.permute.xlu0 %724
        %728 = vset.pattern.permute.xlu0 0
        %729 = vperm.xlu0 %728, %v721
        %v730 = vpop.permute.xlu0 %729
        %v734 = vunpack.c.l.b16 %v714
        %v735 = vunpack.c.l.b16 %v715
        %v736 = vpack.c.b16 %v735, %v734
        %vm737 = vcmask 64512
        %v739 = vsel %vm737, %v736, 0
        %vm741 = vcmask 1043456
        %v743 = vsel %vm741, %v716, 0
        %v746 = vsel %vm741, %v717, 0
        %v749 = vsel %vm741, %v718, 0
        %v752 = vsel %vm741, %v719, 0
        %754 = vmatprep.subr.bf16.mxu0 0
        %755 = vmatpush1.bf16.msra.mxu0 0
        %756 = vmatprep.subr.bf16.mxu0 0
        %757 = vmatpush1.bf16.msra.mxu0 0
        %758 = vmatprep.subr.bf16.mxu0 0
        %759 = vmatpush1.bf16.msra.mxu0 0
        %760 = vmatprep.subr.bf16.mxu0 0
        %761 = vmatpush1.bf16.msra.mxu0 0
        %762 = vmatprep.subr.bf16.mxu0 0
        %763 = vmatpush1.bf16.msra.mxu0 0
        %764 = vmatprep.subr.bf16.mxu0 0
        %765 = vmatpush1.bf16.msra.mxu0 0
        %766 = vmatprep.subr.bf16.mxu0 0
        %767 = vmatpush1.bf16.msra.mxu0 0
        %768 = vmatprep.subr.bf16.mxu0 %v746
        %769 = vmatpush1.bf16.msra.mxu0 %v743
        %770 = vmatprep.subr.bf16.mxu0 0
        %771 = vmatpush2.bf16.msra.mxu0 0
        %772 = vmatprep.subr.bf16.mxu0 0
        %773 = vmatpush2.bf16.msra.mxu0 0
        %774 = vmatprep.subr.bf16.mxu0 0
        %775 = vmatpush2.bf16.msra.mxu0 0
        %776 = vmatprep.subr.bf16.mxu0 0
        %777 = vmatpush2.bf16.msra.mxu0 0
        %778 = vmatprep.subr.bf16.mxu0 0
        %779 = vmatpush2.bf16.msra.mxu0 0
        %780 = vmatprep.subr.bf16.mxu0 0
        %781 = vmatpush2.bf16.msra.mxu0 0
        %782 = vmatprep.subr.bf16.mxu0 0
        %783 = vmatpush2.bf16.msra.mxu0 0
        %784 = vmatprep.subr.bf16.mxu0 0
        %785 = vmatpush2.bf16.msra.mxu0 0
        %786 = vmatprep.mubr.bf16.mxu0 0
        %787 = vmatmul.mubr.bf16.gmra.mxu0 %v739
        %v788 = vpop.f32.mrf.mxu0
        %v789 = vadd.f32 %v725, %v788
        %v790 = vpop.f32.mrf.mxu0
        %v791 = vadd.f32 %v725, %v790
        %v792 = vpop.f32.mrf.mxu0
        %v793 = vadd.f32 %v730, %v792
        %v794 = vpop.f32.mrf.mxu0
        %v795 = vadd.f32 %v730, %v794
        %796 = vdwg.mxu0
        %797 = vmatprep.subr.bf16.mxu0 0
        %798 = vmatpush1.bf16.msra.mxu0 0
        %799 = vmatprep.subr.bf16.mxu0 0
        %800 = vmatpush1.bf16.msra.mxu0 0
        %801 = vmatprep.subr.bf16.mxu0 0
        %802 = vmatpush1.bf16.msra.mxu0 0
        %803 = vmatprep.subr.bf16.mxu0 0
        %804 = vmatpush1.bf16.msra.mxu0 0
        %805 = vmatprep.subr.bf16.mxu0 0
        %806 = vmatpush1.bf16.msra.mxu0 0
        %807 = vmatprep.subr.bf16.mxu0 0
        %808 = vmatpush1.bf16.msra.mxu0 0
        %809 = vmatprep.subr.bf16.mxu0 0
        %810 = vmatpush1.bf16.msra.mxu0 0
        %811 = vmatprep.subr.bf16.mxu0 %v752
        %812 = vmatpush1.bf16.msra.mxu0 %v749
        %813 = vmatprep.subr.bf16.mxu0 0
        %814 = vmatpush2.bf16.msra.mxu0 0
        %815 = vmatprep.subr.bf16.mxu0 0
        %816 = vmatpush2.bf16.msra.mxu0 0
        %817 = vmatprep.subr.bf16.mxu0 0
        %818 = vmatpush2.bf16.msra.mxu0 0
        %819 = vmatprep.subr.bf16.mxu0 0
        %820 = vmatpush2.bf16.msra.mxu0 0
        %821 = vmatprep.subr.bf16.mxu0 0
        %822 = vmatpush2.bf16.msra.mxu0 0
        %823 = vmatprep.subr.bf16.mxu0 0
        %824 = vmatpush2.bf16.msra.mxu0 0
        %825 = vmatprep.subr.bf16.mxu0 0
        %826 = vmatpush2.bf16.msra.mxu0 0
        %827 = vmatprep.subr.bf16.mxu0 0
        %828 = vmatpush2.bf16.msra.mxu0 0
        %829 = vmatprep.mubr.bf16.mxu0 0
        %830 = vmatmul.mubr.bf16.gmra.mxu0 %v739
        %v831 = vpop.f32.mrf.mxu0
        %v832 = vadd.f32 %v725, %v831
        %v833 = vpop.f32.mrf.mxu0
        %v834 = vadd.f32 %v725, %v833
        %v835 = vpop.f32.mrf.mxu0
        %v836 = vadd.f32 %v730, %v835
        %v837 = vpop.f32.mrf.mxu0
        %v838 = vadd.f32 %v730, %v837
        %839 = vdwg.mxu0
        %v840 = vxor.u32 %v789, 2147483648
        %v841 = vxor.u32 %v791, 2147483648
        %v842 = vxor.u32 %v832, 2147483648
        %v843 = vxor.u32 %v834, 2147483648
        %v844 = vxor.u32 %v793, 2147483648
        %v845 = vxor.u32 %v795, 2147483648
        %v846 = vxor.u32 %v836, 2147483648
        %v847 = vxor.u32 %v838, 2147483648
        %v848 = vmul.f32 %v840, 1.442695
        %v849 = vpow.pop %v848
        %v850 = vmul.f32 %v841, 1.442695
        %v851 = vpow.pop %v850
        %v852 = vmul.f32 %v842, 1.442695
        %v853 = vpow.pop %v852
        %v854 = vmul.f32 %v843, 1.442695
        %v855 = vpow.pop %v854
        %v856 = vmul.f32 %v844, 1.442695
        %v857 = vpow.pop %v856
        %v858 = vmul.f32 %v845, 1.442695
        %v859 = vpow.pop %v858
        %v860 = vmul.f32 %v846, 1.442695
        %v861 = vpow.pop %v860
        %v862 = vmul.f32 %v847, 1.442695
        %v863 = vpow.pop %v862
        %v864 = vadd.f32 %v849, 1.0
        %v865 = vadd.f32 %v851, 1.0
        %v866 = vadd.f32 %v853, 1.0
        %v867 = vadd.f32 %v855, 1.0
        %v868 = vadd.f32 %v857, 1.0
        %v869 = vadd.f32 %v859, 1.0
        %v870 = vadd.f32 %v861, 1.0
        %v871 = vadd.f32 %v863, 1.0
        %v872 = vrcp.pop %v864
        %v873 = vmul.f32 1.0, %v872
        %v874 = vrcp.pop %v865
        %v875 = vmul.f32 1.0, %v874
        %v876 = vrcp.pop %v866
        %v877 = vmul.f32 1.0, %v876
        %v878 = vrcp.pop %v867
        %v879 = vmul.f32 1.0, %v878
        %v880 = vrcp.pop %v868
        %v881 = vmul.f32 1.0, %v880
        %v882 = vrcp.pop %v869
        %v883 = vmul.f32 1.0, %v882
        %v884 = vrcp.pop %v870
        %v885 = vmul.f32 1.0, %v884
        %v886 = vrcp.pop %v871
        %v887 = vmul.f32 1.0, %v886
        %v888 = vmul.f32 %v789, %v873
        %v889 = vmul.f32 %v791, %v875
        %v890 = vmul.f32 %v832, %v877
        %v891 = vmul.f32 %v834, %v879
        %v892 = vmul.f32 %v793, %v881
        %v893 = vmul.f32 %v795, %v883
        %v894 = vmul.f32 %v836, %v885
        %v895 = vmul.f32 %v838, %v887
        %v896 = vld [vmem:[%s3] sm:$0xff]
        %v897 = vld [vmem:[%s3 + $0x8] sm:$0xff]
        %v898 = vld [vmem:[%s4] sm:$0xff]
        %v899 = vld [vmem:[%s4 + $0x8] sm:$0xff]
        %v900 = vld [vmem:[%s5] sm:$0xf]
        %v901 = vld [vmem:[%s5 + $0x4] sm:$0xf]
        %v902 = vld [vmem:[%s5 + $0x8] sm:$0xf]
        %v903 = vld [vmem:[%s5 + $0xc] sm:$0xf]
        %v904 = vld [vmem:[%s5 + $0x10] sm:$0xf]
        %v905 = vld [vmem:[%s5 + $0x14] sm:$0xf]
        %v906 = vld [vmem:[%s5 + $0x18] sm:$0xf]
        %v907 = vld [vmem:[%s5 + $0x1c] sm:$0xf]
        %v908 = vld [vmem:[%s5 + $0x20] sm:$0xf]
        %v909 = vld [vmem:[%s5 + $0x24] sm:$0xf]
        %v910 = vld [vmem:[%s5 + $0x28] sm:$0xf]
        %v911 = vld [vmem:[%s5 + $0x2c] sm:$0xf]
        %v912 = vld [vmem:[%s5 + $0x30] sm:$0xf]
        %v913 = vld [vmem:[%s5 + $0x34] sm:$0xf]
        %v914 = vld [vmem:[%s5 + $0x38] sm:$0xf]
        %v915 = vld [vmem:[%s5 + $0x3c] sm:$0xf]
        %v916 = vld [vmem:[%s5 + $0x40] sm:$0xf]
        %v917 = vld [vmem:[%s5 + $0x44] sm:$0xf]
        %v918 = vld [vmem:[%s5 + $0x48] sm:$0xf]
        %v919 = vld [vmem:[%s5 + $0x4c] sm:$0xf]
        %v920 = vld [vmem:[%s5 + $0x50] sm:$0xf]
        %v921 = vld [vmem:[%s5 + $0x54] sm:$0xf]
        %v922 = vld [vmem:[%s5 + $0x58] sm:$0xf]
        %v923 = vld [vmem:[%s5 + $0x5c] sm:$0xf]
        %v924 = vld [vmem:[%s5 + $0x60] sm:$0xf]
        %v925 = vld [vmem:[%s5 + $0x64] sm:$0xf]
        %v926 = vld [vmem:[%s5 + $0x68] sm:$0xf]
        %v927 = vld [vmem:[%s5 + $0x6c] sm:$0xf]
        %v928 = vld [vmem:[%s5 + $0x70] sm:$0xf]
        %v929 = vld [vmem:[%s5 + $0x74] sm:$0xf]
        %v930 = vld [vmem:[%s5 + $0x78] sm:$0xf]
        %v931 = vld [vmem:[%s5 + $0x7c] sm:$0xf]
        %v932 = vld [vmem:[%s5 + $0x80] sm:$0xf]
        %v933 = vld [vmem:[%s5 + $0x84] sm:$0xf]
        %v934 = vld [vmem:[%s5 + $0x88] sm:$0xf]
        %v935 = vld [vmem:[%s5 + $0x8c] sm:$0xf]
        %v936 = vld [vmem:[%s5 + $0x90] sm:$0xf]
        %v937 = vld [vmem:[%s5 + $0x94] sm:$0xf]
        %v938 = vld [vmem:[%s5 + $0x98] sm:$0xf]
        %v939 = vld [vmem:[%s5 + $0x9c] sm:$0xf]
        %v940 = vld [vmem:[%s5 + $0xa0] sm:$0xf]
        %v941 = vld [vmem:[%s5 + $0xa4] sm:$0xf]
        %v942 = vld [vmem:[%s5 + $0xa8] sm:$0xf]
        %v943 = vld [vmem:[%s5 + $0xac] sm:$0xf]
        %v944 = vld [vmem:[%s5 + $0xb0] sm:$0xf]
        %v945 = vld [vmem:[%s5 + $0xb4] sm:$0xf]
        %v946 = vld [vmem:[%s5 + $0xb8] sm:$0xf]
        %v947 = vld [vmem:[%s5 + $0xbc] sm:$0xf]
        %v948 = vld [vmem:[%s5 + $0xc0] sm:$0xf]
        %v949 = vld [vmem:[%s5 + $0xc4] sm:$0xf]
        %v950 = vld [vmem:[%s5 + $0xc8] sm:$0xf]
        %v951 = vld [vmem:[%s5 + $0xcc] sm:$0xf]
        %v952 = vld [vmem:[%s5 + $0xd0] sm:$0xf]
        %v953 = vld [vmem:[%s5 + $0xd4] sm:$0xf]
        %v954 = vld [vmem:[%s5 + $0xd8] sm:$0xf]
        %v955 = vld [vmem:[%s5 + $0xdc] sm:$0xf]
        %v956 = vld [vmem:[%s5 + $0xe0] sm:$0xf]
        %v957 = vld [vmem:[%s5 + $0xe4] sm:$0xf]
        %v958 = vld [vmem:[%s5 + $0xe8] sm:$0xf]
        %v959 = vld [vmem:[%s5 + $0xec] sm:$0xf]
        %v960 = vld [vmem:[%s5 + $0xf0] sm:$0xf]
        %v961 = vld [vmem:[%s5 + $0xf4] sm:$0xf]
        %v962 = vld [vmem:[%s5 + $0xf8] sm:$0xf]
        %v963 = vld [vmem:[%s5 + $0xfc] sm:$0xf]
        %v964 = vld [vmem:[%s5 + $0x100] sm:$0xf]
        %v965 = vld [vmem:[%s5 + $0x104] sm:$0xf]
        %v966 = vld [vmem:[%s5 + $0x108] sm:$0xf]
        %v967 = vld [vmem:[%s5 + $0x10c] sm:$0xf]
        %v968 = vld [vmem:[%s5 + $0x110] sm:$0xf]
        %v969 = vld [vmem:[%s5 + $0x114] sm:$0xf]
        %v970 = vld [vmem:[%s5 + $0x118] sm:$0xf]
        %v971 = vld [vmem:[%s5 + $0x11c] sm:$0xf]
        %v972 = vld [vmem:[%s5 + $0x120] sm:$0xf]
        %v973 = vld [vmem:[%s5 + $0x124] sm:$0xf]
        %v974 = vld [vmem:[%s5 + $0x128] sm:$0xf]
        %v975 = vld [vmem:[%s5 + $0x12c] sm:$0xf]
        %v976 = vld [vmem:[%s5 + $0x130] sm:$0xf]
        %v977 = vld [vmem:[%s5 + $0x134] sm:$0xf]
        %v978 = vld [vmem:[%s5 + $0x138] sm:$0xf]
        %v979 = vld [vmem:[%s5 + $0x13c] sm:$0xf]
        %v980 = vld [vmem:[%s5 + $0x140] sm:$0xf]
        %v981 = vld [vmem:[%s5 + $0x144] sm:$0xf]
        %v982 = vld [vmem:[%s5 + $0x148] sm:$0xf]
        %v983 = vld [vmem:[%s5 + $0x14c] sm:$0xf]
        %v984 = vld [vmem:[%s5 + $0x150] sm:$0xf]
        %v985 = vld [vmem:[%s5 + $0x154] sm:$0xf]
        %v986 = vld [vmem:[%s5 + $0x158] sm:$0xf]
        %v987 = vld [vmem:[%s5 + $0x15c] sm:$0xf]
        %v988 = vld [vmem:[%s5 + $0x160] sm:$0xf]
        %v989 = vld [vmem:[%s5 + $0x164] sm:$0xf]
        %v990 = vld [vmem:[%s5 + $0x168] sm:$0xf]
        %v991 = vld [vmem:[%s5 + $0x16c] sm:$0xf]
        %v992 = vld [vmem:[%s5 + $0x170] sm:$0xf]
        %v993 = vld [vmem:[%s5 + $0x174] sm:$0xf]
        %v994 = vld [vmem:[%s5 + $0x178] sm:$0xf]
        %v995 = vld [vmem:[%s5 + $0x17c] sm:$0xf]
        %v996 = vld [vmem:[%s5 + $0x180] sm:$0xf]
        %v997 = vld [vmem:[%s5 + $0x184] sm:$0xf]
        %v998 = vld [vmem:[%s5 + $0x188] sm:$0xf]
        %v999 = vld [vmem:[%s5 + $0x18c] sm:$0xf]
        %v1000 = vld [vmem:[%s5 + $0x190] sm:$0xf]
        %v1001 = vld [vmem:[%s5 + $0x194] sm:$0xf]
        %v1002 = vld [vmem:[%s5 + $0x198] sm:$0xf]
        %v1003 = vld [vmem:[%s5 + $0x19c] sm:$0xf]
        %v1004 = vld [vmem:[%s5 + $0x1a0] sm:$0xf]
        %v1005 = vld [vmem:[%s5 + $0x1a4] sm:$0xf]
        %v1006 = vld [vmem:[%s5 + $0x1a8] sm:$0xf]
        %v1007 = vld [vmem:[%s5 + $0x1ac] sm:$0xf]
        %v1008 = vld [vmem:[%s5 + $0x1b0] sm:$0xf]
        %v1009 = vld [vmem:[%s5 + $0x1b4] sm:$0xf]
        %v1010 = vld [vmem:[%s5 + $0x1b8] sm:$0xf]
        %v1011 = vld [vmem:[%s5 + $0x1bc] sm:$0xf]
        %v1012 = vld [vmem:[%s5 + $0x1c0] sm:$0xf]
        %v1013 = vld [vmem:[%s5 + $0x1c4] sm:$0xf]
        %v1014 = vld [vmem:[%s5 + $0x1c8] sm:$0xf]
        %v1015 = vld [vmem:[%s5 + $0x1cc] sm:$0xf]
        %v1016 = vld [vmem:[%s5 + $0x1d0] sm:$0xf]
        %v1017 = vld [vmem:[%s5 + $0x1d4] sm:$0xf]
        %v1018 = vld [vmem:[%s5 + $0x1d8] sm:$0xf]
        %v1019 = vld [vmem:[%s5 + $0x1dc] sm:$0xf]
        %v1020 = vld [vmem:[%s5 + $0x1e0] sm:$0xf]
        %v1021 = vld [vmem:[%s5 + $0x1e4] sm:$0xf]
        %v1022 = vld [vmem:[%s5 + $0x1e8] sm:$0xf]
        %v1023 = vld [vmem:[%s5 + $0x1ec] sm:$0xf]
        %v1024 = vld [vmem:[%s5 + $0x1f0] sm:$0xf]
        %v1025 = vld [vmem:[%s5 + $0x1f4] sm:$0xf]
        %v1026 = vld [vmem:[%s5 + $0x1f8] sm:$0xf]
        %v1027 = vld [vmem:[%s5 + $0x1fc] sm:$0xf]
        %v1028 = vld [vmem:[%s5 + $0x200] sm:$0xf]
        %v1029 = vld [vmem:[%s5 + $0x204] sm:$0xf]
        %v1030 = vld [vmem:[%s5 + $0x208] sm:$0xf]
        %v1031 = vld [vmem:[%s5 + $0x20c] sm:$0xf]
        %v1032 = vld [vmem:[%s5 + $0x210] sm:$0xf]
        %v1033 = vld [vmem:[%s5 + $0x214] sm:$0xf]
        %v1034 = vld [vmem:[%s5 + $0x218] sm:$0xf]
        %v1035 = vld [vmem:[%s5 + $0x21c] sm:$0xf]
        %v1036 = vld [vmem:[%s5 + $0x220] sm:$0xf]
        %v1037 = vld [vmem:[%s5 + $0x224] sm:$0xf]
        %v1038 = vld [vmem:[%s5 + $0x228] sm:$0xf]
        %v1039 = vld [vmem:[%s5 + $0x22c] sm:$0xf]
        %v1040 = vld [vmem:[%s5 + $0x230] sm:$0xf]
        %v1041 = vld [vmem:[%s5 + $0x234] sm:$0xf]
        %v1042 = vld [vmem:[%s5 + $0x238] sm:$0xf]
        %v1043 = vld [vmem:[%s5 + $0x23c] sm:$0xf]
        %v1044 = vld [vmem:[%s5 + $0x240] sm:$0xf]
        %v1045 = vld [vmem:[%s5 + $0x244] sm:$0xf]
        %v1046 = vld [vmem:[%s5 + $0x248] sm:$0xf]
        %v1047 = vld [vmem:[%s5 + $0x24c] sm:$0xf]
        %v1048 = vld [vmem:[%s5 + $0x250] sm:$0xf]
        %v1049 = vld [vmem:[%s5 + $0x254] sm:$0xf]
        %v1050 = vld [vmem:[%s5 + $0x258] sm:$0xf]
        %v1051 = vld [vmem:[%s5 + $0x25c] sm:$0xf]
        %v1052 = vld [vmem:[%s5 + $0x260] sm:$0xf]
        %v1053 = vld [vmem:[%s5 + $0x264] sm:$0xf]
        %v1054 = vld [vmem:[%s5 + $0x268] sm:$0xf]
        %v1055 = vld [vmem:[%s5 + $0x26c] sm:$0xf]
        %v1056 = vld [vmem:[%s5 + $0x270] sm:$0xf]
        %v1057 = vld [vmem:[%s5 + $0x274] sm:$0xf]
        %v1058 = vld [vmem:[%s5 + $0x278] sm:$0xf]
        %v1059 = vld [vmem:[%s5 + $0x27c] sm:$0xf]
        %v1060 = vld [vmem:[%s5 + $0x280] sm:$0xf]
        %v1061 = vld [vmem:[%s5 + $0x284] sm:$0xf]
        %v1062 = vld [vmem:[%s5 + $0x288] sm:$0xf]
        %v1063 = vld [vmem:[%s5 + $0x28c] sm:$0xf]
        %v1064 = vld [vmem:[%s5 + $0x290] sm:$0xf]
        %v1065 = vld [vmem:[%s5 + $0x294] sm:$0xf]
        %v1066 = vld [vmem:[%s5 + $0x298] sm:$0xf]
        %v1067 = vld [vmem:[%s5 + $0x29c] sm:$0xf]
        %v1068 = vld [vmem:[%s5 + $0x2a0] sm:$0xf]
        %v1069 = vld [vmem:[%s5 + $0x2a4] sm:$0xf]
        %v1070 = vld [vmem:[%s5 + $0x2a8] sm:$0xf]
        %v1071 = vld [vmem:[%s5 + $0x2ac] sm:$0xf]
        %v1072 = vld [vmem:[%s5 + $0x2b0] sm:$0xf]
        %v1073 = vld [vmem:[%s5 + $0x2b4] sm:$0xf]
        %v1074 = vld [vmem:[%s5 + $0x2b8] sm:$0xf]
        %v1075 = vld [vmem:[%s5 + $0x2bc] sm:$0xf]
        %v1076 = vld [vmem:[%s5 + $0x2c0] sm:$0xf]
        %v1077 = vld [vmem:[%s5 + $0x2c4] sm:$0xf]
        %v1078 = vld [vmem:[%s5 + $0x2c8] sm:$0xf]
        %v1079 = vld [vmem:[%s5 + $0x2cc] sm:$0xf]
        %v1080 = vld [vmem:[%s5 + $0x2d0] sm:$0xf]
        %v1081 = vld [vmem:[%s5 + $0x2d4] sm:$0xf]
        %v1082 = vld [vmem:[%s5 + $0x2d8] sm:$0xf]
        %v1083 = vld [vmem:[%s5 + $0x2dc] sm:$0xf]
        %v1084 = vld [vmem:[%s5 + $0x2e0] sm:$0xf]
        %v1085 = vld [vmem:[%s5 + $0x2e4] sm:$0xf]
        %v1086 = vld [vmem:[%s5 + $0x2e8] sm:$0xf]
        %v1087 = vld [vmem:[%s5 + $0x2ec] sm:$0xf]
        %v1088 = vld [vmem:[%s5 + $0x2f0] sm:$0xf]
        %v1089 = vld [vmem:[%s5 + $0x2f4] sm:$0xf]
        %v1090 = vld [vmem:[%s5 + $0x2f8] sm:$0xf]
        %v1091 = vld [vmem:[%s5 + $0x2fc] sm:$0xf]
        %v1092 = vld [vmem:[%s5 + $0x300] sm:$0xf]
        %v1093 = vld [vmem:[%s5 + $0x304] sm:$0xf]
        %v1094 = vld [vmem:[%s5 + $0x308] sm:$0xf]
        %v1095 = vld [vmem:[%s5 + $0x30c] sm:$0xf]
        %v1096 = vld [vmem:[%s5 + $0x310] sm:$0xf]
        %v1097 = vld [vmem:[%s5 + $0x314] sm:$0xf]
        %v1098 = vld [vmem:[%s5 + $0x318] sm:$0xf]
        %v1099 = vld [vmem:[%s5 + $0x31c] sm:$0xf]
        %v1100 = vld [vmem:[%s5 + $0x320] sm:$0xf]
        %v1101 = vld [vmem:[%s5 + $0x324] sm:$0xf]
        %v1102 = vld [vmem:[%s5 + $0x328] sm:$0xf]
        %v1103 = vld [vmem:[%s5 + $0x32c] sm:$0xf]
        %v1104 = vld [vmem:[%s5 + $0x330] sm:$0xf]
        %v1105 = vld [vmem:[%s5 + $0x334] sm:$0xf]
        %v1106 = vld [vmem:[%s5 + $0x338] sm:$0xf]
        %v1107 = vld [vmem:[%s5 + $0x33c] sm:$0xf]
        %v1108 = vld [vmem:[%s5 + $0x340] sm:$0xf]
        %v1109 = vld [vmem:[%s5 + $0x344] sm:$0xf]
        %v1110 = vld [vmem:[%s5 + $0x348] sm:$0xf]
        %v1111 = vld [vmem:[%s5 + $0x34c] sm:$0xf]
        %v1112 = vld [vmem:[%s5 + $0x350] sm:$0xf]
        %v1113 = vld [vmem:[%s5 + $0x354] sm:$0xf]
        %v1114 = vld [vmem:[%s5 + $0x358] sm:$0xf]
        %v1115 = vld [vmem:[%s5 + $0x35c] sm:$0xf]
        %v1116 = vld [vmem:[%s5 + $0x360] sm:$0xf]
        %v1117 = vld [vmem:[%s5 + $0x364] sm:$0xf]
        %v1118 = vld [vmem:[%s5 + $0x368] sm:$0xf]
        %v1119 = vld [vmem:[%s5 + $0x36c] sm:$0xf]
        %v1120 = vld [vmem:[%s5 + $0x370] sm:$0xf]
        %v1121 = vld [vmem:[%s5 + $0x374] sm:$0xf]
        %v1122 = vld [vmem:[%s5 + $0x378] sm:$0xf]
        %v1123 = vld [vmem:[%s5 + $0x37c] sm:$0xf]
        %v1124 = vld [vmem:[%s5 + $0x380] sm:$0xf]
        %v1125 = vld [vmem:[%s5 + $0x384] sm:$0xf]
        %v1126 = vld [vmem:[%s5 + $0x388] sm:$0xf]
        %v1127 = vld [vmem:[%s5 + $0x38c] sm:$0xf]
        %v1128 = vld [vmem:[%s5 + $0x390] sm:$0xf]
        %v1129 = vld [vmem:[%s5 + $0x394] sm:$0xf]
        %v1130 = vld [vmem:[%s5 + $0x398] sm:$0xf]
        %v1131 = vld [vmem:[%s5 + $0x39c] sm:$0xf]
        %v1132 = vld [vmem:[%s5 + $0x3a0] sm:$0xf]
        %v1133 = vld [vmem:[%s5 + $0x3a4] sm:$0xf]
        %v1134 = vld [vmem:[%s5 + $0x3a8] sm:$0xf]
        %v1135 = vld [vmem:[%s5 + $0x3ac] sm:$0xf]
        %v1136 = vld [vmem:[%s5 + $0x3b0] sm:$0xf]
        %v1137 = vld [vmem:[%s5 + $0x3b4] sm:$0xf]
        %v1138 = vld [vmem:[%s5 + $0x3b8] sm:$0xf]
        %v1139 = vld [vmem:[%s5 + $0x3bc] sm:$0xf]
        %v1140 = vld [vmem:[%s5 + $0x3c0] sm:$0xf]
        %v1141 = vld [vmem:[%s5 + $0x3c4] sm:$0xf]
        %v1142 = vld [vmem:[%s5 + $0x3c8] sm:$0xf]
        %v1143 = vld [vmem:[%s5 + $0x3cc] sm:$0xf]
        %v1144 = vld [vmem:[%s5 + $0x3d0] sm:$0xf]
        %v1145 = vld [vmem:[%s5 + $0x3d4] sm:$0xf]
        %v1146 = vld [vmem:[%s5 + $0x3d8] sm:$0xf]
        %v1147 = vld [vmem:[%s5 + $0x3dc] sm:$0xf]
        %v1148 = vld [vmem:[%s5 + $0x3e0] sm:$0xf]
        %v1149 = vld [vmem:[%s5 + $0x3e4] sm:$0xf]
        %v1150 = vld [vmem:[%s5 + $0x3e8] sm:$0xf]
        %v1151 = vld [vmem:[%s5 + $0x3ec] sm:$0xf]
        %v1152 = vld [vmem:[%s5 + $0x3f0] sm:$0xf]
        %v1153 = vld [vmem:[%s5 + $0x3f4] sm:$0xf]
        %v1154 = vld [vmem:[%s5 + $0x3f8] sm:$0xf]
        %v1155 = vld [vmem:[%s5 + $0x3fc] sm:$0xf]
        %v1156 = vld [vmem:[%s5 + $0x400] sm:$0xf]
        %v1157 = vld [vmem:[%s5 + $0x404] sm:$0xf]
        %v1158 = vld [vmem:[%s5 + $0x408] sm:$0xf]
        %v1159 = vld [vmem:[%s5 + $0x40c] sm:$0xf]
        %v1160 = vld [vmem:[%s5 + $0x410] sm:$0xf]
        %v1161 = vld [vmem:[%s5 + $0x414] sm:$0xf]
        %v1162 = vld [vmem:[%s5 + $0x418] sm:$0xf]
        %v1163 = vld [vmem:[%s5 + $0x41c] sm:$0xf]
        %v1164 = vld [vmem:[%s5 + $0x420] sm:$0xf]
        %v1165 = vld [vmem:[%s5 + $0x424] sm:$0xf]
        %v1166 = vld [vmem:[%s5 + $0x428] sm:$0xf]
        %v1167 = vld [vmem:[%s5 + $0x42c] sm:$0xf]
        %v1168 = vld [vmem:[%s5 + $0x430] sm:$0xf]
        %v1169 = vld [vmem:[%s5 + $0x434] sm:$0xf]
        %v1170 = vld [vmem:[%s5 + $0x438] sm:$0xf]
        %v1171 = vld [vmem:[%s5 + $0x43c] sm:$0xf]
        %v1172 = vld [vmem:[%s5 + $0x440] sm:$0xf]
        %v1173 = vld [vmem:[%s5 + $0x444] sm:$0xf]
        %v1174 = vld [vmem:[%s5 + $0x448] sm:$0xf]
        %v1175 = vld [vmem:[%s5 + $0x44c] sm:$0xf]
        %v1176 = vld [vmem:[%s5 + $0x450] sm:$0xf]
        %v1177 = vld [vmem:[%s5 + $0x454] sm:$0xf]
        %v1178 = vld [vmem:[%s5 + $0x458] sm:$0xf]
        %v1179 = vld [vmem:[%s5 + $0x45c] sm:$0xf]
        %v1180 = vld [vmem:[%s5 + $0x460] sm:$0xf]
        %v1181 = vld [vmem:[%s5 + $0x464] sm:$0xf]
        %v1182 = vld [vmem:[%s5 + $0x468] sm:$0xf]
        %v1183 = vld [vmem:[%s5 + $0x46c] sm:$0xf]
        %v1184 = vld [vmem:[%s5 + $0x470] sm:$0xf]
        %v1185 = vld [vmem:[%s5 + $0x474] sm:$0xf]
        %v1186 = vld [vmem:[%s5 + $0x478] sm:$0xf]
        %v1187 = vld [vmem:[%s5 + $0x47c] sm:$0xf]
        %v1188 = vld [vmem:[%s6] sm:$0xff]
        %v1189 = vld [vmem:[%s6 + $0x8] sm:$0xff]
        %v1190 = vld [vmem:[%s7] sm:$0x1]
        %v1191 = vld [vmem:[%s8] sm:$0xff]
        %v1192 = vld [vmem:[%s8 + $0x8] sm:$0xff]
        %v1193 = vld [vmem:[%s9] sm:$0xff]
        %v1194 = vld [vmem:[%s9 + $0x8] sm:$0xff]
        %1196 = vset.pattern.permute.xlu0 0
        %1197 = vperm.xlu0 %1196, %v896
        %v1198 = vpop.permute.xlu0 %1197
        %1201 = vset.pattern.permute.xlu0 0
        %1202 = vperm.xlu0 %1201, %v897
        %v1203 = vpop.permute.xlu0 %1202
        %v1205 = vmul.f32 %v888, %v1198
        %v1206 = vmul.f32 %v889, %v1198
        %v1207 = vmul.f32 %v892, %v1203
        %v1208 = vmul.f32 %v893, %v1203
        %v1209 = vpack.c.bf16 %v1207, %v1205
        %v1210 = vpack.c.bf16 %v1208, %v1206
        %1211 = vset.pattern.permute.xlu0 1
        %1212 = vperm.xlu0 %1211, %v896
        %v1213 = vpop.permute.xlu0 %1212
        %1215 = vset.pattern.permute.xlu0 1
        %1216 = vperm.xlu0 %1215, %v897
        %v1217 = vpop.permute.xlu0 %1216
        %v1219 = vmul.f32 %v888, %v1213
        %v1220 = vmul.f32 %v889, %v1213
        %v1221 = vmul.f32 %v892, %v1217
        %v1222 = vmul.f32 %v893, %v1217
        %v1223 = vpack.c.bf16 %v1221, %v1219
        %v1224 = vpack.c.bf16 %v1222, %v1220
        %1225 = vset.pattern.permute.xlu0 2
        %1226 = vperm.xlu0 %1225, %v896
        %v1227 = vpop.permute.xlu0 %1226
        %1229 = vset.pattern.permute.xlu0 2
        %1230 = vperm.xlu0 %1229, %v897
        %v1231 = vpop.permute.xlu0 %1230
        %v1233 = vmul.f32 %v888, %v1227
        %v1234 = vmul.f32 %v889, %v1227
        %v1235 = vmul.f32 %v892, %v1231
        %v1236 = vmul.f32 %v893, %v1231
        %v1237 = vpack.c.bf16 %v1235, %v1233
        %v1238 = vpack.c.bf16 %v1236, %v1234
        %1239 = vset.pattern.permute.xlu0 3
        %1240 = vperm.xlu0 %1239, %v896
        %v1241 = vpop.permute.xlu0 %1240
        %1243 = vset.pattern.permute.xlu0 3
        %1244 = vperm.xlu0 %1243, %v897
        %v1245 = vpop.permute.xlu0 %1244
        %v1247 = vmul.f32 %v888, %v1241
        %v1248 = vmul.f32 %v889, %v1241
        %v1249 = vmul.f32 %v892, %v1245
        %v1250 = vmul.f32 %v893, %v1245
        %v1251 = vpack.c.bf16 %v1249, %v1247
        %v1252 = vpack.c.bf16 %v1250, %v1248
        %1253 = vset.pattern.permute.xlu0 4
        %1254 = vperm.xlu0 %1253, %v896
        %v1255 = vpop.permute.xlu0 %1254
        %1257 = vset.pattern.permute.xlu0 4
        %1258 = vperm.xlu0 %1257, %v897
        %v1259 = vpop.permute.xlu0 %1258
        %v1261 = vmul.f32 %v888, %v1255
        %v1262 = vmul.f32 %v889, %v1255
        %v1263 = vmul.f32 %v892, %v1259
        %v1264 = vmul.f32 %v893, %v1259
        %v1265 = vpack.c.bf16 %v1263, %v1261
        %v1266 = vpack.c.bf16 %v1264, %v1262
        %1267 = vset.pattern.permute.xlu0 5
        %1268 = vperm.xlu0 %1267, %v896
        %v1269 = vpop.permute.xlu0 %1268
        %1271 = vset.pattern.permute.xlu0 5
        %1272 = vperm.xlu0 %1271, %v897
        %v1273 = vpop.permute.xlu0 %1272
        %v1275 = vmul.f32 %v888, %v1269
        %v1276 = vmul.f32 %v889, %v1269
        %v1277 = vmul.f32 %v892, %v1273
        %v1278 = vmul.f32 %v893, %v1273
        %v1279 = vpack.c.bf16 %v1277, %v1275
        %v1280 = vpack.c.bf16 %v1278, %v1276
        %1281 = vset.pattern.permute.xlu0 6
        %1282 = vperm.xlu0 %1281, %v896
        %v1283 = vpop.permute.xlu0 %1282
        %1285 = vset.pattern.permute.xlu0 6
        %1286 = vperm.xlu0 %1285, %v897
        %v1287 = vpop.permute.xlu0 %1286
        %v1289 = vmul.f32 %v888, %v1283
        %v1290 = vmul.f32 %v889, %v1283
        %v1291 = vmul.f32 %v892, %v1287
        %v1292 = vmul.f32 %v893, %v1287
        %v1293 = vpack.c.bf16 %v1291, %v1289
        %v1294 = vpack.c.bf16 %v1292, %v1290
        %1295 = vset.pattern.permute.xlu0 7
        %1296 = vperm.xlu0 %1295, %v896
        %v1297 = vpop.permute.xlu0 %1296
        %1299 = vset.pattern.permute.xlu0 7
        %1300 = vperm.xlu0 %1299, %v897
        %v1301 = vpop.permute.xlu0 %1300
        %v1303 = vmul.f32 %v888, %v1297
        %v1304 = vmul.f32 %v889, %v1297
        %v1305 = vmul.f32 %v892, %v1301
        %v1306 = vmul.f32 %v893, %v1301
        %v1307 = vpack.c.bf16 %v1305, %v1303
        %v1308 = vpack.c.bf16 %v1306, %v1304
        %1309 = vset.pattern.permute.xlu0 8
        %1310 = vperm.xlu0 %1309, %v896
        %v1311 = vpop.permute.xlu0 %1310
        %1313 = vset.pattern.permute.xlu0 8
        %1314 = vperm.xlu0 %1313, %v897
        %v1315 = vpop.permute.xlu0 %1314
        %v1317 = vmul.f32 %v888, %v1311
        %v1318 = vmul.f32 %v889, %v1311
        %v1319 = vmul.f32 %v892, %v1315
        %v1320 = vmul.f32 %v893, %v1315
        %v1321 = vpack.c.bf16 %v1319, %v1317
        %v1322 = vpack.c.bf16 %v1320, %v1318
        %1324 = vset.pattern.permute.xlu0 0
        %1325 = vperm.xlu0 %1324, %v898
        %v1326 = vpop.permute.xlu0 %1325
        %1329 = vset.pattern.permute.xlu0 0
        %1330 = vperm.xlu0 %1329, %v899
        %v1331 = vpop.permute.xlu0 %1330
        %v1621 = vunpack.c.l.b16 %v900
        %v1622 = vunpack.c.l.b16 %v901
        %v1623 = vunpack.c.l.b16 %v902
        %v1624 = vunpack.c.l.b16 %v903
        %v1625 = vunpack.c.l.b16 %v904
        %v1626 = vunpack.c.l.b16 %v905
        %v1627 = vunpack.c.l.b16 %v906
        %v1628 = vunpack.c.l.b16 %v907
        %v1629 = vunpack.c.l.b16 %v908
        %v1630 = vunpack.c.l.b16 %v909
        %v1631 = vunpack.c.l.b16 %v910
        %v1632 = vunpack.c.l.b16 %v911
        %v1633 = vunpack.c.l.b16 %v912
        %v1634 = vunpack.c.l.b16 %v913
        %v1635 = vunpack.c.l.b16 %v914
        %v1636 = vunpack.c.l.b16 %v915
        %v1637 = vunpack.c.l.b16 %v916
        %v1638 = vunpack.c.l.b16 %v917
        %v1639 = vunpack.c.l.b16 %v918
        %v1640 = vunpack.c.l.b16 %v919
        %v1641 = vunpack.c.l.b16 %v920
        %v1642 = vunpack.c.l.b16 %v921
        %v1643 = vunpack.c.l.b16 %v922
        %v1644 = vunpack.c.l.b16 %v923
        %v1645 = vunpack.c.l.b16 %v924
        %v1646 = vunpack.c.l.b16 %v925
        %v1647 = vunpack.c.l.b16 %v926
        %v1648 = vunpack.c.l.b16 %v927
        %v1649 = vunpack.c.l.b16 %v928
        %v1650 = vunpack.c.l.b16 %v929
        %v1651 = vunpack.c.l.b16 %v930
        %v1652 = vunpack.c.l.b16 %v931
        %v1653 = vunpack.c.l.b16 %v932
        %v1654 = vunpack.c.l.b16 %v933
        %v1655 = vunpack.c.l.b16 %v934
        %v1656 = vunpack.c.l.b16 %v935
        %v1657 = vunpack.c.l.b16 %v936
        %v1658 = vunpack.c.l.b16 %v937
        %v1659 = vunpack.c.l.b16 %v938
        %v1660 = vunpack.c.l.b16 %v939
        %v1661 = vunpack.c.l.b16 %v940
        %v1662 = vunpack.c.l.b16 %v941
        %v1663 = vunpack.c.l.b16 %v942
        %v1664 = vunpack.c.l.b16 %v943
        %v1665 = vunpack.c.l.b16 %v944
        %v1666 = vunpack.c.l.b16 %v945
        %v1667 = vunpack.c.l.b16 %v946
        %v1668 = vunpack.c.l.b16 %v947
        %v1669 = vunpack.c.l.b16 %v948
        %v1670 = vunpack.c.l.b16 %v949
        %v1671 = vunpack.c.l.b16 %v950
        %v1672 = vunpack.c.l.b16 %v951
        %v1673 = vunpack.c.l.b16 %v952
        %v1674 = vunpack.c.l.b16 %v953
        %v1675 = vunpack.c.l.b16 %v954
        %v1676 = vunpack.c.l.b16 %v955
        %v1677 = vunpack.c.l.b16 %v956
        %v1678 = vunpack.c.l.b16 %v957
        %v1679 = vunpack.c.l.b16 %v958
        %v1680 = vunpack.c.l.b16 %v959
        %v1681 = vunpack.c.l.b16 %v960
        %v1682 = vunpack.c.l.b16 %v961
        %v1683 = vunpack.c.l.b16 %v962
        %v1684 = vunpack.c.l.b16 %v963
        %v1685 = vunpack.c.l.b16 %v964
        %v1686 = vunpack.c.l.b16 %v965
        %v1687 = vunpack.c.l.b16 %v966
        %v1688 = vunpack.c.l.b16 %v967
        %v1689 = vunpack.c.l.b16 %v968
        %v1690 = vunpack.c.l.b16 %v969
        %v1691 = vunpack.c.l.b16 %v970
        %v1692 = vunpack.c.l.b16 %v971
        %v1693 = vunpack.c.l.b16 %v972
        %v1694 = vunpack.c.l.b16 %v973
        %v1695 = vunpack.c.l.b16 %v974
        %v1696 = vunpack.c.l.b16 %v975
        %v1697 = vunpack.c.l.b16 %v976
        %v1698 = vunpack.c.l.b16 %v977
        %v1699 = vunpack.c.l.b16 %v978
        %v1700 = vunpack.c.l.b16 %v979
        %v1701 = vunpack.c.l.b16 %v980
        %v1702 = vunpack.c.l.b16 %v981
        %v1703 = vunpack.c.l.b16 %v982
        %v1704 = vunpack.c.l.b16 %v983
        %v1705 = vunpack.c.l.b16 %v984
        %v1706 = vunpack.c.l.b16 %v985
        %v1707 = vunpack.c.l.b16 %v986
        %v1708 = vunpack.c.l.b16 %v987
        %v1709 = vunpack.c.l.b16 %v988
        %v1710 = vunpack.c.l.b16 %v989
        %v1711 = vunpack.c.l.b16 %v990
        %v1712 = vunpack.c.l.b16 %v991
        %v1713 = vunpack.c.l.b16 %v992
        %v1714 = vunpack.c.l.b16 %v993
        %v1715 = vunpack.c.l.b16 %v994
        %v1716 = vunpack.c.l.b16 %v995
        %v1717 = vunpack.c.l.b16 %v996
        %v1718 = vunpack.c.l.b16 %v997
        %v1719 = vunpack.c.l.b16 %v998
        %v1720 = vunpack.c.l.b16 %v999
        %v1721 = vunpack.c.l.b16 %v1000
        %v1722 = vunpack.c.l.b16 %v1001
        %v1723 = vunpack.c.l.b16 %v1002
        %v1724 = vunpack.c.l.b16 %v1003
        %v1725 = vunpack.c.l.b16 %v1004
        %v1726 = vunpack.c.l.b16 %v1005
        %v1727 = vunpack.c.l.b16 %v1006
        %v1728 = vunpack.c.l.b16 %v1007
        %v1729 = vunpack.c.l.b16 %v1008
        %v1730 = vunpack.c.l.b16 %v1009
        %v1731 = vunpack.c.l.b16 %v1010
        %v1732 = vunpack.c.l.b16 %v1011
        %v1733 = vunpack.c.l.b16 %v1012
        %v1734 = vunpack.c.l.b16 %v1013
        %v1735 = vunpack.c.l.b16 %v1014
        %v1736 = vunpack.c.l.b16 %v1015
        %v1737 = vunpack.c.l.b16 %v1016
        %v1738 = vunpack.c.l.b16 %v1017
        %v1739 = vunpack.c.l.b16 %v1018
        %v1740 = vunpack.c.l.b16 %v1019
        %v1741 = vunpack.c.l.b16 %v1020
        %v1742 = vunpack.c.l.b16 %v1021
        %v1743 = vunpack.c.l.b16 %v1022
        %v1744 = vunpack.c.l.b16 %v1023
        %v1745 = vunpack.c.l.b16 %v1024
        %v1746 = vunpack.c.l.b16 %v1025
        %v1747 = vunpack.c.l.b16 %v1026
        %v1748 = vunpack.c.l.b16 %v1027
        %v1749 = vunpack.c.l.b16 %v1028
        %v1750 = vunpack.c.l.b16 %v1029
        %v1751 = vunpack.c.l.b16 %v1030
        %v1752 = vunpack.c.l.b16 %v1031
        %v1753 = vunpack.c.l.b16 %v1032
        %v1754 = vunpack.c.l.b16 %v1033
        %v1755 = vunpack.c.l.b16 %v1034
        %v1756 = vunpack.c.l.b16 %v1035
        %v1757 = vunpack.c.l.b16 %v1036
        %v1758 = vunpack.c.l.b16 %v1037
        %v1759 = vunpack.c.l.b16 %v1038
        %v1760 = vunpack.c.l.b16 %v1039
        %v1761 = vunpack.c.l.b16 %v1040
        %v1762 = vunpack.c.l.b16 %v1041
        %v1763 = vunpack.c.l.b16 %v1042
        %v1764 = vunpack.c.l.b16 %v1043
        %v1765 = vunpack.c.l.b16 %v1044
        %v1766 = vunpack.c.l.b16 %v1045
        %v1767 = vunpack.c.l.b16 %v1046
        %v1768 = vunpack.c.l.b16 %v1047
        %v1769 = vunpack.c.l.b16 %v1048
        %v1770 = vunpack.c.l.b16 %v1049
        %v1771 = vunpack.c.l.b16 %v1050
        %v1772 = vunpack.c.l.b16 %v1051
        %v1773 = vunpack.c.l.b16 %v1052
        %v1774 = vunpack.c.l.b16 %v1053
        %v1775 = vunpack.c.l.b16 %v1054
        %v1776 = vunpack.c.l.b16 %v1055
        %v1777 = vunpack.c.l.b16 %v1056
        %v1778 = vunpack.c.l.b16 %v1057
        %v1779 = vunpack.c.l.b16 %v1058
        %v1780 = vunpack.c.l.b16 %v1059
        %v1781 = vunpack.c.l.b16 %v1060
        %v1782 = vunpack.c.l.b16 %v1061
        %v1783 = vunpack.c.l.b16 %v1062
        %v1784 = vunpack.c.l.b16 %v1063
        %v1785 = vunpack.c.l.b16 %v1064
        %v1786 = vunpack.c.l.b16 %v1065
        %v1787 = vunpack.c.l.b16 %v1066
        %v1788 = vunpack.c.l.b16 %v1067
        %v1789 = vunpack.c.l.b16 %v1068
        %v1790 = vunpack.c.l.b16 %v1069
        %v1791 = vunpack.c.l.b16 %v1070
        %v1792 = vunpack.c.l.b16 %v1071
        %v1793 = vunpack.c.l.b16 %v1072
        %v1794 = vunpack.c.l.b16 %v1073
        %v1795 = vunpack.c.l.b16 %v1074
        %v1796 = vunpack.c.l.b16 %v1075
        %v1797 = vunpack.c.l.b16 %v1076
        %v1798 = vunpack.c.l.b16 %v1077
        %v1799 = vunpack.c.l.b16 %v1078
        %v1800 = vunpack.c.l.b16 %v1079
        %v1801 = vunpack.c.l.b16 %v1080
        %v1802 = vunpack.c.l.b16 %v1081
        %v1803 = vunpack.c.l.b16 %v1082
        %v1804 = vunpack.c.l.b16 %v1083
        %v1805 = vunpack.c.l.b16 %v1084
        %v1806 = vunpack.c.l.b16 %v1085
        %v1807 = vunpack.c.l.b16 %v1086
        %v1808 = vunpack.c.l.b16 %v1087
        %v1809 = vunpack.c.l.b16 %v1088
        %v1810 = vunpack.c.l.b16 %v1089
        %v1811 = vunpack.c.l.b16 %v1090
        %v1812 = vunpack.c.l.b16 %v1091
        %v1813 = vunpack.c.l.b16 %v1092
        %v1814 = vunpack.c.l.b16 %v1093
        %v1815 = vunpack.c.l.b16 %v1094
        %v1816 = vunpack.c.l.b16 %v1095
        %v1817 = vunpack.c.l.b16 %v1096
        %v1818 = vunpack.c.l.b16 %v1097
        %v1819 = vunpack.c.l.b16 %v1098
        %v1820 = vunpack.c.l.b16 %v1099
        %v1821 = vunpack.c.l.b16 %v1100
        %v1822 = vunpack.c.l.b16 %v1101
        %v1823 = vunpack.c.l.b16 %v1102
        %v1824 = vunpack.c.l.b16 %v1103
        %v1825 = vunpack.c.l.b16 %v1104
        %v1826 = vunpack.c.l.b16 %v1105
        %v1827 = vunpack.c.l.b16 %v1106
        %v1828 = vunpack.c.l.b16 %v1107
        %v1829 = vunpack.c.l.b16 %v1108
        %v1830 = vunpack.c.l.b16 %v1109
        %v1831 = vunpack.c.l.b16 %v1110
        %v1832 = vunpack.c.l.b16 %v1111
        %v1833 = vunpack.c.l.b16 %v1112
        %v1834 = vunpack.c.l.b16 %v1113
        %v1835 = vunpack.c.l.b16 %v1114
        %v1836 = vunpack.c.l.b16 %v1115
        %v1837 = vunpack.c.l.b16 %v1116
        %v1838 = vunpack.c.l.b16 %v1117
        %v1839 = vunpack.c.l.b16 %v1118
        %v1840 = vunpack.c.l.b16 %v1119
        %v1841 = vunpack.c.l.b16 %v1120
        %v1842 = vunpack.c.l.b16 %v1121
        %v1843 = vunpack.c.l.b16 %v1122
        %v1844 = vunpack.c.l.b16 %v1123
        %v1845 = vunpack.c.l.b16 %v1124
        %v1846 = vunpack.c.l.b16 %v1125
        %v1847 = vunpack.c.l.b16 %v1126
        %v1848 = vunpack.c.l.b16 %v1127
        %v1849 = vunpack.c.l.b16 %v1128
        %v1850 = vunpack.c.l.b16 %v1129
        %v1851 = vunpack.c.l.b16 %v1130
        %v1852 = vunpack.c.l.b16 %v1131
        %v1853 = vunpack.c.l.b16 %v1132
        %v1854 = vunpack.c.l.b16 %v1133
        %v1855 = vunpack.c.l.b16 %v1134
        %v1856 = vunpack.c.l.b16 %v1135
        %v1857 = vunpack.c.l.b16 %v1136
        %v1858 = vunpack.c.l.b16 %v1137
        %v1859 = vunpack.c.l.b16 %v1138
        %v1860 = vunpack.c.l.b16 %v1139
        %v1861 = vunpack.c.l.b16 %v1140
        %v1862 = vunpack.c.l.b16 %v1141
        %v1863 = vunpack.c.l.b16 %v1142
        %v1864 = vunpack.c.l.b16 %v1143
        %v1865 = vunpack.c.l.b16 %v1144
        %v1866 = vunpack.c.l.b16 %v1145
        %v1867 = vunpack.c.l.b16 %v1146
        %v1868 = vunpack.c.l.b16 %v1147
        %v1869 = vunpack.c.l.b16 %v1148
        %v1870 = vunpack.c.l.b16 %v1149
        %v1871 = vunpack.c.l.b16 %v1150
        %v1872 = vunpack.c.l.b16 %v1151
        %v1873 = vunpack.c.l.b16 %v1152
        %v1874 = vunpack.c.l.b16 %v1153
        %v1875 = vunpack.c.l.b16 %v1154
        %v1876 = vunpack.c.l.b16 %v1155
        %v1877 = vunpack.c.l.b16 %v1156
        %v1878 = vunpack.c.l.b16 %v1157
        %v1879 = vunpack.c.l.b16 %v1158
        %v1880 = vunpack.c.l.b16 %v1159
        %v1881 = vunpack.c.l.b16 %v1160
        %v1882 = vunpack.c.l.b16 %v1161
        %v1883 = vunpack.c.l.b16 %v1162
        %v1884 = vunpack.c.l.b16 %v1163
        %v1885 = vunpack.c.l.b16 %v1164
        %v1886 = vunpack.c.l.b16 %v1165
        %v1887 = vunpack.c.l.b16 %v1166
        %v1888 = vunpack.c.l.b16 %v1167
        %v1889 = vunpack.c.l.b16 %v1168
        %v1890 = vunpack.c.l.b16 %v1169
        %v1891 = vunpack.c.l.b16 %v1170
        %v1892 = vunpack.c.l.b16 %v1171
        %v1893 = vunpack.c.l.b16 %v1172
        %v1894 = vunpack.c.l.b16 %v1173
        %v1895 = vunpack.c.l.b16 %v1174
        %v1896 = vunpack.c.l.b16 %v1175
        %v1897 = vunpack.c.l.b16 %v1176
        %v1898 = vunpack.c.l.b16 %v1177
        %v1899 = vunpack.c.l.b16 %v1178
        %v1900 = vunpack.c.l.b16 %v1179
        %v1901 = vunpack.c.l.b16 %v1180
        %v1902 = vunpack.c.l.b16 %v1181
        %v1903 = vunpack.c.l.b16 %v1182
        %v1904 = vunpack.c.l.b16 %v1183
        %v1905 = vunpack.c.l.b16 %v1184
        %v1906 = vunpack.c.l.b16 %v1185
        %v1907 = vunpack.c.l.b16 %v1186
        %v1908 = vunpack.c.l.b16 %v1187
        %v1909 = vpack.c.b16 %v1622, %v1621
        %v1910 = vpack.c.b16 %v1624, %v1623
        %v1911 = vpack.c.b16 %v1626, %v1625
        %v1912 = vpack.c.b16 %v1628, %v1627
        %v1913 = vpack.c.b16 %v1630, %v1629
        %v1914 = vpack.c.b16 %v1632, %v1631
        %v1915 = vpack.c.b16 %v1634, %v1633
        %v1916 = vpack.c.b16 %v1636, %v1635
        %v1917 = vpack.c.b16 %v1638, %v1637
        %v1918 = vpack.c.b16 %v1640, %v1639
        %v1919 = vpack.c.b16 %v1642, %v1641
        %v1920 = vpack.c.b16 %v1644, %v1643
        %v1921 = vpack.c.b16 %v1646, %v1645
        %v1922 = vpack.c.b16 %v1648, %v1647
        %v1923 = vpack.c.b16 %v1650, %v1649
        %v1924 = vpack.c.b16 %v1652, %v1651
        %v1925 = vpack.c.b16 %v1654, %v1653
        %v1926 = vpack.c.b16 %v1656, %v1655
        %v1927 = vpack.c.b16 %v1658, %v1657
        %v1928 = vpack.c.b16 %v1660, %v1659
        %v1929 = vpack.c.b16 %v1662, %v1661
        %v1930 = vpack.c.b16 %v1664, %v1663
        %v1931 = vpack.c.b16 %v1666, %v1665
        %v1932 = vpack.c.b16 %v1668, %v1667
        %v1933 = vpack.c.b16 %v1670, %v1669
        %v1934 = vpack.c.b16 %v1672, %v1671
        %v1935 = vpack.c.b16 %v1674, %v1673
        %v1936 = vpack.c.b16 %v1676, %v1675
        %v1937 = vpack.c.b16 %v1678, %v1677
        %v1938 = vpack.c.b16 %v1680, %v1679
        %v1939 = vpack.c.b16 %v1682, %v1681
        %v1940 = vpack.c.b16 %v1684, %v1683
        %v1941 = vpack.c.b16 %v1686, %v1685
        %v1942 = vpack.c.b16 %v1688, %v1687
        %v1943 = vpack.c.b16 %v1690, %v1689
        %v1944 = vpack.c.b16 %v1692, %v1691
        %v1945 = vpack.c.b16 %v1694, %v1693
        %v1946 = vpack.c.b16 %v1696, %v1695
        %v1947 = vpack.c.b16 %v1698, %v1697
        %v1948 = vpack.c.b16 %v1700, %v1699
        %v1949 = vpack.c.b16 %v1702, %v1701
        %v1950 = vpack.c.b16 %v1704, %v1703
        %v1951 = vpack.c.b16 %v1706, %v1705
        %v1952 = vpack.c.b16 %v1708, %v1707
        %v1953 = vpack.c.b16 %v1710, %v1709
        %v1954 = vpack.c.b16 %v1712, %v1711
        %v1955 = vpack.c.b16 %v1714, %v1713
        %v1956 = vpack.c.b16 %v1716, %v1715
        %v1957 = vpack.c.b16 %v1718, %v1717
        %v1958 = vpack.c.b16 %v1720, %v1719
        %v1959 = vpack.c.b16 %v1722, %v1721
        %v1960 = vpack.c.b16 %v1724, %v1723
        %v1961 = vpack.c.b16 %v1726, %v1725
        %v1962 = vpack.c.b16 %v1728, %v1727
        %v1963 = vpack.c.b16 %v1730, %v1729
        %v1964 = vpack.c.b16 %v1732, %v1731
        %v1965 = vpack.c.b16 %v1734, %v1733
        %v1966 = vpack.c.b16 %v1736, %v1735
        %v1967 = vpack.c.b16 %v1738, %v1737
        %v1968 = vpack.c.b16 %v1740, %v1739
        %v1969 = vpack.c.b16 %v1742, %v1741
        %v1970 = vpack.c.b16 %v1744, %v1743
        %v1971 = vpack.c.b16 %v1746, %v1745
        %v1972 = vpack.c.b16 %v1748, %v1747
        %v1973 = vpack.c.b16 %v1750, %v1749
        %v1974 = vpack.c.b16 %v1752, %v1751
        %v1975 = vpack.c.b16 %v1754, %v1753
        %v1976 = vpack.c.b16 %v1756, %v1755
        %v1977 = vpack.c.b16 %v1758, %v1757
        %v1978 = vpack.c.b16 %v1760, %v1759
        %v1979 = vpack.c.b16 %v1762, %v1761
        %v1980 = vpack.c.b16 %v1764, %v1763
        %v1981 = vpack.c.b16 %v1766, %v1765
        %v1982 = vpack.c.b16 %v1768, %v1767
        %v1983 = vpack.c.b16 %v1770, %v1769
        %v1984 = vpack.c.b16 %v1772, %v1771
        %v1985 = vpack.c.b16 %v1774, %v1773
        %v1986 = vpack.c.b16 %v1776, %v1775
        %v1987 = vpack.c.b16 %v1778, %v1777
        %v1988 = vpack.c.b16 %v1780, %v1779
        %v1989 = vpack.c.b16 %v1782, %v1781
        %v1990 = vpack.c.b16 %v1784, %v1783
        %v1991 = vpack.c.b16 %v1786, %v1785
        %v1992 = vpack.c.b16 %v1788, %v1787
        %v1993 = vpack.c.b16 %v1790, %v1789
        %v1994 = vpack.c.b16 %v1792, %v1791
        %v1995 = vpack.c.b16 %v1794, %v1793
        %v1996 = vpack.c.b16 %v1796, %v1795
        %v1997 = vpack.c.b16 %v1798, %v1797
        %v1998 = vpack.c.b16 %v1800, %v1799
        %v1999 = vpack.c.b16 %v1802, %v1801
        %v2000 = vpack.c.b16 %v1804, %v1803
        %v2001 = vpack.c.b16 %v1806, %v1805
        %v2002 = vpack.c.b16 %v1808, %v1807
        %v2003 = vpack.c.b16 %v1810, %v1809
        %v2004 = vpack.c.b16 %v1812, %v1811
        %v2005 = vpack.c.b16 %v1814, %v1813
        %v2006 = vpack.c.b16 %v1816, %v1815
        %v2007 = vpack.c.b16 %v1818, %v1817
        %v2008 = vpack.c.b16 %v1820, %v1819
        %v2009 = vpack.c.b16 %v1822, %v1821
        %v2010 = vpack.c.b16 %v1824, %v1823
        %v2011 = vpack.c.b16 %v1826, %v1825
        %v2012 = vpack.c.b16 %v1828, %v1827
        %v2013 = vpack.c.b16 %v1830, %v1829
        %v2014 = vpack.c.b16 %v1832, %v1831
        %v2015 = vpack.c.b16 %v1834, %v1833
        %v2016 = vpack.c.b16 %v1836, %v1835
        %v2017 = vpack.c.b16 %v1838, %v1837
        %v2018 = vpack.c.b16 %v1840, %v1839
        %v2019 = vpack.c.b16 %v1842, %v1841
        %v2020 = vpack.c.b16 %v1844, %v1843
        %v2021 = vpack.c.b16 %v1846, %v1845
        %v2022 = vpack.c.b16 %v1848, %v1847
        %v2023 = vpack.c.b16 %v1850, %v1849
        %v2024 = vpack.c.b16 %v1852, %v1851
        %v2025 = vpack.c.b16 %v1854, %v1853
        %v2026 = vpack.c.b16 %v1856, %v1855
        %v2027 = vpack.c.b16 %v1858, %v1857
        %v2028 = vpack.c.b16 %v1860, %v1859
        %v2029 = vpack.c.b16 %v1862, %v1861
        %v2030 = vpack.c.b16 %v1864, %v1863
        %v2031 = vpack.c.b16 %v1866, %v1865
        %v2032 = vpack.c.b16 %v1868, %v1867
        %v2033 = vpack.c.b16 %v1870, %v1869
        %v2034 = vpack.c.b16 %v1872, %v1871
        %v2035 = vpack.c.b16 %v1874, %v1873
        %v2036 = vpack.c.b16 %v1876, %v1875
        %v2037 = vpack.c.b16 %v1878, %v1877
        %v2038 = vpack.c.b16 %v1880, %v1879
        %v2039 = vpack.c.b16 %v1882, %v1881
        %v2040 = vpack.c.b16 %v1884, %v1883
        %v2041 = vpack.c.b16 %v1886, %v1885
        %v2042 = vpack.c.b16 %v1888, %v1887
        %v2043 = vpack.c.b16 %v1890, %v1889
        %v2044 = vpack.c.b16 %v1892, %v1891
        %v2045 = vpack.c.b16 %v1894, %v1893
        %v2046 = vpack.c.b16 %v1896, %v1895
        %v2047 = vpack.c.b16 %v1898, %v1897
        %v2048 = vpack.c.b16 %v1900, %v1899
        %v2049 = vpack.c.b16 %v1902, %v1901
        %v2050 = vpack.c.b16 %v1904, %v1903
        %v2051 = vpack.c.b16 %v1906, %v1905
        %v2052 = vpack.c.b16 %v1908, %v1907
        %2197 = vmatprep.subr.bf16.mxu0 0
        %2198 = vmatpush1.bf16.msra.mxu0 %v1916
        %2199 = vmatprep.subr.bf16.mxu0 0
        %2200 = vmatpush1.bf16.msra.mxu0 %v1915
        %2201 = vmatprep.subr.bf16.mxu0 0
        %2202 = vmatpush1.bf16.msra.mxu0 %v1914
        %2203 = vmatprep.subr.bf16.mxu0 0
        %2204 = vmatpush1.bf16.msra.mxu0 %v1913
        %2205 = vmatprep.subr.bf16.mxu0 0
        %2206 = vmatpush1.bf16.msra.mxu0 %v1912
        %2207 = vmatprep.subr.bf16.mxu0 0
        %2208 = vmatpush1.bf16.msra.mxu0 %v1911
        %2209 = vmatprep.subr.bf16.mxu0 0
        %2210 = vmatpush1.bf16.msra.mxu0 %v1910
        %2211 = vmatprep.subr.bf16.mxu0 0
        %2212 = vmatpush1.bf16.msra.mxu0 %v1909
        %2213 = vmatprep.subr.bf16.mxu0 0
        %2214 = vmatpush2.bf16.msra.mxu0 %v1924
        %2215 = vmatprep.subr.bf16.mxu0 0
        %2216 = vmatpush2.bf16.msra.mxu0 %v1923
        %2217 = vmatprep.subr.bf16.mxu0 0
        %2218 = vmatpush2.bf16.msra.mxu0 %v1922
        %2219 = vmatprep.subr.bf16.mxu0 0
        %2220 = vmatpush2.bf16.msra.mxu0 %v1921
        %2221 = vmatprep.subr.bf16.mxu0 0
        %2222 = vmatpush2.bf16.msra.mxu0 %v1920
        %2223 = vmatprep.subr.bf16.mxu0 0
        %2224 = vmatpush2.bf16.msra.mxu0 %v1919
        %2225 = vmatprep.subr.bf16.mxu0 0
        %2226 = vmatpush2.bf16.msra.mxu0 %v1918
        %2227 = vmatprep.subr.bf16.mxu0 0
        %2228 = vmatpush2.bf16.msra.mxu0 %v1917
        %2229 = vmatprep.mubr.bf16.mxu0 %v1210
        %2230 = vmatmul.mubr.bf16.gmra.mxu0 %v1209
        %v2231 = vpop.f32.mrf.mxu0
        %v2232 = vadd.f32 %v1326, %v2231
        %v2233 = vpop.f32.mrf.mxu0
        %v2234 = vpop.f32.mrf.mxu0
        %v2235 = vadd.f32 %v1331, %v2234
        %v2236 = vpop.f32.mrf.mxu0
        %2237 = vdwg.mxu0
        %2238 = vmatprep.subr.bf16.mxu0 0
        %2239 = vmatpush1.bf16.msra.mxu0 %v1932
        %2240 = vmatprep.subr.bf16.mxu0 0
        %2241 = vmatpush1.bf16.msra.mxu0 %v1931
        %2242 = vmatprep.subr.bf16.mxu0 0
        %2243 = vmatpush1.bf16.msra.mxu0 %v1930
        %2244 = vmatprep.subr.bf16.mxu0 0
        %2245 = vmatpush1.bf16.msra.mxu0 %v1929
        %2246 = vmatprep.subr.bf16.mxu0 0
        %2247 = vmatpush1.bf16.msra.mxu0 %v1928
        %2248 = vmatprep.subr.bf16.mxu0 0
        %2249 = vmatpush1.bf16.msra.mxu0 %v1927
        %2250 = vmatprep.subr.bf16.mxu0 0
        %2251 = vmatpush1.bf16.msra.mxu0 %v1926
        %2252 = vmatprep.subr.bf16.mxu0 0
        %2253 = vmatpush1.bf16.msra.mxu0 %v1925
        %2254 = vmatprep.subr.bf16.mxu0 0
        %2255 = vmatpush2.bf16.msra.mxu0 %v1940
        %2256 = vmatprep.subr.bf16.mxu0 0
        %2257 = vmatpush2.bf16.msra.mxu0 %v1939
        %2258 = vmatprep.subr.bf16.mxu0 0
        %2259 = vmatpush2.bf16.msra.mxu0 %v1938
        %2260 = vmatprep.subr.bf16.mxu0 0
        %2261 = vmatpush2.bf16.msra.mxu0 %v1937
        %2262 = vmatprep.subr.bf16.mxu0 0
        %2263 = vmatpush2.bf16.msra.mxu0 %v1936
        %2264 = vmatprep.subr.bf16.mxu0 0
        %2265 = vmatpush2.bf16.msra.mxu0 %v1935
        %2266 = vmatprep.subr.bf16.mxu0 0
        %2267 = vmatpush2.bf16.msra.mxu0 %v1934
        %2268 = vmatprep.subr.bf16.mxu0 0
        %2269 = vmatpush2.bf16.msra.mxu0 %v1933
        %2270 = vmatprep.mubr.bf16.mxu0 %v1224
        %2271 = vmatmul.mubr.bf16.gmra.mxu0 %v1223
        %v2272 = vpop.f32.mrf.mxu0
        %v2273 = vadd.f32 %v2232, %v2272
        %v2274 = vpop.f32.mrf.mxu0
        %v2275 = vpop.f32.mrf.mxu0
        %v2276 = vadd.f32 %v2235, %v2275
        %v2277 = vpop.f32.mrf.mxu0
        %2278 = vdwg.mxu0
        %2279 = vmatprep.subr.bf16.mxu0 0
        %2280 = vmatpush1.bf16.msra.mxu0 %v1948
        %2281 = vmatprep.subr.bf16.mxu0 0
        %2282 = vmatpush1.bf16.msra.mxu0 %v1947
        %2283 = vmatprep.subr.bf16.mxu0 0
        %2284 = vmatpush1.bf16.msra.mxu0 %v1946
        %2285 = vmatprep.subr.bf16.mxu0 0
        %2286 = vmatpush1.bf16.msra.mxu0 %v1945
        %2287 = vmatprep.subr.bf16.mxu0 0
        %2288 = vmatpush1.bf16.msra.mxu0 %v1944
        %2289 = vmatprep.subr.bf16.mxu0 0
        %2290 = vmatpush1.bf16.msra.mxu0 %v1943
        %2291 = vmatprep.subr.bf16.mxu0 0
        %2292 = vmatpush1.bf16.msra.mxu0 %v1942
        %2293 = vmatprep.subr.bf16.mxu0 0
        %2294 = vmatpush1.bf16.msra.mxu0 %v1941
        %2295 = vmatprep.subr.bf16.mxu0 0
        %2296 = vmatpush2.bf16.msra.mxu0 %v1956
        %2297 = vmatprep.subr.bf16.mxu0 0
        %2298 = vmatpush2.bf16.msra.mxu0 %v1955
        %2299 = vmatprep.subr.bf16.mxu0 0
        %2300 = vmatpush2.bf16.msra.mxu0 %v1954
        %2301 = vmatprep.subr.bf16.mxu0 0
        %2302 = vmatpush2.bf16.msra.mxu0 %v1953
        %2303 = vmatprep.subr.bf16.mxu0 0
        %2304 = vmatpush2.bf16.msra.mxu0 %v1952
        %2305 = vmatprep.subr.bf16.mxu0 0
        %2306 = vmatpush2.bf16.msra.mxu0 %v1951
        %2307 = vmatprep.subr.bf16.mxu0 0
        %2308 = vmatpush2.bf16.msra.mxu0 %v1950
        %2309 = vmatprep.subr.bf16.mxu0 0
        %2310 = vmatpush2.bf16.msra.mxu0 %v1949
        %2311 = vmatprep.mubr.bf16.mxu0 %v1238
        %2312 = vmatmul.mubr.bf16.gmra.mxu0 %v1237
        %v2313 = vpop.f32.mrf.mxu0
        %v2314 = vadd.f32 %v2273, %v2313
        %v2315 = vpop.f32.mrf.mxu0
        %v2316 = vpop.f32.mrf.mxu0
        %v2317 = vadd.f32 %v2276, %v2316
        %v2318 = vpop.f32.mrf.mxu0
        %2319 = vdwg.mxu0
        %2320 = vmatprep.subr.bf16.mxu0 0
        %2321 = vmatpush1.bf16.msra.mxu0 %v1964
        %2322 = vmatprep.subr.bf16.mxu0 0
        %2323 = vmatpush1.bf16.msra.mxu0 %v1963
        %2324 = vmatprep.subr.bf16.mxu0 0
        %2325 = vmatpush1.bf16.msra.mxu0 %v1962
        %2326 = vmatprep.subr.bf16.mxu0 0
        %2327 = vmatpush1.bf16.msra.mxu0 %v1961
        %2328 = vmatprep.subr.bf16.mxu0 0
        %2329 = vmatpush1.bf16.msra.mxu0 %v1960
        %2330 = vmatprep.subr.bf16.mxu0 0
        %2331 = vmatpush1.bf16.msra.mxu0 %v1959
        %2332 = vmatprep.subr.bf16.mxu0 0
        %2333 = vmatpush1.bf16.msra.mxu0 %v1958
        %2334 = vmatprep.subr.bf16.mxu0 0
        %2335 = vmatpush1.bf16.msra.mxu0 %v1957
        %2336 = vmatprep.subr.bf16.mxu0 0
        %2337 = vmatpush2.bf16.msra.mxu0 %v1972
        %2338 = vmatprep.subr.bf16.mxu0 0
        %2339 = vmatpush2.bf16.msra.mxu0 %v1971
        %2340 = vmatprep.subr.bf16.mxu0 0
        %2341 = vmatpush2.bf16.msra.mxu0 %v1970
        %2342 = vmatprep.subr.bf16.mxu0 0
        %2343 = vmatpush2.bf16.msra.mxu0 %v1969
        %2344 = vmatprep.subr.bf16.mxu0 0
        %2345 = vmatpush2.bf16.msra.mxu0 %v1968
        %2346 = vmatprep.subr.bf16.mxu0 0
        %2347 = vmatpush2.bf16.msra.mxu0 %v1967
        %2348 = vmatprep.subr.bf16.mxu0 0
        %2349 = vmatpush2.bf16.msra.mxu0 %v1966
        %2350 = vmatprep.subr.bf16.mxu0 0
        %2351 = vmatpush2.bf16.msra.mxu0 %v1965
        %2352 = vmatprep.mubr.bf16.mxu0 %v1252
        %2353 = vmatmul.mubr.bf16.gmra.mxu0 %v1251
        %v2354 = vpop.f32.mrf.mxu0
        %v2355 = vadd.f32 %v2314, %v2354
        %v2356 = vpop.f32.mrf.mxu0
        %v2357 = vpop.f32.mrf.mxu0
        %v2358 = vadd.f32 %v2317, %v2357
        %v2359 = vpop.f32.mrf.mxu0
        %2360 = vdwg.mxu0
        %2361 = vmatprep.subr.bf16.mxu0 0
        %2362 = vmatpush1.bf16.msra.mxu0 %v1980
        %2363 = vmatprep.subr.bf16.mxu0 0
        %2364 = vmatpush1.bf16.msra.mxu0 %v1979
        %2365 = vmatprep.subr.bf16.mxu0 0
        %2366 = vmatpush1.bf16.msra.mxu0 %v1978
        %2367 = vmatprep.subr.bf16.mxu0 0
        %2368 = vmatpush1.bf16.msra.mxu0 %v1977
        %2369 = vmatprep.subr.bf16.mxu0 0
        %2370 = vmatpush1.bf16.msra.mxu0 %v1976
        %2371 = vmatprep.subr.bf16.mxu0 0
        %2372 = vmatpush1.bf16.msra.mxu0 %v1975
        %2373 = vmatprep.subr.bf16.mxu0 0
        %2374 = vmatpush1.bf16.msra.mxu0 %v1974
        %2375 = vmatprep.subr.bf16.mxu0 0
        %2376 = vmatpush1.bf16.msra.mxu0 %v1973
        %2377 = vmatprep.subr.bf16.mxu0 0
        %2378 = vmatpush2.bf16.msra.mxu0 %v1988
        %2379 = vmatprep.subr.bf16.mxu0 0
        %2380 = vmatpush2.bf16.msra.mxu0 %v1987
        %2381 = vmatprep.subr.bf16.mxu0 0
        %2382 = vmatpush2.bf16.msra.mxu0 %v1986
        %2383 = vmatprep.subr.bf16.mxu0 0
        %2384 = vmatpush2.bf16.msra.mxu0 %v1985
        %2385 = vmatprep.subr.bf16.mxu0 0
        %2386 = vmatpush2.bf16.msra.mxu0 %v1984
        %2387 = vmatprep.subr.bf16.mxu0 0
        %2388 = vmatpush2.bf16.msra.mxu0 %v1983
        %2389 = vmatprep.subr.bf16.mxu0 0
        %2390 = vmatpush2.bf16.msra.mxu0 %v1982
        %2391 = vmatprep.subr.bf16.mxu0 0
        %2392 = vmatpush2.bf16.msra.mxu0 %v1981
        %2393 = vmatprep.mubr.bf16.mxu0 %v1266
        %2394 = vmatmul.mubr.bf16.gmra.mxu0 %v1265
        %v2395 = vpop.f32.mrf.mxu0
        %v2396 = vadd.f32 %v2355, %v2395
        %v2397 = vpop.f32.mrf.mxu0
        %v2398 = vpop.f32.mrf.mxu0
        %v2399 = vadd.f32 %v2358, %v2398
        %v2400 = vpop.f32.mrf.mxu0
        %2401 = vdwg.mxu0
        %2402 = vmatprep.subr.bf16.mxu0 0
        %2403 = vmatpush1.bf16.msra.mxu0 %v1996
        %2404 = vmatprep.subr.bf16.mxu0 0
        %2405 = vmatpush1.bf16.msra.mxu0 %v1995
        %2406 = vmatprep.subr.bf16.mxu0 0
        %2407 = vmatpush1.bf16.msra.mxu0 %v1994
        %2408 = vmatprep.subr.bf16.mxu0 0
        %2409 = vmatpush1.bf16.msra.mxu0 %v1993
        %2410 = vmatprep.subr.bf16.mxu0 0
        %2411 = vmatpush1.bf16.msra.mxu0 %v1992
        %2412 = vmatprep.subr.bf16.mxu0 0
        %2413 = vmatpush1.bf16.msra.mxu0 %v1991
        %2414 = vmatprep.subr.bf16.mxu0 0
        %2415 = vmatpush1.bf16.msra.mxu0 %v1990
        %2416 = vmatprep.subr.bf16.mxu0 0
        %2417 = vmatpush1.bf16.msra.mxu0 %v1989
        %2418 = vmatprep.subr.bf16.mxu0 0
        %2419 = vmatpush2.bf16.msra.mxu0 %v2004
        %2420 = vmatprep.subr.bf16.mxu0 0
        %2421 = vmatpush2.bf16.msra.mxu0 %v2003
        %2422 = vmatprep.subr.bf16.mxu0 0
        %2423 = vmatpush2.bf16.msra.mxu0 %v2002
        %2424 = vmatprep.subr.bf16.mxu0 0
        %2425 = vmatpush2.bf16.msra.mxu0 %v2001
        %2426 = vmatprep.subr.bf16.mxu0 0
        %2427 = vmatpush2.bf16.msra.mxu0 %v2000
        %2428 = vmatprep.subr.bf16.mxu0 0
        %2429 = vmatpush2.bf16.msra.mxu0 %v1999
        %2430 = vmatprep.subr.bf16.mxu0 0
        %2431 = vmatpush2.bf16.msra.mxu0 %v1998
        %2432 = vmatprep.subr.bf16.mxu0 0
        %2433 = vmatpush2.bf16.msra.mxu0 %v1997
        %2434 = vmatprep.mubr.bf16.mxu0 %v1280
        %2435 = vmatmul.mubr.bf16.gmra.mxu0 %v1279
        %v2436 = vpop.f32.mrf.mxu0
        %v2437 = vadd.f32 %v2396, %v2436
        %v2438 = vpop.f32.mrf.mxu0
        %v2439 = vpop.f32.mrf.mxu0
        %v2440 = vadd.f32 %v2399, %v2439
        %v2441 = vpop.f32.mrf.mxu0
        %2442 = vdwg.mxu0
        %2443 = vmatprep.subr.bf16.mxu0 0
        %2444 = vmatpush1.bf16.msra.mxu0 %v2012
        %2445 = vmatprep.subr.bf16.mxu0 0
        %2446 = vmatpush1.bf16.msra.mxu0 %v2011
        %2447 = vmatprep.subr.bf16.mxu0 0
        %2448 = vmatpush1.bf16.msra.mxu0 %v2010
        %2449 = vmatprep.subr.bf16.mxu0 0
        %2450 = vmatpush1.bf16.msra.mxu0 %v2009
        %2451 = vmatprep.subr.bf16.mxu0 0
        %2452 = vmatpush1.bf16.msra.mxu0 %v2008
        %2453 = vmatprep.subr.bf16.mxu0 0
        %2454 = vmatpush1.bf16.msra.mxu0 %v2007
        %2455 = vmatprep.subr.bf16.mxu0 0
        %2456 = vmatpush1.bf16.msra.mxu0 %v2006
        %2457 = vmatprep.subr.bf16.mxu0 0
        %2458 = vmatpush1.bf16.msra.mxu0 %v2005
        %2459 = vmatprep.subr.bf16.mxu0 0
        %2460 = vmatpush2.bf16.msra.mxu0 %v2020
        %2461 = vmatprep.subr.bf16.mxu0 0
        %2462 = vmatpush2.bf16.msra.mxu0 %v2019
        %2463 = vmatprep.subr.bf16.mxu0 0
        %2464 = vmatpush2.bf16.msra.mxu0 %v2018
        %2465 = vmatprep.subr.bf16.mxu0 0
        %2466 = vmatpush2.bf16.msra.mxu0 %v2017
        %2467 = vmatprep.subr.bf16.mxu0 0
        %2468 = vmatpush2.bf16.msra.mxu0 %v2016
        %2469 = vmatprep.subr.bf16.mxu0 0
        %2470 = vmatpush2.bf16.msra.mxu0 %v2015
        %2471 = vmatprep.subr.bf16.mxu0 0
        %2472 = vmatpush2.bf16.msra.mxu0 %v2014
        %2473 = vmatprep.subr.bf16.mxu0 0
        %2474 = vmatpush2.bf16.msra.mxu0 %v2013
        %2475 = vmatprep.mubr.bf16.mxu0 %v1294
        %2476 = vmatmul.mubr.bf16.gmra.mxu0 %v1293
        %v2477 = vpop.f32.mrf.mxu0
        %v2478 = vadd.f32 %v2437, %v2477
        %v2479 = vpop.f32.mrf.mxu0
        %v2480 = vpop.f32.mrf.mxu0
        %v2481 = vadd.f32 %v2440, %v2480
        %v2482 = vpop.f32.mrf.mxu0
        %2483 = vdwg.mxu0
        %2484 = vmatprep.subr.bf16.mxu0 0
        %2485 = vmatpush1.bf16.msra.mxu0 %v2028
        %2486 = vmatprep.subr.bf16.mxu0 0
        %2487 = vmatpush1.bf16.msra.mxu0 %v2027
        %2488 = vmatprep.subr.bf16.mxu0 0
        %2489 = vmatpush1.bf16.msra.mxu0 %v2026
        %2490 = vmatprep.subr.bf16.mxu0 0
        %2491 = vmatpush1.bf16.msra.mxu0 %v2025
        %2492 = vmatprep.subr.bf16.mxu0 0
        %2493 = vmatpush1.bf16.msra.mxu0 %v2024
        %2494 = vmatprep.subr.bf16.mxu0 0
        %2495 = vmatpush1.bf16.msra.mxu0 %v2023
        %2496 = vmatprep.subr.bf16.mxu0 0
        %2497 = vmatpush1.bf16.msra.mxu0 %v2022
        %2498 = vmatprep.subr.bf16.mxu0 0
        %2499 = vmatpush1.bf16.msra.mxu0 %v2021
        %2500 = vmatprep.subr.bf16.mxu0 0
        %2501 = vmatpush2.bf16.msra.mxu0 %v2036
        %2502 = vmatprep.subr.bf16.mxu0 0
        %2503 = vmatpush2.bf16.msra.mxu0 %v2035
        %2504 = vmatprep.subr.bf16.mxu0 0
        %2505 = vmatpush2.bf16.msra.mxu0 %v2034
        %2506 = vmatprep.subr.bf16.mxu0 0
        %2507 = vmatpush2.bf16.msra.mxu0 %v2033
        %2508 = vmatprep.subr.bf16.mxu0 0
        %2509 = vmatpush2.bf16.msra.mxu0 %v2032
        %2510 = vmatprep.subr.bf16.mxu0 0
        %2511 = vmatpush2.bf16.msra.mxu0 %v2031
        %2512 = vmatprep.subr.bf16.mxu0 0
        %2513 = vmatpush2.bf16.msra.mxu0 %v2030
        %2514 = vmatprep.subr.bf16.mxu0 0
        %2515 = vmatpush2.bf16.msra.mxu0 %v2029
        %2516 = vmatprep.mubr.bf16.mxu0 %v1308
        %2517 = vmatmul.mubr.bf16.gmra.mxu0 %v1307
        %v2518 = vpop.f32.mrf.mxu0
        %v2519 = vadd.f32 %v2478, %v2518
        %v2520 = vpop.f32.mrf.mxu0
        %v2521 = vpop.f32.mrf.mxu0
        %v2522 = vadd.f32 %v2481, %v2521
        %v2523 = vpop.f32.mrf.mxu0
        %2524 = vdwg.mxu0
        %2525 = vmatprep.subr.bf16.mxu0 0
        %2526 = vmatpush1.bf16.msra.mxu0 %v2044
        %2527 = vmatprep.subr.bf16.mxu0 0
        %2528 = vmatpush1.bf16.msra.mxu0 %v2043
        %2529 = vmatprep.subr.bf16.mxu0 0
        %2530 = vmatpush1.bf16.msra.mxu0 %v2042
        %2531 = vmatprep.subr.bf16.mxu0 0
        %2532 = vmatpush1.bf16.msra.mxu0 %v2041
        %2533 = vmatprep.subr.bf16.mxu0 0
        %2534 = vmatpush1.bf16.msra.mxu0 %v2040
        %2535 = vmatprep.subr.bf16.mxu0 0
        %2536 = vmatpush1.bf16.msra.mxu0 %v2039
        %2537 = vmatprep.subr.bf16.mxu0 0
        %2538 = vmatpush1.bf16.msra.mxu0 %v2038
        %2539 = vmatprep.subr.bf16.mxu0 0
        %2540 = vmatpush1.bf16.msra.mxu0 %v2037
        %2541 = vmatprep.subr.bf16.mxu0 0
        %2542 = vmatpush2.bf16.msra.mxu0 %v2052
        %2543 = vmatprep.subr.bf16.mxu0 0
        %2544 = vmatpush2.bf16.msra.mxu0 %v2051
        %2545 = vmatprep.subr.bf16.mxu0 0
        %2546 = vmatpush2.bf16.msra.mxu0 %v2050
        %2547 = vmatprep.subr.bf16.mxu0 0
        %2548 = vmatpush2.bf16.msra.mxu0 %v2049
        %2549 = vmatprep.subr.bf16.mxu0 0
        %2550 = vmatpush2.bf16.msra.mxu0 %v2048
        %2551 = vmatprep.subr.bf16.mxu0 0
        %2552 = vmatpush2.bf16.msra.mxu0 %v2047
        %2553 = vmatprep.subr.bf16.mxu0 0
        %2554 = vmatpush2.bf16.msra.mxu0 %v2046
        %2555 = vmatprep.subr.bf16.mxu0 0
        %2556 = vmatpush2.bf16.msra.mxu0 %v2045
        %2557 = vmatprep.mubr.bf16.mxu0 %v1322
        %2558 = vmatmul.mubr.bf16.gmra.mxu0 %v1321
        %v2559 = vpop.f32.mrf.mxu0
        %v2560 = vadd.f32 %v2519, %v2559
        %v2561 = vpop.f32.mrf.mxu0
        %v2562 = vpop.f32.mrf.mxu0
        %v2563 = vadd.f32 %v2522, %v2562
        %v2564 = vpop.f32.mrf.mxu0
        %2565 = vdwg.mxu0
        %v2566 = vxor.u32 %v2560, 2147483648
        %v2567 = vxor.u32 %v2563, 2147483648
        %v2568 = vmul.f32 %v2566, 1.442695
        %v2569 = vpow.pop %v2568
        %v2570 = vmul.f32 %v2567, 1.442695
        %v2571 = vpow.pop %v2570
        %v2572 = vadd.f32 %v2569, 1.0
        %v2573 = vadd.f32 %v2571, 1.0
        %v2574 = vrcp.pop %v2572
        %v2575 = vmul.f32 1.0, %v2574
        %v2576 = vrcp.pop %v2573
        %v2577 = vmul.f32 1.0, %v2576
        %v2578 = vmul.f32 %v2560, %v2575
        %v2579 = vmul.f32 %v2563, %v2577
        %vm2580 = vcmask 523264
        %v2581 = vsel %vm2580, %v2578, 0.0
        %2582 = vadd.xlane.f32.xlu0 %v2581
        %v2583 = vpop.xlane.xlu0 %2582
        %v2584 = vsel %vm2580, %v2579, 0.0
        %2585 = vadd.xlane.f32.xlu0 %v2584
        %v2586 = vpop.xlane.xlu0 %2585
        %v2587 = vrcp.pop 64.0
        %v2588 = vmul.f32 %v2583, %v2587
        %v2589 = vmul.f32 %v2586, %v2587
        %v2590 = vmul.f32 %v1188, %v2588
        %v2591 = vmul.f32 %v1189, %v2589
        %vm2592 = vcmask 15360
        %v2593 = vsel %vm2592, %v2590, 0.0
        %v2594 = vsel %vm2592, %v2591, 0.0
        %v2595 = vadd.f32 %v2593, %v2594
        %v2596 = vrot.slane %v2595, 4
        %v2597 = vadd.f32 %v2595, %v2596
        %v2598 = vrot.slane %v2597, 2
        %v2599 = vadd.f32 %v2597, %v2598
        %v2600 = vrot.slane %v2599, 1
        %v2601 = vadd.f32 %v2599, %v2600
        %v2602 = vadd.f32 %v2601, %v1190
        %v2603 = vxor.u32 %v2602, 2147483648
        %v2604 = vmul.f32 %v2603, 1.442695
        %v2605 = vpow.pop %v2604
        %v2606 = vadd.f32 %v2605, 1.0
        %v2607 = vrcp.pop %v2606
        %v2608 = vmul.f32 1.0, %v2607
        %v2609 = vmul.f32 %v2602, %v2608
        %v2610 = vlaneseq
        %v2611 = vshrl.u32 %v2610, 7
        %v2612 = vsub.s32 0, %v2611
        %v2613 = vrot.slane %v2609, %v2612
        %v2614 = vmul.f32 %v1191, %v2613
        %v2615 = vmul.f32 %v1192, %v2613
        %v2616 = vsel %vm2592, %v2614, 0.0
        %2617 = vadd.xlane.f32.xlu0 %v2616
        %v2618 = vpop.xlane.xlu0 %2617
        %v2619 = vsel %vm2592, %v2615, 0.0
        %2620 = vadd.xlane.f32.xlu0 %v2619
        %v2621 = vpop.xlane.xlu0 %2620
        %v2622 = vadd.f32 %v2618, %v1193
        %v2623 = vadd.f32 %v2621, %v1194
        %v2624 = vxor.u32 %v2622, 2147483648
        %v2625 = vxor.u32 %v2623, 2147483648
        %v2626 = vmul.f32 %v2624, 1.442695
        %v2627 = vpow.pop %v2626
        %v2628 = vmul.f32 %v2625, 1.442695
        %v2629 = vpow.pop %v2628
        %v2630 = vadd.f32 %v2627, 1.0
        %v2631 = vadd.f32 %v2629, 1.0
        %v2632 = vrcp.pop %v2630
        %v2633 = vmul.f32 1.0, %v2632
        %v2634 = vrcp.pop %v2631
        %v2635 = vmul.f32 1.0, %v2634
        %2637 = vset.pattern.permute.xlu0 0
        %2638 = vperm.xlu0 %2637, %v2633
        %v2639 = vpop.permute.xlu0 %2638
        %2642 = vset.pattern.permute.xlu0 0
        %2643 = vperm.xlu0 %2642, %v2635
        %v2644 = vpop.permute.xlu0 %2643
        %v2646 = vmul.f32 %v2578, %v2639
        %v2647 = vmul.f32 %v2579, %v2644
        %v2648 = vmul.f32 %v890, %v1198
        %v2649 = vmul.f32 %v891, %v1198
        %v2650 = vmul.f32 %v894, %v1203
        %v2651 = vmul.f32 %v895, %v1203
        %v2652 = vpack.c.bf16 %v2650, %v2648
        %v2653 = vpack.c.bf16 %v2651, %v2649
        %v2654 = vmul.f32 %v890, %v1213
        %v2655 = vmul.f32 %v891, %v1213
        %v2656 = vmul.f32 %v894, %v1217
        %v2657 = vmul.f32 %v895, %v1217
        %v2658 = vpack.c.bf16 %v2656, %v2654
        %v2659 = vpack.c.bf16 %v2657, %v2655
        %v2660 = vmul.f32 %v890, %v1227
        %v2661 = vmul.f32 %v891, %v1227
        %v2662 = vmul.f32 %v894, %v1231
        %v2663 = vmul.f32 %v895, %v1231
        %v2664 = vpack.c.bf16 %v2662, %v2660
        %v2665 = vpack.c.bf16 %v2663, %v2661
        %v2666 = vmul.f32 %v890, %v1241
        %v2667 = vmul.f32 %v891, %v1241
        %v2668 = vmul.f32 %v894, %v1245
        %v2669 = vmul.f32 %v895, %v1245
        %v2670 = vpack.c.bf16 %v2668, %v2666
        %v2671 = vpack.c.bf16 %v2669, %v2667
        %v2672 = vmul.f32 %v890, %v1255
        %v2673 = vmul.f32 %v891, %v1255
        %v2674 = vmul.f32 %v894, %v1259
        %v2675 = vmul.f32 %v895, %v1259
        %v2676 = vpack.c.bf16 %v2674, %v2672
        %v2677 = vpack.c.bf16 %v2675, %v2673
        %v2678 = vmul.f32 %v890, %v1269
        %v2679 = vmul.f32 %v891, %v1269
        %v2680 = vmul.f32 %v894, %v1273
        %v2681 = vmul.f32 %v895, %v1273
        %v2682 = vpack.c.bf16 %v2680, %v2678
        %v2683 = vpack.c.bf16 %v2681, %v2679
        %v2684 = vmul.f32 %v890, %v1283
        %v2685 = vmul.f32 %v891, %v1283
        %v2686 = vmul.f32 %v894, %v1287
        %v2687 = vmul.f32 %v895, %v1287
        %v2688 = vpack.c.bf16 %v2686, %v2684
        %v2689 = vpack.c.bf16 %v2687, %v2685
        %v2690 = vmul.f32 %v890, %v1297
        %v2691 = vmul.f32 %v891, %v1297
        %v2692 = vmul.f32 %v894, %v1301
        %v2693 = vmul.f32 %v895, %v1301
        %v2694 = vpack.c.bf16 %v2692, %v2690
        %v2695 = vpack.c.bf16 %v2693, %v2691
        %v2696 = vmul.f32 %v890, %v1311
        %v2697 = vmul.f32 %v891, %v1311
        %v2698 = vmul.f32 %v894, %v1315
        %v2699 = vmul.f32 %v895, %v1315
        %v2700 = vpack.c.bf16 %v2698, %v2696
        %v2701 = vpack.c.bf16 %v2699, %v2697
        %2702 = vmatprep.subr.bf16.mxu0 0
        %2703 = vmatpush1.bf16.msra.mxu0 %v1916
        %2704 = vmatprep.subr.bf16.mxu0 0
        %2705 = vmatpush1.bf16.msra.mxu0 %v1915
        %2706 = vmatprep.subr.bf16.mxu0 0
        %2707 = vmatpush1.bf16.msra.mxu0 %v1914
        %2708 = vmatprep.subr.bf16.mxu0 0
        %2709 = vmatpush1.bf16.msra.mxu0 %v1913
        %2710 = vmatprep.subr.bf16.mxu0 0
        %2711 = vmatpush1.bf16.msra.mxu0 %v1912
        %2712 = vmatprep.subr.bf16.mxu0 0
        %2713 = vmatpush1.bf16.msra.mxu0 %v1911
        %2714 = vmatprep.subr.bf16.mxu0 0
        %2715 = vmatpush1.bf16.msra.mxu0 %v1910
        %2716 = vmatprep.subr.bf16.mxu0 0
        %2717 = vmatpush1.bf16.msra.mxu0 %v1909
        %2718 = vmatprep.subr.bf16.mxu0 0
        %2719 = vmatpush2.bf16.msra.mxu0 %v1924
        %2720 = vmatprep.subr.bf16.mxu0 0
        %2721 = vmatpush2.bf16.msra.mxu0 %v1923
        %2722 = vmatprep.subr.bf16.mxu0 0
        %2723 = vmatpush2.bf16.msra.mxu0 %v1922
        %2724 = vmatprep.subr.bf16.mxu0 0
        %2725 = vmatpush2.bf16.msra.mxu0 %v1921
        %2726 = vmatprep.subr.bf16.mxu0 0
        %2727 = vmatpush2.bf16.msra.mxu0 %v1920
        %2728 = vmatprep.subr.bf16.mxu0 0
        %2729 = vmatpush2.bf16.msra.mxu0 %v1919
        %2730 = vmatprep.subr.bf16.mxu0 0
        %2731 = vmatpush2.bf16.msra.mxu0 %v1918
        %2732 = vmatprep.subr.bf16.mxu0 0
        %2733 = vmatpush2.bf16.msra.mxu0 %v1917
        %2734 = vmatprep.mubr.bf16.mxu0 %v2653
        %2735 = vmatmul.mubr.bf16.gmra.mxu0 %v2652
        %v2736 = vpop.f32.mrf.mxu0
        %v2737 = vadd.f32 %v1326, %v2736
        %v2738 = vpop.f32.mrf.mxu0
        %v2739 = vpop.f32.mrf.mxu0
        %v2740 = vadd.f32 %v1331, %v2739
        %v2741 = vpop.f32.mrf.mxu0
        %2742 = vdwg.mxu0
        %2743 = vmatprep.subr.bf16.mxu0 0
        %2744 = vmatpush1.bf16.msra.mxu0 %v1932
        %2745 = vmatprep.subr.bf16.mxu0 0
        %2746 = vmatpush1.bf16.msra.mxu0 %v1931
        %2747 = vmatprep.subr.bf16.mxu0 0
        %2748 = vmatpush1.bf16.msra.mxu0 %v1930
        %2749 = vmatprep.subr.bf16.mxu0 0
        %2750 = vmatpush1.bf16.msra.mxu0 %v1929
        %2751 = vmatprep.subr.bf16.mxu0 0
        %2752 = vmatpush1.bf16.msra.mxu0 %v1928
        %2753 = vmatprep.subr.bf16.mxu0 0
        %2754 = vmatpush1.bf16.msra.mxu0 %v1927
        %2755 = vmatprep.subr.bf16.mxu0 0
        %2756 = vmatpush1.bf16.msra.mxu0 %v1926
        %2757 = vmatprep.subr.bf16.mxu0 0
        %2758 = vmatpush1.bf16.msra.mxu0 %v1925
        %2759 = vmatprep.subr.bf16.mxu0 0
        %2760 = vmatpush2.bf16.msra.mxu0 %v1940
        %2761 = vmatprep.subr.bf16.mxu0 0
        %2762 = vmatpush2.bf16.msra.mxu0 %v1939
        %2763 = vmatprep.subr.bf16.mxu0 0
        %2764 = vmatpush2.bf16.msra.mxu0 %v1938
        %2765 = vmatprep.subr.bf16.mxu0 0
        %2766 = vmatpush2.bf16.msra.mxu0 %v1937
        %2767 = vmatprep.subr.bf16.mxu0 0
        %2768 = vmatpush2.bf16.msra.mxu0 %v1936
        %2769 = vmatprep.subr.bf16.mxu0 0
        %2770 = vmatpush2.bf16.msra.mxu0 %v1935
        %2771 = vmatprep.subr.bf16.mxu0 0
        %2772 = vmatpush2.bf16.msra.mxu0 %v1934
        %2773 = vmatprep.subr.bf16.mxu0 0
        %2774 = vmatpush2.bf16.msra.mxu0 %v1933
        %2775 = vmatprep.mubr.bf16.mxu0 %v2659
        %2776 = vmatmul.mubr.bf16.gmra.mxu0 %v2658
        %v2777 = vpop.f32.mrf.mxu0
        %v2778 = vadd.f32 %v2737, %v2777
        %v2779 = vpop.f32.mrf.mxu0
        %v2780 = vpop.f32.mrf.mxu0
        %v2781 = vadd.f32 %v2740, %v2780
        %v2782 = vpop.f32.mrf.mxu0
        %2783 = vdwg.mxu0
        %2784 = vmatprep.subr.bf16.mxu0 0
        %2785 = vmatpush1.bf16.msra.mxu0 %v1948
        %2786 = vmatprep.subr.bf16.mxu0 0
        %2787 = vmatpush1.bf16.msra.mxu0 %v1947
        %2788 = vmatprep.subr.bf16.mxu0 0
        %2789 = vmatpush1.bf16.msra.mxu0 %v1946
        %2790 = vmatprep.subr.bf16.mxu0 0
        %2791 = vmatpush1.bf16.msra.mxu0 %v1945
        %2792 = vmatprep.subr.bf16.mxu0 0
        %2793 = vmatpush1.bf16.msra.mxu0 %v1944
        %2794 = vmatprep.subr.bf16.mxu0 0
        %2795 = vmatpush1.bf16.msra.mxu0 %v1943
        %2796 = vmatprep.subr.bf16.mxu0 0
        %2797 = vmatpush1.bf16.msra.mxu0 %v1942
        %2798 = vmatprep.subr.bf16.mxu0 0
        %2799 = vmatpush1.bf16.msra.mxu0 %v1941
        %2800 = vmatprep.subr.bf16.mxu0 0
        %2801 = vmatpush2.bf16.msra.mxu0 %v1956
        %2802 = vmatprep.subr.bf16.mxu0 0
        %2803 = vmatpush2.bf16.msra.mxu0 %v1955
        %2804 = vmatprep.subr.bf16.mxu0 0
        %2805 = vmatpush2.bf16.msra.mxu0 %v1954
        %2806 = vmatprep.subr.bf16.mxu0 0
        %2807 = vmatpush2.bf16.msra.mxu0 %v1953
        %2808 = vmatprep.subr.bf16.mxu0 0
        %2809 = vmatpush2.bf16.msra.mxu0 %v1952
        %2810 = vmatprep.subr.bf16.mxu0 0
        %2811 = vmatpush2.bf16.msra.mxu0 %v1951
        %2812 = vmatprep.subr.bf16.mxu0 0
        %2813 = vmatpush2.bf16.msra.mxu0 %v1950
        %2814 = vmatprep.subr.bf16.mxu0 0
        %2815 = vmatpush2.bf16.msra.mxu0 %v1949
        %2816 = vmatprep.mubr.bf16.mxu0 %v2665
        %2817 = vmatmul.mubr.bf16.gmra.mxu0 %v2664
        %v2818 = vpop.f32.mrf.mxu0
        %v2819 = vadd.f32 %v2778, %v2818
        %v2820 = vpop.f32.mrf.mxu0
        %v2821 = vpop.f32.mrf.mxu0
        %v2822 = vadd.f32 %v2781, %v2821
        %v2823 = vpop.f32.mrf.mxu0
        %2824 = vdwg.mxu0
        %2825 = vmatprep.subr.bf16.mxu0 0
        %2826 = vmatpush1.bf16.msra.mxu0 %v1964
        %2827 = vmatprep.subr.bf16.mxu0 0
        %2828 = vmatpush1.bf16.msra.mxu0 %v1963
        %2829 = vmatprep.subr.bf16.mxu0 0
        %2830 = vmatpush1.bf16.msra.mxu0 %v1962
        %2831 = vmatprep.subr.bf16.mxu0 0
        %2832 = vmatpush1.bf16.msra.mxu0 %v1961
        %2833 = vmatprep.subr.bf16.mxu0 0
        %2834 = vmatpush1.bf16.msra.mxu0 %v1960
        %2835 = vmatprep.subr.bf16.mxu0 0
        %2836 = vmatpush1.bf16.msra.mxu0 %v1959
        %2837 = vmatprep.subr.bf16.mxu0 0
        %2838 = vmatpush1.bf16.msra.mxu0 %v1958
        %2839 = vmatprep.subr.bf16.mxu0 0
        %2840 = vmatpush1.bf16.msra.mxu0 %v1957
        %2841 = vmatprep.subr.bf16.mxu0 0
        %2842 = vmatpush2.bf16.msra.mxu0 %v1972
        %2843 = vmatprep.subr.bf16.mxu0 0
        %2844 = vmatpush2.bf16.msra.mxu0 %v1971
        %2845 = vmatprep.subr.bf16.mxu0 0
        %2846 = vmatpush2.bf16.msra.mxu0 %v1970
        %2847 = vmatprep.subr.bf16.mxu0 0
        %2848 = vmatpush2.bf16.msra.mxu0 %v1969
        %2849 = vmatprep.subr.bf16.mxu0 0
        %2850 = vmatpush2.bf16.msra.mxu0 %v1968
        %2851 = vmatprep.subr.bf16.mxu0 0
        %2852 = vmatpush2.bf16.msra.mxu0 %v1967
        %2853 = vmatprep.subr.bf16.mxu0 0
        %2854 = vmatpush2.bf16.msra.mxu0 %v1966
        %2855 = vmatprep.subr.bf16.mxu0 0
        %2856 = vmatpush2.bf16.msra.mxu0 %v1965
        %2857 = vmatprep.mubr.bf16.mxu0 %v2671
        %2858 = vmatmul.mubr.bf16.gmra.mxu0 %v2670
        %v2859 = vpop.f32.mrf.mxu0
        %v2860 = vadd.f32 %v2819, %v2859
        %v2861 = vpop.f32.mrf.mxu0
        %v2862 = vpop.f32.mrf.mxu0
        %v2863 = vadd.f32 %v2822, %v2862
        %v2864 = vpop.f32.mrf.mxu0
        %2865 = vdwg.mxu0
        %2866 = vmatprep.subr.bf16.mxu0 0
        %2867 = vmatpush1.bf16.msra.mxu0 %v1980
        %2868 = vmatprep.subr.bf16.mxu0 0
        %2869 = vmatpush1.bf16.msra.mxu0 %v1979
        %2870 = vmatprep.subr.bf16.mxu0 0
        %2871 = vmatpush1.bf16.msra.mxu0 %v1978
        %2872 = vmatprep.subr.bf16.mxu0 0
        %2873 = vmatpush1.bf16.msra.mxu0 %v1977
        %2874 = vmatprep.subr.bf16.mxu0 0
        %2875 = vmatpush1.bf16.msra.mxu0 %v1976
        %2876 = vmatprep.subr.bf16.mxu0 0
        %2877 = vmatpush1.bf16.msra.mxu0 %v1975
        %2878 = vmatprep.subr.bf16.mxu0 0
        %2879 = vmatpush1.bf16.msra.mxu0 %v1974
        %2880 = vmatprep.subr.bf16.mxu0 0
        %2881 = vmatpush1.bf16.msra.mxu0 %v1973
        %2882 = vmatprep.subr.bf16.mxu0 0
        %2883 = vmatpush2.bf16.msra.mxu0 %v1988
        %2884 = vmatprep.subr.bf16.mxu0 0
        %2885 = vmatpush2.bf16.msra.mxu0 %v1987
        %2886 = vmatprep.subr.bf16.mxu0 0
        %2887 = vmatpush2.bf16.msra.mxu0 %v1986
        %2888 = vmatprep.subr.bf16.mxu0 0
        %2889 = vmatpush2.bf16.msra.mxu0 %v1985
        %2890 = vmatprep.subr.bf16.mxu0 0
        %2891 = vmatpush2.bf16.msra.mxu0 %v1984
        %2892 = vmatprep.subr.bf16.mxu0 0
        %2893 = vmatpush2.bf16.msra.mxu0 %v1983
        %2894 = vmatprep.subr.bf16.mxu0 0
        %2895 = vmatpush2.bf16.msra.mxu0 %v1982
        %2896 = vmatprep.subr.bf16.mxu0 0
        %2897 = vmatpush2.bf16.msra.mxu0 %v1981
        %2898 = vmatprep.mubr.bf16.mxu0 %v2677
        %2899 = vmatmul.mubr.bf16.gmra.mxu0 %v2676
        %v2900 = vpop.f32.mrf.mxu0
        %v2901 = vadd.f32 %v2860, %v2900
        %v2902 = vpop.f32.mrf.mxu0
        %v2903 = vpop.f32.mrf.mxu0
        %v2904 = vadd.f32 %v2863, %v2903
        %v2905 = vpop.f32.mrf.mxu0
        %2906 = vdwg.mxu0
        %2907 = vmatprep.subr.bf16.mxu0 0
        %2908 = vmatpush1.bf16.msra.mxu0 %v1996
        %2909 = vmatprep.subr.bf16.mxu0 0
        %2910 = vmatpush1.bf16.msra.mxu0 %v1995
        %2911 = vmatprep.subr.bf16.mxu0 0
        %2912 = vmatpush1.bf16.msra.mxu0 %v1994
        %2913 = vmatprep.subr.bf16.mxu0 0
        %2914 = vmatpush1.bf16.msra.mxu0 %v1993
        %2915 = vmatprep.subr.bf16.mxu0 0
        %2916 = vmatpush1.bf16.msra.mxu0 %v1992
        %2917 = vmatprep.subr.bf16.mxu0 0
        %2918 = vmatpush1.bf16.msra.mxu0 %v1991
        %2919 = vmatprep.subr.bf16.mxu0 0
        %2920 = vmatpush1.bf16.msra.mxu0 %v1990
        %2921 = vmatprep.subr.bf16.mxu0 0
        %2922 = vmatpush1.bf16.msra.mxu0 %v1989
        %2923 = vmatprep.subr.bf16.mxu0 0
        %2924 = vmatpush2.bf16.msra.mxu0 %v2004
        %2925 = vmatprep.subr.bf16.mxu0 0
        %2926 = vmatpush2.bf16.msra.mxu0 %v2003
        %2927 = vmatprep.subr.bf16.mxu0 0
        %2928 = vmatpush2.bf16.msra.mxu0 %v2002
        %2929 = vmatprep.subr.bf16.mxu0 0
        %2930 = vmatpush2.bf16.msra.mxu0 %v2001
        %2931 = vmatprep.subr.bf16.mxu0 0
        %2932 = vmatpush2.bf16.msra.mxu0 %v2000
        %2933 = vmatprep.subr.bf16.mxu0 0
        %2934 = vmatpush2.bf16.msra.mxu0 %v1999
        %2935 = vmatprep.subr.bf16.mxu0 0
        %2936 = vmatpush2.bf16.msra.mxu0 %v1998
        %2937 = vmatprep.subr.bf16.mxu0 0
        %2938 = vmatpush2.bf16.msra.mxu0 %v1997
        %2939 = vmatprep.mubr.bf16.mxu0 %v2683
        %2940 = vmatmul.mubr.bf16.gmra.mxu0 %v2682
        %v2941 = vpop.f32.mrf.mxu0
        %v2942 = vadd.f32 %v2901, %v2941
        %v2943 = vpop.f32.mrf.mxu0
        %v2944 = vpop.f32.mrf.mxu0
        %v2945 = vadd.f32 %v2904, %v2944
        %v2946 = vpop.f32.mrf.mxu0
        %2947 = vdwg.mxu0
        %2948 = vmatprep.subr.bf16.mxu0 0
        %2949 = vmatpush1.bf16.msra.mxu0 %v2012
        %2950 = vmatprep.subr.bf16.mxu0 0
        %2951 = vmatpush1.bf16.msra.mxu0 %v2011
        %2952 = vmatprep.subr.bf16.mxu0 0
        %2953 = vmatpush1.bf16.msra.mxu0 %v2010
        %2954 = vmatprep.subr.bf16.mxu0 0
        %2955 = vmatpush1.bf16.msra.mxu0 %v2009
        %2956 = vmatprep.subr.bf16.mxu0 0
        %2957 = vmatpush1.bf16.msra.mxu0 %v2008
        %2958 = vmatprep.subr.bf16.mxu0 0
        %2959 = vmatpush1.bf16.msra.mxu0 %v2007
        %2960 = vmatprep.subr.bf16.mxu0 0
        %2961 = vmatpush1.bf16.msra.mxu0 %v2006
        %2962 = vmatprep.subr.bf16.mxu0 0
        %2963 = vmatpush1.bf16.msra.mxu0 %v2005
        %2964 = vmatprep.subr.bf16.mxu0 0
        %2965 = vmatpush2.bf16.msra.mxu0 %v2020
        %2966 = vmatprep.subr.bf16.mxu0 0
        %2967 = vmatpush2.bf16.msra.mxu0 %v2019
        %2968 = vmatprep.subr.bf16.mxu0 0
        %2969 = vmatpush2.bf16.msra.mxu0 %v2018
        %2970 = vmatprep.subr.bf16.mxu0 0
        %2971 = vmatpush2.bf16.msra.mxu0 %v2017
        %2972 = vmatprep.subr.bf16.mxu0 0
        %2973 = vmatpush2.bf16.msra.mxu0 %v2016
        %2974 = vmatprep.subr.bf16.mxu0 0
        %2975 = vmatpush2.bf16.msra.mxu0 %v2015
        %2976 = vmatprep.subr.bf16.mxu0 0
        %2977 = vmatpush2.bf16.msra.mxu0 %v2014
        %2978 = vmatprep.subr.bf16.mxu0 0
        %2979 = vmatpush2.bf16.msra.mxu0 %v2013
        %2980 = vmatprep.mubr.bf16.mxu0 %v2689
        %2981 = vmatmul.mubr.bf16.gmra.mxu0 %v2688
        %v2982 = vpop.f32.mrf.mxu0
        %v2983 = vadd.f32 %v2942, %v2982
        %v2984 = vpop.f32.mrf.mxu0
        %v2985 = vpop.f32.mrf.mxu0
        %v2986 = vadd.f32 %v2945, %v2985
        %v2987 = vpop.f32.mrf.mxu0
        %2988 = vdwg.mxu0
        %2989 = vmatprep.subr.bf16.mxu0 0
        %2990 = vmatpush1.bf16.msra.mxu0 %v2028
        %2991 = vmatprep.subr.bf16.mxu0 0
        %2992 = vmatpush1.bf16.msra.mxu0 %v2027
        %2993 = vmatprep.subr.bf16.mxu0 0
        %2994 = vmatpush1.bf16.msra.mxu0 %v2026
        %2995 = vmatprep.subr.bf16.mxu0 0
        %2996 = vmatpush1.bf16.msra.mxu0 %v2025
        %2997 = vmatprep.subr.bf16.mxu0 0
        %2998 = vmatpush1.bf16.msra.mxu0 %v2024
        %2999 = vmatprep.subr.bf16.mxu0 0
        %3000 = vmatpush1.bf16.msra.mxu0 %v2023
        %3001 = vmatprep.subr.bf16.mxu0 0
        %3002 = vmatpush1.bf16.msra.mxu0 %v2022
        %3003 = vmatprep.subr.bf16.mxu0 0
        %3004 = vmatpush1.bf16.msra.mxu0 %v2021
        %3005 = vmatprep.subr.bf16.mxu0 0
        %3006 = vmatpush2.bf16.msra.mxu0 %v2036
        %3007 = vmatprep.subr.bf16.mxu0 0
        %3008 = vmatpush2.bf16.msra.mxu0 %v2035
        %3009 = vmatprep.subr.bf16.mxu0 0
        %3010 = vmatpush2.bf16.msra.mxu0 %v2034
        %3011 = vmatprep.subr.bf16.mxu0 0
        %3012 = vmatpush2.bf16.msra.mxu0 %v2033
        %3013 = vmatprep.subr.bf16.mxu0 0
        %3014 = vmatpush2.bf16.msra.mxu0 %v2032
        %3015 = vmatprep.subr.bf16.mxu0 0
        %3016 = vmatpush2.bf16.msra.mxu0 %v2031
        %3017 = vmatprep.subr.bf16.mxu0 0
        %3018 = vmatpush2.bf16.msra.mxu0 %v2030
        %3019 = vmatprep.subr.bf16.mxu0 0
        %3020 = vmatpush2.bf16.msra.mxu0 %v2029
        %3021 = vmatprep.mubr.bf16.mxu0 %v2695
        %3022 = vmatmul.mubr.bf16.gmra.mxu0 %v2694
        %v3023 = vpop.f32.mrf.mxu0
        %v3024 = vadd.f32 %v2983, %v3023
        %v3025 = vpop.f32.mrf.mxu0
        %v3026 = vpop.f32.mrf.mxu0
        %v3027 = vadd.f32 %v2986, %v3026
        %v3028 = vpop.f32.mrf.mxu0
        %3029 = vdwg.mxu0
        %3030 = vmatprep.subr.bf16.mxu0 0
        %3031 = vmatpush1.bf16.msra.mxu0 %v2044
        %3032 = vmatprep.subr.bf16.mxu0 0
        %3033 = vmatpush1.bf16.msra.mxu0 %v2043
        %3034 = vmatprep.subr.bf16.mxu0 0
        %3035 = vmatpush1.bf16.msra.mxu0 %v2042
        %3036 = vmatprep.subr.bf16.mxu0 0
        %3037 = vmatpush1.bf16.msra.mxu0 %v2041
        %3038 = vmatprep.subr.bf16.mxu0 0
        %3039 = vmatpush1.bf16.msra.mxu0 %v2040
        %3040 = vmatprep.subr.bf16.mxu0 0
        %3041 = vmatpush1.bf16.msra.mxu0 %v2039
        %3042 = vmatprep.subr.bf16.mxu0 0
        %3043 = vmatpush1.bf16.msra.mxu0 %v2038
        %3044 = vmatprep.subr.bf16.mxu0 0
        %3045 = vmatpush1.bf16.msra.mxu0 %v2037
        %3046 = vmatprep.subr.bf16.mxu0 0
        %3047 = vmatpush2.bf16.msra.mxu0 %v2052
        %3048 = vmatprep.subr.bf16.mxu0 0
        %3049 = vmatpush2.bf16.msra.mxu0 %v2051
        %3050 = vmatprep.subr.bf16.mxu0 0
        %3051 = vmatpush2.bf16.msra.mxu0 %v2050
        %3052 = vmatprep.subr.bf16.mxu0 0
        %3053 = vmatpush2.bf16.msra.mxu0 %v2049
        %3054 = vmatprep.subr.bf16.mxu0 0
        %3055 = vmatpush2.bf16.msra.mxu0 %v2048
        %3056 = vmatprep.subr.bf16.mxu0 0
        %3057 = vmatpush2.bf16.msra.mxu0 %v2047
        %3058 = vmatprep.subr.bf16.mxu0 0
        %3059 = vmatpush2.bf16.msra.mxu0 %v2046
        %3060 = vmatprep.subr.bf16.mxu0 0
        %3061 = vmatpush2.bf16.msra.mxu0 %v2045
        %3062 = vmatprep.mubr.bf16.mxu0 %v2701
        %3063 = vmatmul.mubr.bf16.gmra.mxu0 %v2700
        %v3064 = vpop.f32.mrf.mxu0
        %v3065 = vadd.f32 %v3024, %v3064
        %v3066 = vpop.f32.mrf.mxu0
        %v3067 = vpop.f32.mrf.mxu0
        %v3068 = vadd.f32 %v3027, %v3067
        %v3069 = vpop.f32.mrf.mxu0
        %3070 = vdwg.mxu0
        %v3071 = vxor.u32 %v3065, 2147483648
        %v3072 = vxor.u32 %v3068, 2147483648
        %v3073 = vmul.f32 %v3071, 1.442695
        %v3074 = vpow.pop %v3073
        %v3075 = vmul.f32 %v3072, 1.442695
        %v3076 = vpow.pop %v3075
        %v3077 = vadd.f32 %v3074, 1.0
        %v3078 = vadd.f32 %v3076, 1.0
        %v3079 = vrcp.pop %v3077
        %v3080 = vmul.f32 1.0, %v3079
        %v3081 = vrcp.pop %v3078
        %v3082 = vmul.f32 1.0, %v3081
        %v3083 = vmul.f32 %v3065, %v3080
        %v3084 = vmul.f32 %v3068, %v3082
        %v3085 = vsel %vm2580, %v3083, 0.0
        %3086 = vadd.xlane.f32.xlu0 %v3085
        %v3087 = vpop.xlane.xlu0 %3086
        %v3088 = vsel %vm2580, %v3084, 0.0
        %3089 = vadd.xlane.f32.xlu0 %v3088
        %v3090 = vpop.xlane.xlu0 %3089
        %v3091 = vmul.f32 %v3087, %v2587
        %v3092 = vmul.f32 %v3090, %v2587
        %v3093 = vmul.f32 %v1188, %v3091
        %v3094 = vmul.f32 %v1189, %v3092
        %v3095 = vsel %vm2592, %v3093, 0.0
        %v3096 = vsel %vm2592, %v3094, 0.0
        %v3097 = vadd.f32 %v3095, %v3096
        %v3098 = vrot.slane %v3097, 4
        %v3099 = vadd.f32 %v3097, %v3098
        %v3100 = vrot.slane %v3099, 2
        %v3101 = vadd.f32 %v3099, %v3100
        %v3102 = vrot.slane %v3101, 1
        %v3103 = vadd.f32 %v3101, %v3102
        %v3104 = vadd.f32 %v3103, %v1190
        %v3105 = vxor.u32 %v3104, 2147483648
        %v3106 = vmul.f32 %v3105, 1.442695
        %v3107 = vpow.pop %v3106
        %v3108 = vadd.f32 %v3107, 1.0
        %v3109 = vrcp.pop %v3108
        %v3110 = vmul.f32 1.0, %v3109
        %v3111 = vmul.f32 %v3104, %v3110
        %v3112 = vlaneseq
        %v3113 = vshrl.u32 %v3112, 7
        %v3114 = vsub.s32 0, %v3113
        %v3115 = vrot.slane %v3111, %v3114
        %v3116 = vmul.f32 %v1191, %v3115
        %v3117 = vmul.f32 %v1192, %v3115
        %v3118 = vsel %vm2592, %v3116, 0.0
        %3119 = vadd.xlane.f32.xlu0 %v3118
        %v3120 = vpop.xlane.xlu0 %3119
        %v3121 = vsel %vm2592, %v3117, 0.0
        %3122 = vadd.xlane.f32.xlu0 %v3121
        %v3123 = vpop.xlane.xlu0 %3122
        %v3124 = vadd.f32 %v3120, %v1193
        %v3125 = vadd.f32 %v3123, %v1194
        %v3126 = vxor.u32 %v3124, 2147483648
        %v3127 = vxor.u32 %v3125, 2147483648
        %v3128 = vmul.f32 %v3126, 1.442695
        %v3129 = vpow.pop %v3128
        %v3130 = vmul.f32 %v3127, 1.442695
        %v3131 = vpow.pop %v3130
        %v3132 = vadd.f32 %v3129, 1.0
        %v3133 = vadd.f32 %v3131, 1.0
        %v3134 = vrcp.pop %v3132
        %v3135 = vmul.f32 1.0, %v3134
        %v3136 = vrcp.pop %v3133
        %v3137 = vmul.f32 1.0, %v3136
        %3139 = vset.pattern.permute.xlu0 0
        %3140 = vperm.xlu0 %3139, %v3135
        %v3141 = vpop.permute.xlu0 %3140
        %3144 = vset.pattern.permute.xlu0 0
        %3145 = vperm.xlu0 %3144, %v3137
        %v3146 = vpop.permute.xlu0 %3145
        %v3148 = vmul.f32 %v3083, %v3141
        %v3149 = vmul.f32 %v3084, %v3146
        %3152 = vrot.lane.b32.xlu0 %v3148, 64
        %v3153 = vpop.permute.xlu0 %3152
        %3154 = vrot.lane.b32.xlu0 %v3149, 64
        %v3155 = vpop.permute.xlu0 %3154
        %v3158 = vsel %vm2580, %v2646, %v3153
        %v3159 = vsel %vm2580, %v2647, %v3155
        %v3160 = vld [vmem:[%s10] sm:$0xf]
        %v3161 = vld [vmem:[%s10 + $0x4] sm:$0xf]
        %v3162 = vpack.c.bf16 %v3159, %v3158
        %v3163 = vld [vmem:[%s11] sm:$0xff]
        %v3164 = vld [vmem:[%s11 + $0x8] sm:$0xff]
        %3166 = vset.pattern.permute.xlu0 0
        %3167 = vperm.xlu0 %3166, %v3163
        %v3168 = vpop.permute.xlu0 %3167
        %3171 = vset.pattern.permute.xlu0 0
        %3172 = vperm.xlu0 %3171, %v3164
        %v3173 = vpop.permute.xlu0 %3172
        %v3177 = vunpack.c.l.b16 %v3160
        %v3178 = vunpack.c.l.b16 %v3161
        %v3179 = vpack.c.b16 %v3178, %v3177
        %vm3180 = vcmask 130048
        %v3182 = vsel %vm3180, %v3179, 0
        %3184 = vmatprep.subr.bf16.mxu0 0
        %3185 = vmatpush1.bf16.msra.mxu0 0
        %3186 = vmatprep.subr.bf16.mxu0 0
        %3187 = vmatpush1.bf16.msra.mxu0 0
        %3188 = vmatprep.subr.bf16.mxu0 0
        %3189 = vmatpush1.bf16.msra.mxu0 0
        %3190 = vmatprep.subr.bf16.mxu0 0
        %3191 = vmatpush1.bf16.msra.mxu0 0
        %3192 = vmatprep.subr.bf16.mxu0 0
        %3193 = vmatpush1.bf16.msra.mxu0 0
        %3194 = vmatprep.subr.bf16.mxu0 0
        %3195 = vmatpush1.bf16.msra.mxu0 0
        %3196 = vmatprep.subr.bf16.mxu0 0
        %3197 = vmatpush1.bf16.msra.mxu0 0
        %3198 = vmatprep.subr.bf16.mxu0 0
        %3199 = vmatpush1.bf16.msra.mxu0 %v3162
        %3200 = vmatprep.subr.bf16.mxu0 0
        %3201 = vmatpush2.bf16.msra.mxu0 0
        %3202 = vmatprep.subr.bf16.mxu0 0
        %3203 = vmatpush2.bf16.msra.mxu0 0
        %3204 = vmatprep.subr.bf16.mxu0 0
        %3205 = vmatpush2.bf16.msra.mxu0 0
        %3206 = vmatprep.subr.bf16.mxu0 0
        %3207 = vmatpush2.bf16.msra.mxu0 0
        %3208 = vmatprep.subr.bf16.mxu0 0
        %3209 = vmatpush2.bf16.msra.mxu0 0
        %3210 = vmatprep.subr.bf16.mxu0 0
        %3211 = vmatpush2.bf16.msra.mxu0 0
        %3212 = vmatprep.subr.bf16.mxu0 0
        %3213 = vmatpush2.bf16.msra.mxu0 0
        %3214 = vmatprep.subr.bf16.mxu0 0
        %3215 = vmatpush2.bf16.msra.mxu0 0
        %3216 = vmatprep.mubr.bf16.mxu0 0
        %3217 = vmatmul.mubr.bf16.gmra.mxu0 %v3182
        %v3218 = vpop.f32.mrf.mxu0
        %v3219 = vadd.f32 %v3168, %v3218
        %v3220 = vpop.f32.mrf.mxu0
        %v3221 = vpop.f32.mrf.mxu0
        %v3222 = vadd.f32 %v3173, %v3221
        %v3223 = vpop.f32.mrf.mxu0
        %3224 = vdwg.mxu0
        %v3225 = vld [vmem:[%s12] sm:$0xf]
        %v3226 = vld [vmem:[%s12 + $0x4] sm:$0xf]
        %v3227 = vld [vmem:[%s12 + $0x8] sm:$0xf]
        %v3228 = vld [vmem:[%s12 + $0xc] sm:$0xf]
        %v3229 = vpack.c.bf16 %v3222, %v3219
        %v3230 = vld [vmem:[%s13] sm:$0xff]
        %v3231 = vld [vmem:[%s13 + $0x8] sm:$0xff]
        %v3232 = vld [vmem:[%s13 + $0x10] sm:$0xff]
        %v3233 = vld [vmem:[%s13 + $0x18] sm:$0xff]
        %3235 = vset.pattern.permute.xlu0 0
        %3236 = vperm.xlu0 %3235, %v3230
        %v3237 = vpop.permute.xlu0 %3236
        %3240 = vset.pattern.permute.xlu0 0
        %3241 = vperm.xlu0 %3240, %v3231
        %v3242 = vpop.permute.xlu0 %3241
        %3245 = vset.pattern.permute.xlu0 0
        %3246 = vperm.xlu0 %3245, %v3232
        %v3247 = vpop.permute.xlu0 %3246
        %3250 = vset.pattern.permute.xlu0 0
        %3251 = vperm.xlu0 %3250, %v3233
        %v3252 = vpop.permute.xlu0 %3251
        %v3258 = vunpack.c.l.b16 %v3225
        %v3259 = vunpack.c.l.b16 %v3226
        %v3260 = vunpack.c.l.b16 %v3227
        %v3261 = vunpack.c.l.b16 %v3228
        %v3262 = vpack.c.b16 %v3259, %v3258
        %v3263 = vpack.c.b16 %v3261, %v3260
        %v3265 = vsel %vm3180, %v3262, 0
        %v3268 = vsel %vm3180, %v3263, 0
        %3270 = vmatprep.subr.bf16.mxu0 0
        %3271 = vmatpush1.bf16.msra.mxu0 0
        %3272 = vmatprep.subr.bf16.mxu0 0
        %3273 = vmatpush1.bf16.msra.mxu0 0
        %3274 = vmatprep.subr.bf16.mxu0 0
        %3275 = vmatpush1.bf16.msra.mxu0 0
        %3276 = vmatprep.subr.bf16.mxu0 0
        %3277 = vmatpush1.bf16.msra.mxu0 0
        %3278 = vmatprep.subr.bf16.mxu0 0
        %3279 = vmatpush1.bf16.msra.mxu0 0
        %3280 = vmatprep.subr.bf16.mxu0 0
        %3281 = vmatpush1.bf16.msra.mxu0 0
        %3282 = vmatprep.subr.bf16.mxu0 0
        %3283 = vmatpush1.bf16.msra.mxu0 0
        %3284 = vmatprep.subr.bf16.mxu0 0
        %3285 = vmatpush1.bf16.msra.mxu0 %v3229
        %3286 = vmatprep.subr.bf16.mxu0 0
        %3287 = vmatpush2.bf16.msra.mxu0 0
        %3288 = vmatprep.subr.bf16.mxu0 0
        %3289 = vmatpush2.bf16.msra.mxu0 0
        %3290 = vmatprep.subr.bf16.mxu0 0
        %3291 = vmatpush2.bf16.msra.mxu0 0
        %3292 = vmatprep.subr.bf16.mxu0 0
        %3293 = vmatpush2.bf16.msra.mxu0 0
        %3294 = vmatprep.subr.bf16.mxu0 0
        %3295 = vmatpush2.bf16.msra.mxu0 0
        %3296 = vmatprep.subr.bf16.mxu0 0
        %3297 = vmatpush2.bf16.msra.mxu0 0
        %3298 = vmatprep.subr.bf16.mxu0 0
        %3299 = vmatpush2.bf16.msra.mxu0 0
        %3300 = vmatprep.subr.bf16.mxu0 0
        %3301 = vmatpush2.bf16.msra.mxu0 0
        %3302 = vmatprep.mubr.bf16.mxu0 0
        %3303 = vmatmul.mubr.bf16.gmra.mxu0 %v3265
        %v3304 = vpop.f32.mrf.mxu0
        %v3305 = vadd.f32 %v3237, %v3304
        %v3306 = vpop.f32.mrf.mxu0
        %v3307 = vpop.f32.mrf.mxu0
        %v3308 = vadd.f32 %v3242, %v3307
        %v3309 = vpop.f32.mrf.mxu0
        %3310 = vmatprep.mubr.bf16.mxu0 0
        %3311 = vmatmul.mubr.bf16.gmra.mxu0 %v3268
        %v3312 = vpop.f32.mrf.mxu0
        %v3313 = vadd.f32 %v3247, %v3312
        %v3314 = vpop.f32.mrf.mxu0
        %v3315 = vpop.f32.mrf.mxu0
        %v3316 = vadd.f32 %v3252, %v3315
        %v3317 = vpop.f32.mrf.mxu0
        %3318 = vdwg.mxu0
        %v3319 = vxor.u32 %v3305, 2147483648
        %v3320 = vxor.u32 %v3308, 2147483648
        %v3321 = vxor.u32 %v3313, 2147483648
        %v3322 = vxor.u32 %v3316, 2147483648
        %v3323 = vmul.f32 %v3319, 1.442695
        %v3324 = vpow.pop %v3323
        %v3325 = vmul.f32 %v3320, 1.442695
        %v3326 = vpow.pop %v3325
        %v3327 = vmul.f32 %v3321, 1.442695
        %v3328 = vpow.pop %v3327
        %v3329 = vmul.f32 %v3322, 1.442695
        %v3330 = vpow.pop %v3329
        %v3331 = vadd.f32 %v3324, 1.0
        %v3332 = vadd.f32 %v3326, 1.0
        %v3333 = vadd.f32 %v3328, 1.0
        %v3334 = vadd.f32 %v3330, 1.0
        %v3335 = vrcp.pop %v3331
        %v3336 = vmul.f32 1.0, %v3335
        %v3337 = vrcp.pop %v3332
        %v3338 = vmul.f32 1.0, %v3337
        %v3339 = vrcp.pop %v3333
        %v3340 = vmul.f32 1.0, %v3339
        %v3341 = vrcp.pop %v3334
        %v3342 = vmul.f32 1.0, %v3341
        %v3343 = vmul.f32 %v3305, %v3336
        %v3344 = vmul.f32 %v3308, %v3338
        %v3345 = vmul.f32 %v3313, %v3340
        %v3346 = vmul.f32 %v3316, %v3342
        %v3347 = vld [vmem:[%s14] sm:$0xff]
        %v3348 = vld [vmem:[%s14 + $0x8] sm:$0xff]
        %v3349 = vld [vmem:[%s14 + $0x10] sm:$0xff]
        %v3350 = vld [vmem:[%s14 + $0x18] sm:$0xff]
        %v3351 = vld [vmem:[%s15] sm:$0xff]
        %v3352 = vld [vmem:[%s15 + $0x8] sm:$0xff]
        %v3353 = vld [vmem:[%s15 + $0x10] sm:$0xff]
        %v3354 = vld [vmem:[%s15 + $0x18] sm:$0xff]
        %v3355 = vld [vmem:[%s16] sm:$0xf]
        %v3356 = vld [vmem:[%s16 + $0x4] sm:$0xf]
        %v3357 = vld [vmem:[%s16 + $0x8] sm:$0xf]
        %v3358 = vld [vmem:[%s16 + $0xc] sm:$0xf]
        %v3359 = vld [vmem:[%s16 + $0x10] sm:$0xf]
        %v3360 = vld [vmem:[%s16 + $0x14] sm:$0xf]
        %v3361 = vld [vmem:[%s16 + $0x18] sm:$0xf]
        %v3362 = vld [vmem:[%s16 + $0x1c] sm:$0xf]
        %v3363 = vld [vmem:[%s16 + $0x20] sm:$0xf]
        %v3364 = vld [vmem:[%s16 + $0x24] sm:$0xf]
        %v3365 = vld [vmem:[%s16 + $0x28] sm:$0xf]
        %v3366 = vld [vmem:[%s16 + $0x2c] sm:$0xf]
        %v3367 = vld [vmem:[%s16 + $0x30] sm:$0xf]
        %v3368 = vld [vmem:[%s16 + $0x34] sm:$0xf]
        %v3369 = vld [vmem:[%s16 + $0x38] sm:$0xf]
        %v3370 = vld [vmem:[%s16 + $0x3c] sm:$0xf]
        %v3371 = vld [vmem:[%s16 + $0x40] sm:$0xf]
        %v3372 = vld [vmem:[%s16 + $0x44] sm:$0xf]
        %v3373 = vld [vmem:[%s16 + $0x48] sm:$0xf]
        %v3374 = vld [vmem:[%s16 + $0x4c] sm:$0xf]
        %v3375 = vld [vmem:[%s16 + $0x50] sm:$0xf]
        %v3376 = vld [vmem:[%s16 + $0x54] sm:$0xf]
        %v3377 = vld [vmem:[%s16 + $0x58] sm:$0xf]
        %v3378 = vld [vmem:[%s16 + $0x5c] sm:$0xf]
        %v3379 = vld [vmem:[%s16 + $0x60] sm:$0xf]
        %v3380 = vld [vmem:[%s16 + $0x64] sm:$0xf]
        %v3381 = vld [vmem:[%s16 + $0x68] sm:$0xf]
        %v3382 = vld [vmem:[%s16 + $0x6c] sm:$0xf]
        %v3383 = vld [vmem:[%s16 + $0x70] sm:$0xf]
        %v3384 = vld [vmem:[%s16 + $0x74] sm:$0xf]
        %v3385 = vld [vmem:[%s16 + $0x78] sm:$0xf]
        %v3386 = vld [vmem:[%s16 + $0x7c] sm:$0xf]
        %v3387 = vld [vmem:[%s16 + $0x80] sm:$0xf]
        %v3388 = vld [vmem:[%s16 + $0x84] sm:$0xf]
        %v3389 = vld [vmem:[%s16 + $0x88] sm:$0xf]
        %v3390 = vld [vmem:[%s16 + $0x8c] sm:$0xf]
        %v3391 = vld [vmem:[%s16 + $0x90] sm:$0xf]
        %v3392 = vld [vmem:[%s16 + $0x94] sm:$0xf]
        %v3393 = vld [vmem:[%s16 + $0x98] sm:$0xf]
        %v3394 = vld [vmem:[%s16 + $0x9c] sm:$0xf]
        %v3395 = vld [vmem:[%s16 + $0xa0] sm:$0xf]
        %v3396 = vld [vmem:[%s16 + $0xa4] sm:$0xf]
        %v3397 = vld [vmem:[%s16 + $0xa8] sm:$0xf]
        %v3398 = vld [vmem:[%s16 + $0xac] sm:$0xf]
        %v3399 = vld [vmem:[%s16 + $0xb0] sm:$0xf]
        %v3400 = vld [vmem:[%s16 + $0xb4] sm:$0xf]
        %v3401 = vld [vmem:[%s16 + $0xb8] sm:$0xf]
        %v3402 = vld [vmem:[%s16 + $0xbc] sm:$0xf]
        %v3403 = vld [vmem:[%s16 + $0xc0] sm:$0xf]
        %v3404 = vld [vmem:[%s16 + $0xc4] sm:$0xf]
        %v3405 = vld [vmem:[%s16 + $0xc8] sm:$0xf]
        %v3406 = vld [vmem:[%s16 + $0xcc] sm:$0xf]
        %v3407 = vld [vmem:[%s16 + $0xd0] sm:$0xf]
        %v3408 = vld [vmem:[%s16 + $0xd4] sm:$0xf]
        %v3409 = vld [vmem:[%s16 + $0xd8] sm:$0xf]
        %v3410 = vld [vmem:[%s16 + $0xdc] sm:$0xf]
        %v3411 = vld [vmem:[%s16 + $0xe0] sm:$0xf]
        %v3412 = vld [vmem:[%s16 + $0xe4] sm:$0xf]
        %v3413 = vld [vmem:[%s16 + $0xe8] sm:$0xf]
        %v3414 = vld [vmem:[%s16 + $0xec] sm:$0xf]
        %v3415 = vld [vmem:[%s16 + $0xf0] sm:$0xf]
        %v3416 = vld [vmem:[%s16 + $0xf4] sm:$0xf]
        %v3417 = vld [vmem:[%s16 + $0xf8] sm:$0xf]
        %v3418 = vld [vmem:[%s16 + $0xfc] sm:$0xf]
        %v3419 = vld [vmem:[%s16 + $0x100] sm:$0xf]
        %v3420 = vld [vmem:[%s16 + $0x104] sm:$0xf]
        %v3421 = vld [vmem:[%s16 + $0x108] sm:$0xf]
        %v3422 = vld [vmem:[%s16 + $0x10c] sm:$0xf]
        %v3423 = vld [vmem:[%s16 + $0x110] sm:$0xf]
        %v3424 = vld [vmem:[%s16 + $0x114] sm:$0xf]
        %v3425 = vld [vmem:[%s16 + $0x118] sm:$0xf]
        %v3426 = vld [vmem:[%s16 + $0x11c] sm:$0xf]
        %v3427 = vld [vmem:[%s17] sm:$0xff]
        %v3428 = vld [vmem:[%s17 + $0x8] sm:$0xff]
        %v3429 = vld [vmem:[%s17 + $0x10] sm:$0xff]
        %v3430 = vld [vmem:[%s17 + $0x18] sm:$0xff]
        %v3431 = vld [vmem:[%s18] sm:$0x1]
        %v3432 = vld [vmem:[%s19] sm:$0xff]
        %v3433 = vld [vmem:[%s19 + $0x8] sm:$0xff]
        %v3434 = vld [vmem:[%s19 + $0x10] sm:$0xff]
        %v3435 = vld [vmem:[%s19 + $0x18] sm:$0xff]
        %v3436 = vld [vmem:[%s20] sm:$0xff]
        %v3437 = vld [vmem:[%s20 + $0x8] sm:$0xff]
        %v3438 = vld [vmem:[%s20 + $0x10] sm:$0xff]
        %v3439 = vld [vmem:[%s20 + $0x18] sm:$0xff]
        %3441 = vset.pattern.permute.xlu0 0
        %3442 = vperm.xlu0 %3441, %v3347
        %v3443 = vpop.permute.xlu0 %3442
        %3446 = vset.pattern.permute.xlu0 0
        %3447 = vperm.xlu0 %3446, %v3348
        %v3448 = vpop.permute.xlu0 %3447
        %3451 = vset.pattern.permute.xlu0 0
        %3452 = vperm.xlu0 %3451, %v3349
        %v3453 = vpop.permute.xlu0 %3452
        %3456 = vset.pattern.permute.xlu0 0
        %3457 = vperm.xlu0 %3456, %v3350
        %v3458 = vpop.permute.xlu0 %3457
        %v3460 = vmul.f32 %v3343, %v3443
        %v3461 = vmul.f32 %v3344, %v3448
        %v3462 = vmul.f32 %v3345, %v3453
        %v3463 = vmul.f32 %v3346, %v3458
        %v3464 = vpack.c.bf16 %v3461, %v3460
        %v3465 = vpack.c.bf16 %v3463, %v3462
        %3466 = vset.pattern.permute.xlu0 1
        %3467 = vperm.xlu0 %3466, %v3347
        %v3468 = vpop.permute.xlu0 %3467
        %3470 = vset.pattern.permute.xlu0 1
        %3471 = vperm.xlu0 %3470, %v3348
        %v3472 = vpop.permute.xlu0 %3471
        %3474 = vset.pattern.permute.xlu0 1
        %3475 = vperm.xlu0 %3474, %v3349
        %v3476 = vpop.permute.xlu0 %3475
        %3478 = vset.pattern.permute.xlu0 1
        %3479 = vperm.xlu0 %3478, %v3350
        %v3480 = vpop.permute.xlu0 %3479
        %v3482 = vmul.f32 %v3343, %v3468
        %v3483 = vmul.f32 %v3344, %v3472
        %v3484 = vmul.f32 %v3345, %v3476
        %v3485 = vmul.f32 %v3346, %v3480
        %v3486 = vpack.c.bf16 %v3483, %v3482
        %v3487 = vpack.c.bf16 %v3485, %v3484
        %3488 = vset.pattern.permute.xlu0 2
        %3489 = vperm.xlu0 %3488, %v3347
        %v3490 = vpop.permute.xlu0 %3489
        %3492 = vset.pattern.permute.xlu0 2
        %3493 = vperm.xlu0 %3492, %v3348
        %v3494 = vpop.permute.xlu0 %3493
        %3496 = vset.pattern.permute.xlu0 2
        %3497 = vperm.xlu0 %3496, %v3349
        %v3498 = vpop.permute.xlu0 %3497
        %3500 = vset.pattern.permute.xlu0 2
        %3501 = vperm.xlu0 %3500, %v3350
        %v3502 = vpop.permute.xlu0 %3501
        %v3504 = vmul.f32 %v3343, %v3490
        %v3505 = vmul.f32 %v3344, %v3494
        %v3506 = vmul.f32 %v3345, %v3498
        %v3507 = vmul.f32 %v3346, %v3502
        %v3508 = vpack.c.bf16 %v3505, %v3504
        %v3509 = vpack.c.bf16 %v3507, %v3506
        %3510 = vset.pattern.permute.xlu0 3
        %3511 = vperm.xlu0 %3510, %v3347
        %v3512 = vpop.permute.xlu0 %3511
        %3514 = vset.pattern.permute.xlu0 3
        %3515 = vperm.xlu0 %3514, %v3348
        %v3516 = vpop.permute.xlu0 %3515
        %3518 = vset.pattern.permute.xlu0 3
        %3519 = vperm.xlu0 %3518, %v3349
        %v3520 = vpop.permute.xlu0 %3519
        %3522 = vset.pattern.permute.xlu0 3
        %3523 = vperm.xlu0 %3522, %v3350
        %v3524 = vpop.permute.xlu0 %3523
        %v3526 = vmul.f32 %v3343, %v3512
        %v3527 = vmul.f32 %v3344, %v3516
        %v3528 = vmul.f32 %v3345, %v3520
        %v3529 = vmul.f32 %v3346, %v3524
        %v3530 = vpack.c.bf16 %v3527, %v3526
        %v3531 = vpack.c.bf16 %v3529, %v3528
        %3532 = vset.pattern.permute.xlu0 4
        %3533 = vperm.xlu0 %3532, %v3347
        %v3534 = vpop.permute.xlu0 %3533
        %3536 = vset.pattern.permute.xlu0 4
        %3537 = vperm.xlu0 %3536, %v3348
        %v3538 = vpop.permute.xlu0 %3537
        %3540 = vset.pattern.permute.xlu0 4
        %3541 = vperm.xlu0 %3540, %v3349
        %v3542 = vpop.permute.xlu0 %3541
        %3544 = vset.pattern.permute.xlu0 4
        %3545 = vperm.xlu0 %3544, %v3350
        %v3546 = vpop.permute.xlu0 %3545
        %v3548 = vmul.f32 %v3343, %v3534
        %v3549 = vmul.f32 %v3344, %v3538
        %v3550 = vmul.f32 %v3345, %v3542
        %v3551 = vmul.f32 %v3346, %v3546
        %v3552 = vpack.c.bf16 %v3549, %v3548
        %v3553 = vpack.c.bf16 %v3551, %v3550
        %3554 = vset.pattern.permute.xlu0 5
        %3555 = vperm.xlu0 %3554, %v3347
        %v3556 = vpop.permute.xlu0 %3555
        %3558 = vset.pattern.permute.xlu0 5
        %3559 = vperm.xlu0 %3558, %v3348
        %v3560 = vpop.permute.xlu0 %3559
        %3562 = vset.pattern.permute.xlu0 5
        %3563 = vperm.xlu0 %3562, %v3349
        %v3564 = vpop.permute.xlu0 %3563
        %3566 = vset.pattern.permute.xlu0 5
        %3567 = vperm.xlu0 %3566, %v3350
        %v3568 = vpop.permute.xlu0 %3567
        %v3570 = vmul.f32 %v3343, %v3556
        %v3571 = vmul.f32 %v3344, %v3560
        %v3572 = vmul.f32 %v3345, %v3564
        %v3573 = vmul.f32 %v3346, %v3568
        %v3574 = vpack.c.bf16 %v3571, %v3570
        %v3575 = vpack.c.bf16 %v3573, %v3572
        %3576 = vset.pattern.permute.xlu0 6
        %3577 = vperm.xlu0 %3576, %v3347
        %v3578 = vpop.permute.xlu0 %3577
        %3580 = vset.pattern.permute.xlu0 6
        %3581 = vperm.xlu0 %3580, %v3348
        %v3582 = vpop.permute.xlu0 %3581
        %3584 = vset.pattern.permute.xlu0 6
        %3585 = vperm.xlu0 %3584, %v3349
        %v3586 = vpop.permute.xlu0 %3585
        %3588 = vset.pattern.permute.xlu0 6
        %3589 = vperm.xlu0 %3588, %v3350
        %v3590 = vpop.permute.xlu0 %3589
        %v3592 = vmul.f32 %v3343, %v3578
        %v3593 = vmul.f32 %v3344, %v3582
        %v3594 = vmul.f32 %v3345, %v3586
        %v3595 = vmul.f32 %v3346, %v3590
        %v3596 = vpack.c.bf16 %v3593, %v3592
        %v3597 = vpack.c.bf16 %v3595, %v3594
        %3598 = vset.pattern.permute.xlu0 7
        %3599 = vperm.xlu0 %3598, %v3347
        %v3600 = vpop.permute.xlu0 %3599
        %3602 = vset.pattern.permute.xlu0 7
        %3603 = vperm.xlu0 %3602, %v3348
        %v3604 = vpop.permute.xlu0 %3603
        %3606 = vset.pattern.permute.xlu0 7
        %3607 = vperm.xlu0 %3606, %v3349
        %v3608 = vpop.permute.xlu0 %3607
        %3610 = vset.pattern.permute.xlu0 7
        %3611 = vperm.xlu0 %3610, %v3350
        %v3612 = vpop.permute.xlu0 %3611
        %v3614 = vmul.f32 %v3343, %v3600
        %v3615 = vmul.f32 %v3344, %v3604
        %v3616 = vmul.f32 %v3345, %v3608
        %v3617 = vmul.f32 %v3346, %v3612
        %v3618 = vpack.c.bf16 %v3615, %v3614
        %v3619 = vpack.c.bf16 %v3617, %v3616
        %3620 = vset.pattern.permute.xlu0 8
        %3621 = vperm.xlu0 %3620, %v3347
        %v3622 = vpop.permute.xlu0 %3621
        %3624 = vset.pattern.permute.xlu0 8
        %3625 = vperm.xlu0 %3624, %v3348
        %v3626 = vpop.permute.xlu0 %3625
        %3628 = vset.pattern.permute.xlu0 8
        %3629 = vperm.xlu0 %3628, %v3349
        %v3630 = vpop.permute.xlu0 %3629
        %3632 = vset.pattern.permute.xlu0 8
        %3633 = vperm.xlu0 %3632, %v3350
        %v3634 = vpop.permute.xlu0 %3633
        %v3636 = vmul.f32 %v3343, %v3622
        %v3637 = vmul.f32 %v3344, %v3626
        %v3638 = vmul.f32 %v3345, %v3630
        %v3639 = vmul.f32 %v3346, %v3634
        %v3640 = vpack.c.bf16 %v3637, %v3636
        %v3641 = vpack.c.bf16 %v3639, %v3638
        %3644 = vrot.lane.b32.xlu0 %v3486, 64
        %v3645 = vpop.permute.xlu0 %3644
        %3646 = vrot.lane.b32.xlu0 %v3487, 64
        %v3647 = vpop.permute.xlu0 %3646
        %3650 = vrot.lane.b32.xlu0 %v3530, 64
        %v3651 = vpop.permute.xlu0 %3650
        %3652 = vrot.lane.b32.xlu0 %v3531, 64
        %v3653 = vpop.permute.xlu0 %3652
        %3656 = vrot.lane.b32.xlu0 %v3574, 64
        %v3657 = vpop.permute.xlu0 %3656
        %3658 = vrot.lane.b32.xlu0 %v3575, 64
        %v3659 = vpop.permute.xlu0 %3658
        %3662 = vrot.lane.b32.xlu0 %v3618, 64
        %v3663 = vpop.permute.xlu0 %3662
        %3664 = vrot.lane.b32.xlu0 %v3619, 64
        %v3665 = vpop.permute.xlu0 %3664
        %v3668 = vsel %vm2580, %v3464, %v3645
        %v3672 = vsel %vm2580, %v3465, %v3647
        %v3676 = vsel %vm2580, %v3508, %v3651
        %v3680 = vsel %vm2580, %v3509, %v3653
        %v3684 = vsel %vm2580, %v3552, %v3657
        %v3688 = vsel %vm2580, %v3553, %v3659
        %v3692 = vsel %vm2580, %v3596, %v3663
        %v3696 = vsel %vm2580, %v3597, %v3665
        %3699 = vset.pattern.permute.xlu0 0
        %3700 = vperm.xlu0 %3699, %v3351
        %v3701 = vpop.permute.xlu0 %3700
        %3704 = vset.pattern.permute.xlu0 0
        %3705 = vperm.xlu0 %3704, %v3352
        %v3706 = vpop.permute.xlu0 %3705
        %3709 = vset.pattern.permute.xlu0 0
        %3710 = vperm.xlu0 %3709, %v3353
        %v3711 = vpop.permute.xlu0 %3710
        %3714 = vset.pattern.permute.xlu0 0
        %3715 = vperm.xlu0 %3714, %v3354
        %v3716 = vpop.permute.xlu0 %3715
        %v3790 = vunpack.c.l.b16 %v3355
        %v3791 = vunpack.c.l.b16 %v3356
        %v3792 = vunpack.c.l.b16 %v3357
        %v3793 = vunpack.c.l.b16 %v3358
        %v3794 = vunpack.c.l.b16 %v3359
        %v3795 = vunpack.c.l.b16 %v3360
        %v3796 = vunpack.c.l.b16 %v3361
        %v3797 = vunpack.c.l.b16 %v3362
        %v3798 = vunpack.c.l.b16 %v3363
        %v3799 = vunpack.c.l.b16 %v3364
        %v3800 = vunpack.c.l.b16 %v3365
        %v3801 = vunpack.c.l.b16 %v3366
        %v3802 = vunpack.c.l.b16 %v3367
        %v3803 = vunpack.c.l.b16 %v3368
        %v3804 = vunpack.c.l.b16 %v3369
        %v3805 = vunpack.c.l.b16 %v3370
        %v3806 = vunpack.c.l.b16 %v3371
        %v3807 = vunpack.c.l.b16 %v3372
        %v3808 = vunpack.c.l.b16 %v3373
        %v3809 = vunpack.c.l.b16 %v3374
        %v3810 = vunpack.c.l.b16 %v3375
        %v3811 = vunpack.c.l.b16 %v3376
        %v3812 = vunpack.c.l.b16 %v3377
        %v3813 = vunpack.c.l.b16 %v3378
        %v3814 = vunpack.c.l.b16 %v3379
        %v3815 = vunpack.c.l.b16 %v3380
        %v3816 = vunpack.c.l.b16 %v3381
        %v3817 = vunpack.c.l.b16 %v3382
        %v3818 = vunpack.c.l.b16 %v3383
        %v3819 = vunpack.c.l.b16 %v3384
        %v3820 = vunpack.c.l.b16 %v3385
        %v3821 = vunpack.c.l.b16 %v3386
        %v3822 = vunpack.c.l.b16 %v3387
        %v3823 = vunpack.c.l.b16 %v3388
        %v3824 = vunpack.c.l.b16 %v3389
        %v3825 = vunpack.c.l.b16 %v3390
        %v3826 = vunpack.c.l.b16 %v3391
        %v3827 = vunpack.c.l.b16 %v3392
        %v3828 = vunpack.c.l.b16 %v3393
        %v3829 = vunpack.c.l.b16 %v3394
        %v3830 = vunpack.c.l.b16 %v3395
        %v3831 = vunpack.c.l.b16 %v3396
        %v3832 = vunpack.c.l.b16 %v3397
        %v3833 = vunpack.c.l.b16 %v3398
        %v3834 = vunpack.c.l.b16 %v3399
        %v3835 = vunpack.c.l.b16 %v3400
        %v3836 = vunpack.c.l.b16 %v3401
        %v3837 = vunpack.c.l.b16 %v3402
        %v3838 = vunpack.c.l.b16 %v3403
        %v3839 = vunpack.c.l.b16 %v3404
        %v3840 = vunpack.c.l.b16 %v3405
        %v3841 = vunpack.c.l.b16 %v3406
        %v3842 = vunpack.c.l.b16 %v3407
        %v3843 = vunpack.c.l.b16 %v3408
        %v3844 = vunpack.c.l.b16 %v3409
        %v3845 = vunpack.c.l.b16 %v3410
        %v3846 = vunpack.c.l.b16 %v3411
        %v3847 = vunpack.c.l.b16 %v3412
        %v3848 = vunpack.c.l.b16 %v3413
        %v3849 = vunpack.c.l.b16 %v3414
        %v3850 = vunpack.c.l.b16 %v3415
        %v3851 = vunpack.c.l.b16 %v3416
        %v3852 = vunpack.c.l.b16 %v3417
        %v3853 = vunpack.c.l.b16 %v3418
        %v3854 = vunpack.c.l.b16 %v3419
        %v3855 = vunpack.c.l.b16 %v3420
        %v3856 = vunpack.c.l.b16 %v3421
        %v3857 = vunpack.c.l.b16 %v3422
        %v3858 = vunpack.c.l.b16 %v3423
        %v3859 = vunpack.c.l.b16 %v3424
        %v3860 = vunpack.c.l.b16 %v3425
        %v3861 = vunpack.c.l.b16 %v3426
        %v3862 = vpack.c.b16 %v3791, %v3790
        %v3863 = vpack.c.b16 %v3793, %v3792
        %v3864 = vpack.c.b16 %v3795, %v3794
        %v3865 = vpack.c.b16 %v3797, %v3796
        %v3866 = vpack.c.b16 %v3799, %v3798
        %v3867 = vpack.c.b16 %v3801, %v3800
        %v3868 = vpack.c.b16 %v3803, %v3802
        %v3869 = vpack.c.b16 %v3805, %v3804
        %v3870 = vpack.c.b16 %v3807, %v3806
        %v3871 = vpack.c.b16 %v3809, %v3808
        %v3872 = vpack.c.b16 %v3811, %v3810
        %v3873 = vpack.c.b16 %v3813, %v3812
        %v3874 = vpack.c.b16 %v3815, %v3814
        %v3875 = vpack.c.b16 %v3817, %v3816
        %v3876 = vpack.c.b16 %v3819, %v3818
        %v3877 = vpack.c.b16 %v3821, %v3820
        %v3878 = vpack.c.b16 %v3823, %v3822
        %v3879 = vpack.c.b16 %v3825, %v3824
        %v3880 = vpack.c.b16 %v3827, %v3826
        %v3881 = vpack.c.b16 %v3829, %v3828
        %v3882 = vpack.c.b16 %v3831, %v3830
        %v3883 = vpack.c.b16 %v3833, %v3832
        %v3884 = vpack.c.b16 %v3835, %v3834
        %v3885 = vpack.c.b16 %v3837, %v3836
        %v3886 = vpack.c.b16 %v3839, %v3838
        %v3887 = vpack.c.b16 %v3841, %v3840
        %v3888 = vpack.c.b16 %v3843, %v3842
        %v3889 = vpack.c.b16 %v3845, %v3844
        %v3890 = vpack.c.b16 %v3847, %v3846
        %v3891 = vpack.c.b16 %v3849, %v3848
        %v3892 = vpack.c.b16 %v3851, %v3850
        %v3893 = vpack.c.b16 %v3853, %v3852
        %v3894 = vpack.c.b16 %v3855, %v3854
        %v3895 = vpack.c.b16 %v3857, %v3856
        %v3896 = vpack.c.b16 %v3859, %v3858
        %v3897 = vpack.c.b16 %v3861, %v3860
        %v3935 = vsel %vm2580, %v3640, 0
        %v3938 = vsel %vm2580, %v3641, 0
        %3940 = vmatprep.subr.bf16.mxu0 0
        %3941 = vmatpush1.bf16.msra.mxu0 %v3869
        %3942 = vmatprep.subr.bf16.mxu0 0
        %3943 = vmatpush1.bf16.msra.mxu0 %v3868
        %3944 = vmatprep.subr.bf16.mxu0 0
        %3945 = vmatpush1.bf16.msra.mxu0 %v3867
        %3946 = vmatprep.subr.bf16.mxu0 0
        %3947 = vmatpush1.bf16.msra.mxu0 %v3866
        %3948 = vmatprep.subr.bf16.mxu0 0
        %3949 = vmatpush1.bf16.msra.mxu0 %v3865
        %3950 = vmatprep.subr.bf16.mxu0 0
        %3951 = vmatpush1.bf16.msra.mxu0 %v3864
        %3952 = vmatprep.subr.bf16.mxu0 0
        %3953 = vmatpush1.bf16.msra.mxu0 %v3863
        %3954 = vmatprep.subr.bf16.mxu0 0
        %3955 = vmatpush1.bf16.msra.mxu0 %v3862
        %3956 = vmatprep.subr.bf16.mxu0 0
        %3957 = vmatpush2.bf16.msra.mxu0 %v3877
        %3958 = vmatprep.subr.bf16.mxu0 0
        %3959 = vmatpush2.bf16.msra.mxu0 %v3876
        %3960 = vmatprep.subr.bf16.mxu0 0
        %3961 = vmatpush2.bf16.msra.mxu0 %v3875
        %3962 = vmatprep.subr.bf16.mxu0 0
        %3963 = vmatpush2.bf16.msra.mxu0 %v3874
        %3964 = vmatprep.subr.bf16.mxu0 0
        %3965 = vmatpush2.bf16.msra.mxu0 %v3873
        %3966 = vmatprep.subr.bf16.mxu0 0
        %3967 = vmatpush2.bf16.msra.mxu0 %v3872
        %3968 = vmatprep.subr.bf16.mxu0 0
        %3969 = vmatpush2.bf16.msra.mxu0 %v3871
        %3970 = vmatprep.subr.bf16.mxu0 0
        %3971 = vmatpush2.bf16.msra.mxu0 %v3870
        %3972 = vmatprep.mubr.bf16.mxu0 %v3676
        %3973 = vmatmul.mubr.bf16.gmra.mxu0 %v3668
        %v3974 = vpop.f32.mrf.mxu0
        %v3975 = vadd.f32 %v3701, %v3974
        %v3976 = vpop.f32.mrf.mxu0
        %v3977 = vpop.f32.mrf.mxu0
        %v3978 = vadd.f32 %v3706, %v3977
        %v3979 = vpop.f32.mrf.mxu0
        %3980 = vmatprep.mubr.bf16.mxu0 %v3680
        %3981 = vmatmul.mubr.bf16.gmra.mxu0 %v3672
        %v3982 = vpop.f32.mrf.mxu0
        %v3983 = vadd.f32 %v3711, %v3982
        %v3984 = vpop.f32.mrf.mxu0
        %v3985 = vpop.f32.mrf.mxu0
        %v3986 = vadd.f32 %v3716, %v3985
        %v3987 = vpop.f32.mrf.mxu0
        %3988 = vdwg.mxu0
        %3989 = vmatprep.subr.bf16.mxu0 0
        %3990 = vmatpush1.bf16.msra.mxu0 %v3885
        %3991 = vmatprep.subr.bf16.mxu0 0
        %3992 = vmatpush1.bf16.msra.mxu0 %v3884
        %3993 = vmatprep.subr.bf16.mxu0 0
        %3994 = vmatpush1.bf16.msra.mxu0 %v3883
        %3995 = vmatprep.subr.bf16.mxu0 0
        %3996 = vmatpush1.bf16.msra.mxu0 %v3882
        %3997 = vmatprep.subr.bf16.mxu0 0
        %3998 = vmatpush1.bf16.msra.mxu0 %v3881
        %3999 = vmatprep.subr.bf16.mxu0 0
        %4000 = vmatpush1.bf16.msra.mxu0 %v3880
        %4001 = vmatprep.subr.bf16.mxu0 0
        %4002 = vmatpush1.bf16.msra.mxu0 %v3879
        %4003 = vmatprep.subr.bf16.mxu0 0
        %4004 = vmatpush1.bf16.msra.mxu0 %v3878
        %4005 = vmatprep.subr.bf16.mxu0 0
        %4006 = vmatpush2.bf16.msra.mxu0 %v3893
        %4007 = vmatprep.subr.bf16.mxu0 0
        %4008 = vmatpush2.bf16.msra.mxu0 %v3892
        %4009 = vmatprep.subr.bf16.mxu0 0
        %4010 = vmatpush2.bf16.msra.mxu0 %v3891
        %4011 = vmatprep.subr.bf16.mxu0 0
        %4012 = vmatpush2.bf16.msra.mxu0 %v3890
        %4013 = vmatprep.subr.bf16.mxu0 0
        %4014 = vmatpush2.bf16.msra.mxu0 %v3889
        %4015 = vmatprep.subr.bf16.mxu0 0
        %4016 = vmatpush2.bf16.msra.mxu0 %v3888
        %4017 = vmatprep.subr.bf16.mxu0 0
        %4018 = vmatpush2.bf16.msra.mxu0 %v3887
        %4019 = vmatprep.subr.bf16.mxu0 0
        %4020 = vmatpush2.bf16.msra.mxu0 %v3886
        %4021 = vmatprep.mubr.bf16.mxu0 %v3692
        %4022 = vmatmul.mubr.bf16.gmra.mxu0 %v3684
        %v4023 = vpop.f32.mrf.mxu0
        %v4024 = vadd.f32 %v3975, %v4023
        %v4025 = vpop.f32.mrf.mxu0
        %v4026 = vpop.f32.mrf.mxu0
        %v4027 = vadd.f32 %v3978, %v4026
        %v4028 = vpop.f32.mrf.mxu0
        %4029 = vmatprep.mubr.bf16.mxu0 %v3696
        %4030 = vmatmul.mubr.bf16.gmra.mxu0 %v3688
        %v4031 = vpop.f32.mrf.mxu0
        %v4032 = vadd.f32 %v3983, %v4031
        %v4033 = vpop.f32.mrf.mxu0
        %v4034 = vpop.f32.mrf.mxu0
        %v4035 = vadd.f32 %v3986, %v4034
        %v4036 = vpop.f32.mrf.mxu0
        %4037 = vdwg.mxu0
        %4038 = vmatprep.subr.bf16.mxu0 0
        %4039 = vmatpush1.bf16.msra.mxu0 0
        %4040 = vmatprep.subr.bf16.mxu0 0
        %4041 = vmatpush1.bf16.msra.mxu0 0
        %4042 = vmatprep.subr.bf16.mxu0 0
        %4043 = vmatpush1.bf16.msra.mxu0 0
        %4044 = vmatprep.subr.bf16.mxu0 0
        %4045 = vmatpush1.bf16.msra.mxu0 0
        %4046 = vmatprep.subr.bf16.mxu0 0
        %4047 = vmatpush1.bf16.msra.mxu0 %v3897
        %4048 = vmatprep.subr.bf16.mxu0 0
        %4049 = vmatpush1.bf16.msra.mxu0 %v3896
        %4050 = vmatprep.subr.bf16.mxu0 0
        %4051 = vmatpush1.bf16.msra.mxu0 %v3895
        %4052 = vmatprep.subr.bf16.mxu0 0
        %4053 = vmatpush1.bf16.msra.mxu0 %v3894
        %4054 = vmatprep.subr.bf16.mxu0 0
        %4055 = vmatpush2.bf16.msra.mxu0 0
        %4056 = vmatprep.subr.bf16.mxu0 0
        %4057 = vmatpush2.bf16.msra.mxu0 0
        %4058 = vmatprep.subr.bf16.mxu0 0
        %4059 = vmatpush2.bf16.msra.mxu0 0
        %4060 = vmatprep.subr.bf16.mxu0 0
        %4061 = vmatpush2.bf16.msra.mxu0 0
        %4062 = vmatprep.subr.bf16.mxu0 0
        %4063 = vmatpush2.bf16.msra.mxu0 0
        %4064 = vmatprep.subr.bf16.mxu0 0
        %4065 = vmatpush2.bf16.msra.mxu0 0
        %4066 = vmatprep.subr.bf16.mxu0 0
        %4067 = vmatpush2.bf16.msra.mxu0 0
        %4068 = vmatprep.subr.bf16.mxu0 0
        %4069 = vmatpush2.bf16.msra.mxu0 0
        %4070 = vmatprep.mubr.bf16.mxu0 0
        %4071 = vmatmul.mubr.bf16.gmra.mxu0 %v3935
        %v4072 = vpop.f32.mrf.mxu0
        %v4073 = vadd.f32 %v4024, %v4072
        %v4074 = vpop.f32.mrf.mxu0
        %v4075 = vpop.f32.mrf.mxu0
        %v4076 = vadd.f32 %v4027, %v4075
        %v4077 = vpop.f32.mrf.mxu0
        %4078 = vmatprep.mubr.bf16.mxu0 0
        %4079 = vmatmul.mubr.bf16.gmra.mxu0 %v3938
        %v4080 = vpop.f32.mrf.mxu0
        %v4081 = vadd.f32 %v4032, %v4080
        %v4082 = vpop.f32.mrf.mxu0
        %v4083 = vpop.f32.mrf.mxu0
        %v4084 = vadd.f32 %v4035, %v4083
        %v4085 = vpop.f32.mrf.mxu0
        %4086 = vdwg.mxu0
        %v4087 = vxor.u32 %v4073, 2147483648
        %v4088 = vxor.u32 %v4076, 2147483648
        %v4089 = vxor.u32 %v4081, 2147483648
        %v4090 = vxor.u32 %v4084, 2147483648
        %v4091 = vmul.f32 %v4087, 1.442695
        %v4092 = vpow.pop %v4091
        %v4093 = vmul.f32 %v4088, 1.442695
        %v4094 = vpow.pop %v4093
        %v4095 = vmul.f32 %v4089, 1.442695
        %v4096 = vpow.pop %v4095
        %v4097 = vmul.f32 %v4090, 1.442695
        %v4098 = vpow.pop %v4097
        %v4099 = vadd.f32 %v4092, 1.0
        %v4100 = vadd.f32 %v4094, 1.0
        %v4101 = vadd.f32 %v4096, 1.0
        %v4102 = vadd.f32 %v4098, 1.0
        %v4103 = vrcp.pop %v4099
        %v4104 = vmul.f32 1.0, %v4103
        %v4105 = vrcp.pop %v4100
        %v4106 = vmul.f32 1.0, %v4105
        %v4107 = vrcp.pop %v4101
        %v4108 = vmul.f32 1.0, %v4107
        %v4109 = vrcp.pop %v4102
        %v4110 = vmul.f32 1.0, %v4109
        %v4111 = vmul.f32 %v4073, %v4104
        %v4112 = vmul.f32 %v4076, %v4106
        %v4113 = vmul.f32 %v4081, %v4108
        %v4114 = vmul.f32 %v4084, %v4110
        %v4115 = vsel %vm2580, %v4111, 0.0
        %4116 = vadd.xlane.f32.xlu0 %v4115
        %v4117 = vpop.xlane.xlu0 %4116
        %v4118 = vsel %vm2580, %v4112, 0.0
        %4119 = vadd.xlane.f32.xlu0 %v4118
        %v4120 = vpop.xlane.xlu0 %4119
        %v4121 = vsel %vm2580, %v4113, 0.0
        %4122 = vadd.xlane.f32.xlu0 %v4121
        %v4123 = vpop.xlane.xlu0 %4122
        %v4124 = vsel %vm2580, %v4114, 0.0
        %4125 = vadd.xlane.f32.xlu0 %v4124
        %v4126 = vpop.xlane.xlu0 %4125
        %v4127 = vmul.f32 %v4117, %v2587
        %v4128 = vmul.f32 %v4120, %v2587
        %v4129 = vmul.f32 %v4123, %v2587
        %v4130 = vmul.f32 %v4126, %v2587
        %v4131 = vmul.f32 %v3427, %v4127
        %v4132 = vmul.f32 %v3428, %v4128
        %v4133 = vmul.f32 %v3429, %v4129
        %v4134 = vmul.f32 %v3430, %v4130
        %vm4135 = vcmask 31744
        %v4136 = vsel %vm4135, %v4131, 0.0
        %v4137 = vsel %vm4135, %v4132, 0.0
        %v4138 = vadd.f32 %v4136, %v4137
        %v4139 = vsel %vm4135, %v4133, 0.0
        %v4140 = vadd.f32 %v4138, %v4139
        %v4141 = vsel %vm4135, %v4134, 0.0
        %v4142 = vadd.f32 %v4140, %v4141
        %v4143 = vrot.slane %v4142, 4
        %v4144 = vadd.f32 %v4142, %v4143
        %v4145 = vrot.slane %v4144, 2
        %v4146 = vadd.f32 %v4144, %v4145
        %v4147 = vrot.slane %v4146, 1
        %v4148 = vadd.f32 %v4146, %v4147
        %v4149 = vadd.f32 %v4148, %v3431
        %v4150 = vxor.u32 %v4149, 2147483648
        %v4151 = vmul.f32 %v4150, 1.442695
        %v4152 = vpow.pop %v4151
        %v4153 = vadd.f32 %v4152, 1.0
        %v4154 = vrcp.pop %v4153
        %v4155 = vmul.f32 1.0, %v4154
        %v4156 = vmul.f32 %v4149, %v4155
        %v4157 = vlaneseq
        %v4158 = vshrl.u32 %v4157, 7
        %v4159 = vsub.s32 0, %v4158
        %v4160 = vrot.slane %v4156, %v4159
        %v4161 = vmul.f32 %v3432, %v4160
        %v4162 = vmul.f32 %v3433, %v4160
        %v4163 = vmul.f32 %v3434, %v4160
        %v4164 = vmul.f32 %v3435, %v4160
        %v4165 = vsel %vm4135, %v4161, 0.0
        %4166 = vadd.xlane.f32.xlu0 %v4165
        %v4167 = vpop.xlane.xlu0 %4166
        %v4168 = vsel %vm4135, %v4162, 0.0
        %4169 = vadd.xlane.f32.xlu0 %v4168
        %v4170 = vpop.xlane.xlu0 %4169
        %v4171 = vsel %vm4135, %v4163, 0.0
        %4172 = vadd.xlane.f32.xlu0 %v4171
        %v4173 = vpop.xlane.xlu0 %4172
        %v4174 = vsel %vm4135, %v4164, 0.0
        %4175 = vadd.xlane.f32.xlu0 %v4174
        %v4176 = vpop.xlane.xlu0 %4175
        %v4177 = vadd.f32 %v4167, %v3436
        %v4178 = vadd.f32 %v4170, %v3437
        %v4179 = vadd.f32 %v4173, %v3438
        %v4180 = vadd.f32 %v4176, %v3439
        %v4181 = vxor.u32 %v4177, 2147483648
        %v4182 = vxor.u32 %v4178, 2147483648
        %v4183 = vxor.u32 %v4179, 2147483648
        %v4184 = vxor.u32 %v4180, 2147483648
        %v4185 = vmul.f32 %v4181, 1.442695
        %v4186 = vpow.pop %v4185
        %v4187 = vmul.f32 %v4182, 1.442695
        %v4188 = vpow.pop %v4187
        %v4189 = vmul.f32 %v4183, 1.442695
        %v4190 = vpow.pop %v4189
        %v4191 = vmul.f32 %v4184, 1.442695
        %v4192 = vpow.pop %v4191
        %v4193 = vadd.f32 %v4186, 1.0
        %v4194 = vadd.f32 %v4188, 1.0
        %v4195 = vadd.f32 %v4190, 1.0
        %v4196 = vadd.f32 %v4192, 1.0
        %v4197 = vrcp.pop %v4193
        %v4198 = vmul.f32 1.0, %v4197
        %v4199 = vrcp.pop %v4194
        %v4200 = vmul.f32 1.0, %v4199
        %v4201 = vrcp.pop %v4195
        %v4202 = vmul.f32 1.0, %v4201
        %v4203 = vrcp.pop %v4196
        %v4204 = vmul.f32 1.0, %v4203
        %4206 = vset.pattern.permute.xlu0 0
        %4207 = vperm.xlu0 %4206, %v4198
        %v4208 = vpop.permute.xlu0 %4207
        %4211 = vset.pattern.permute.xlu0 0
        %4212 = vperm.xlu0 %4211, %v4200
        %v4213 = vpop.permute.xlu0 %4212
        %4216 = vset.pattern.permute.xlu0 0
        %4217 = vperm.xlu0 %4216, %v4202
        %v4218 = vpop.permute.xlu0 %4217
        %4221 = vset.pattern.permute.xlu0 0
        %4222 = vperm.xlu0 %4221, %v4204
        %v4223 = vpop.permute.xlu0 %4222
        %v4225 = vmul.f32 %v4111, %v4208
        %v4226 = vmul.f32 %v4112, %v4213
        %v4227 = vmul.f32 %v4113, %v4218
        %v4228 = vmul.f32 %v4114, %v4223
        %4231 = vrot.lane.b32.xlu0 %v3464, 64
        %v4232 = vpop.permute.xlu0 %4231
        %4233 = vrot.lane.b32.xlu0 %v3465, 64
        %v4234 = vpop.permute.xlu0 %4233
        %4237 = vrot.lane.b32.xlu0 %v3508, 64
        %v4238 = vpop.permute.xlu0 %4237
        %4239 = vrot.lane.b32.xlu0 %v3509, 64
        %v4240 = vpop.permute.xlu0 %4239
        %4243 = vrot.lane.b32.xlu0 %v3552, 64
        %v4244 = vpop.permute.xlu0 %4243
        %4245 = vrot.lane.b32.xlu0 %v3553, 64
        %v4246 = vpop.permute.xlu0 %4245
        %4249 = vrot.lane.b32.xlu0 %v3596, 64
        %v4250 = vpop.permute.xlu0 %4249
        %4251 = vrot.lane.b32.xlu0 %v3597, 64
        %v4252 = vpop.permute.xlu0 %4251
        %4255 = vrot.lane.b32.xlu0 %v3640, 64
        %v4256 = vpop.permute.xlu0 %4255
        %4257 = vrot.lane.b32.xlu0 %v3641, 64
        %v4258 = vpop.permute.xlu0 %4257
        %v4261 = vsel %vm2580, %v4232, %v3486
        %v4265 = vsel %vm2580, %v4234, %v3487
        %v4269 = vsel %vm2580, %v4238, %v3530
        %v4273 = vsel %vm2580, %v4240, %v3531
        %v4277 = vsel %vm2580, %v4244, %v3574
        %v4281 = vsel %vm2580, %v4246, %v3575
        %v4285 = vsel %vm2580, %v4250, %v3618
        %v4289 = vsel %vm2580, %v4252, %v3619
        %v4292 = vsel %vm2580, %v4256, 0
        %v4295 = vsel %vm2580, %v4258, 0
        %4297 = vmatprep.subr.bf16.mxu0 0
        %4298 = vmatpush1.bf16.msra.mxu0 %v3869
        %4299 = vmatprep.subr.bf16.mxu0 0
        %4300 = vmatpush1.bf16.msra.mxu0 %v3868
        %4301 = vmatprep.subr.bf16.mxu0 0
        %4302 = vmatpush1.bf16.msra.mxu0 %v3867
        %4303 = vmatprep.subr.bf16.mxu0 0
        %4304 = vmatpush1.bf16.msra.mxu0 %v3866
        %4305 = vmatprep.subr.bf16.mxu0 0
        %4306 = vmatpush1.bf16.msra.mxu0 %v3865
        %4307 = vmatprep.subr.bf16.mxu0 0
        %4308 = vmatpush1.bf16.msra.mxu0 %v3864
        %4309 = vmatprep.subr.bf16.mxu0 0
        %4310 = vmatpush1.bf16.msra.mxu0 %v3863
        %4311 = vmatprep.subr.bf16.mxu0 0
        %4312 = vmatpush1.bf16.msra.mxu0 %v3862
        %4313 = vmatprep.subr.bf16.mxu0 0
        %4314 = vmatpush2.bf16.msra.mxu0 %v3877
        %4315 = vmatprep.subr.bf16.mxu0 0
        %4316 = vmatpush2.bf16.msra.mxu0 %v3876
        %4317 = vmatprep.subr.bf16.mxu0 0
        %4318 = vmatpush2.bf16.msra.mxu0 %v3875
        %4319 = vmatprep.subr.bf16.mxu0 0
        %4320 = vmatpush2.bf16.msra.mxu0 %v3874
        %4321 = vmatprep.subr.bf16.mxu0 0
        %4322 = vmatpush2.bf16.msra.mxu0 %v3873
        %4323 = vmatprep.subr.bf16.mxu0 0
        %4324 = vmatpush2.bf16.msra.mxu0 %v3872
        %4325 = vmatprep.subr.bf16.mxu0 0
        %4326 = vmatpush2.bf16.msra.mxu0 %v3871
        %4327 = vmatprep.subr.bf16.mxu0 0
        %4328 = vmatpush2.bf16.msra.mxu0 %v3870
        %4329 = vmatprep.mubr.bf16.mxu0 %v4269
        %4330 = vmatmul.mubr.bf16.gmra.mxu0 %v4261
        %v4331 = vpop.f32.mrf.mxu0
        %v4332 = vadd.f32 %v3701, %v4331
        %v4333 = vpop.f32.mrf.mxu0
        %v4334 = vpop.f32.mrf.mxu0
        %v4335 = vadd.f32 %v3706, %v4334
        %v4336 = vpop.f32.mrf.mxu0
        %4337 = vmatprep.mubr.bf16.mxu0 %v4273
        %4338 = vmatmul.mubr.bf16.gmra.mxu0 %v4265
        %v4339 = vpop.f32.mrf.mxu0
        %v4340 = vadd.f32 %v3711, %v4339
        %v4341 = vpop.f32.mrf.mxu0
        %v4342 = vpop.f32.mrf.mxu0
        %v4343 = vadd.f32 %v3716, %v4342
        %v4344 = vpop.f32.mrf.mxu0
        %4345 = vdwg.mxu0
        %4346 = vmatprep.subr.bf16.mxu0 0
        %4347 = vmatpush1.bf16.msra.mxu0 %v3885
        %4348 = vmatprep.subr.bf16.mxu0 0
        %4349 = vmatpush1.bf16.msra.mxu0 %v3884
        %4350 = vmatprep.subr.bf16.mxu0 0
        %4351 = vmatpush1.bf16.msra.mxu0 %v3883
        %4352 = vmatprep.subr.bf16.mxu0 0
        %4353 = vmatpush1.bf16.msra.mxu0 %v3882
        %4354 = vmatprep.subr.bf16.mxu0 0
        %4355 = vmatpush1.bf16.msra.mxu0 %v3881
        %4356 = vmatprep.subr.bf16.mxu0 0
        %4357 = vmatpush1.bf16.msra.mxu0 %v3880
        %4358 = vmatprep.subr.bf16.mxu0 0
        %4359 = vmatpush1.bf16.msra.mxu0 %v3879
        %4360 = vmatprep.subr.bf16.mxu0 0
        %4361 = vmatpush1.bf16.msra.mxu0 %v3878
        %4362 = vmatprep.subr.bf16.mxu0 0
        %4363 = vmatpush2.bf16.msra.mxu0 %v3893
        %4364 = vmatprep.subr.bf16.mxu0 0
        %4365 = vmatpush2.bf16.msra.mxu0 %v3892
        %4366 = vmatprep.subr.bf16.mxu0 0
        %4367 = vmatpush2.bf16.msra.mxu0 %v3891
        %4368 = vmatprep.subr.bf16.mxu0 0
        %4369 = vmatpush2.bf16.msra.mxu0 %v3890
        %4370 = vmatprep.subr.bf16.mxu0 0
        %4371 = vmatpush2.bf16.msra.mxu0 %v3889
        %4372 = vmatprep.subr.bf16.mxu0 0
        %4373 = vmatpush2.bf16.msra.mxu0 %v3888
        %4374 = vmatprep.subr.bf16.mxu0 0
        %4375 = vmatpush2.bf16.msra.mxu0 %v3887
        %4376 = vmatprep.subr.bf16.mxu0 0
        %4377 = vmatpush2.bf16.msra.mxu0 %v3886
        %4378 = vmatprep.mubr.bf16.mxu0 %v4285
        %4379 = vmatmul.mubr.bf16.gmra.mxu0 %v4277
        %v4380 = vpop.f32.mrf.mxu0
        %v4381 = vadd.f32 %v4332, %v4380
        %v4382 = vpop.f32.mrf.mxu0
        %v4383 = vpop.f32.mrf.mxu0
        %v4384 = vadd.f32 %v4335, %v4383
        %v4385 = vpop.f32.mrf.mxu0
        %4386 = vmatprep.mubr.bf16.mxu0 %v4289
        %4387 = vmatmul.mubr.bf16.gmra.mxu0 %v4281
        %v4388 = vpop.f32.mrf.mxu0
        %v4389 = vadd.f32 %v4340, %v4388
        %v4390 = vpop.f32.mrf.mxu0
        %v4391 = vpop.f32.mrf.mxu0
        %v4392 = vadd.f32 %v4343, %v4391
        %v4393 = vpop.f32.mrf.mxu0
        %4394 = vdwg.mxu0
        %4395 = vmatprep.subr.bf16.mxu0 0
        %4396 = vmatpush1.bf16.msra.mxu0 0
        %4397 = vmatprep.subr.bf16.mxu0 0
        %4398 = vmatpush1.bf16.msra.mxu0 0
        %4399 = vmatprep.subr.bf16.mxu0 0
        %4400 = vmatpush1.bf16.msra.mxu0 0
        %4401 = vmatprep.subr.bf16.mxu0 0
        %4402 = vmatpush1.bf16.msra.mxu0 0
        %4403 = vmatprep.subr.bf16.mxu0 0
        %4404 = vmatpush1.bf16.msra.mxu0 %v3897
        %4405 = vmatprep.subr.bf16.mxu0 0
        %4406 = vmatpush1.bf16.msra.mxu0 %v3896
        %4407 = vmatprep.subr.bf16.mxu0 0
        %4408 = vmatpush1.bf16.msra.mxu0 %v3895
        %4409 = vmatprep.subr.bf16.mxu0 0
        %4410 = vmatpush1.bf16.msra.mxu0 %v3894
        %4411 = vmatprep.subr.bf16.mxu0 0
        %4412 = vmatpush2.bf16.msra.mxu0 0
        %4413 = vmatprep.subr.bf16.mxu0 0
        %4414 = vmatpush2.bf16.msra.mxu0 0
        %4415 = vmatprep.subr.bf16.mxu0 0
        %4416 = vmatpush2.bf16.msra.mxu0 0
        %4417 = vmatprep.subr.bf16.mxu0 0
        %4418 = vmatpush2.bf16.msra.mxu0 0
        %4419 = vmatprep.subr.bf16.mxu0 0
        %4420 = vmatpush2.bf16.msra.mxu0 0
        %4421 = vmatprep.subr.bf16.mxu0 0
        %4422 = vmatpush2.bf16.msra.mxu0 0
        %4423 = vmatprep.subr.bf16.mxu0 0
        %4424 = vmatpush2.bf16.msra.mxu0 0
        %4425 = vmatprep.subr.bf16.mxu0 0
        %4426 = vmatpush2.bf16.msra.mxu0 0
        %4427 = vmatprep.mubr.bf16.mxu0 0
        %4428 = vmatmul.mubr.bf16.gmra.mxu0 %v4292
        %v4429 = vpop.f32.mrf.mxu0
        %v4430 = vadd.f32 %v4381, %v4429
        %v4431 = vpop.f32.mrf.mxu0
        %v4432 = vpop.f32.mrf.mxu0
        %v4433 = vadd.f32 %v4384, %v4432
        %v4434 = vpop.f32.mrf.mxu0
        %4435 = vmatprep.mubr.bf16.mxu0 0
        %4436 = vmatmul.mubr.bf16.gmra.mxu0 %v4295
        %v4437 = vpop.f32.mrf.mxu0
        %v4438 = vadd.f32 %v4389, %v4437
        %v4439 = vpop.f32.mrf.mxu0
        %v4440 = vpop.f32.mrf.mxu0
        %v4441 = vadd.f32 %v4392, %v4440
        %v4442 = vpop.f32.mrf.mxu0
        %4443 = vdwg.mxu0
        %v4444 = vxor.u32 %v4430, 2147483648
        %v4445 = vxor.u32 %v4433, 2147483648
        %v4446 = vxor.u32 %v4438, 2147483648
        %v4447 = vxor.u32 %v4441, 2147483648
        %v4448 = vmul.f32 %v4444, 1.442695
        %v4449 = vpow.pop %v4448
        %v4450 = vmul.f32 %v4445, 1.442695
        %v4451 = vpow.pop %v4450
        %v4452 = vmul.f32 %v4446, 1.442695
        %v4453 = vpow.pop %v4452
        %v4454 = vmul.f32 %v4447, 1.442695
        %v4455 = vpow.pop %v4454
        %v4456 = vadd.f32 %v4449, 1.0
        %v4457 = vadd.f32 %v4451, 1.0
        %v4458 = vadd.f32 %v4453, 1.0
        %v4459 = vadd.f32 %v4455, 1.0
        %v4460 = vrcp.pop %v4456
        %v4461 = vmul.f32 1.0, %v4460
        %v4462 = vrcp.pop %v4457
        %v4463 = vmul.f32 1.0, %v4462
        %v4464 = vrcp.pop %v4458
        %v4465 = vmul.f32 1.0, %v4464
        %v4466 = vrcp.pop %v4459
        %v4467 = vmul.f32 1.0, %v4466
        %v4468 = vmul.f32 %v4430, %v4461
        %v4469 = vmul.f32 %v4433, %v4463
        %v4470 = vmul.f32 %v4438, %v4465
        %v4471 = vmul.f32 %v4441, %v4467
        %v4472 = vsel %vm2580, %v4468, 0.0
        %4473 = vadd.xlane.f32.xlu0 %v4472
        %v4474 = vpop.xlane.xlu0 %4473
        %v4475 = vsel %vm2580, %v4469, 0.0
        %4476 = vadd.xlane.f32.xlu0 %v4475
        %v4477 = vpop.xlane.xlu0 %4476
        %v4478 = vsel %vm2580, %v4470, 0.0
        %4479 = vadd.xlane.f32.xlu0 %v4478
        %v4480 = vpop.xlane.xlu0 %4479
        %v4481 = vsel %vm2580, %v4471, 0.0
        %4482 = vadd.xlane.f32.xlu0 %v4481
        %v4483 = vpop.xlane.xlu0 %4482
        %v4484 = vmul.f32 %v4474, %v2587
        %v4485 = vmul.f32 %v4477, %v2587
        %v4486 = vmul.f32 %v4480, %v2587
        %v4487 = vmul.f32 %v4483, %v2587
        %v4488 = vmul.f32 %v3427, %v4484
        %v4489 = vmul.f32 %v3428, %v4485
        %v4490 = vmul.f32 %v3429, %v4486
        %v4491 = vmul.f32 %v3430, %v4487
        %v4492 = vsel %vm4135, %v4488, 0.0
        %v4493 = vsel %vm4135, %v4489, 0.0
        %v4494 = vadd.f32 %v4492, %v4493
        %v4495 = vsel %vm4135, %v4490, 0.0
        %v4496 = vadd.f32 %v4494, %v4495
        %v4497 = vsel %vm4135, %v4491, 0.0
        %v4498 = vadd.f32 %v4496, %v4497
        %v4499 = vrot.slane %v4498, 4
        %v4500 = vadd.f32 %v4498, %v4499
        %v4501 = vrot.slane %v4500, 2
        %v4502 = vadd.f32 %v4500, %v4501
        %v4503 = vrot.slane %v4502, 1
        %v4504 = vadd.f32 %v4502, %v4503
        %v4505 = vadd.f32 %v4504, %v3431
        %v4506 = vxor.u32 %v4505, 2147483648
        %v4507 = vmul.f32 %v4506, 1.442695
        %v4508 = vpow.pop %v4507
        %v4509 = vadd.f32 %v4508, 1.0
        %v4510 = vrcp.pop %v4509
        %v4511 = vmul.f32 1.0, %v4510
        %v4512 = vmul.f32 %v4505, %v4511
        %v4513 = vlaneseq
        %v4514 = vshrl.u32 %v4513, 7
        %v4515 = vsub.s32 0, %v4514
        %v4516 = vrot.slane %v4512, %v4515
        %v4517 = vmul.f32 %v3432, %v4516
        %v4518 = vmul.f32 %v3433, %v4516
        %v4519 = vmul.f32 %v3434, %v4516
        %v4520 = vmul.f32 %v3435, %v4516
        %v4521 = vsel %vm4135, %v4517, 0.0
        %4522 = vadd.xlane.f32.xlu0 %v4521
        %v4523 = vpop.xlane.xlu0 %4522
        %v4524 = vsel %vm4135, %v4518, 0.0
        %4525 = vadd.xlane.f32.xlu0 %v4524
        %v4526 = vpop.xlane.xlu0 %4525
        %v4527 = vsel %vm4135, %v4519, 0.0
        %4528 = vadd.xlane.f32.xlu0 %v4527
        %v4529 = vpop.xlane.xlu0 %4528
        %v4530 = vsel %vm4135, %v4520, 0.0
        %4531 = vadd.xlane.f32.xlu0 %v4530
        %v4532 = vpop.xlane.xlu0 %4531
        %v4533 = vadd.f32 %v4523, %v3436
        %v4534 = vadd.f32 %v4526, %v3437
        %v4535 = vadd.f32 %v4529, %v3438
        %v4536 = vadd.f32 %v4532, %v3439
        %v4537 = vxor.u32 %v4533, 2147483648
        %v4538 = vxor.u32 %v4534, 2147483648
        %v4539 = vxor.u32 %v4535, 2147483648
        %v4540 = vxor.u32 %v4536, 2147483648
        %v4541 = vmul.f32 %v4537, 1.442695
        %v4542 = vpow.pop %v4541
        %v4543 = vmul.f32 %v4538, 1.442695
        %v4544 = vpow.pop %v4543
        %v4545 = vmul.f32 %v4539, 1.442695
        %v4546 = vpow.pop %v4545
        %v4547 = vmul.f32 %v4540, 1.442695
        %v4548 = vpow.pop %v4547
        %v4549 = vadd.f32 %v4542, 1.0
        %v4550 = vadd.f32 %v4544, 1.0
        %v4551 = vadd.f32 %v4546, 1.0
        %v4552 = vadd.f32 %v4548, 1.0
        %v4553 = vrcp.pop %v4549
        %v4554 = vmul.f32 1.0, %v4553
        %v4555 = vrcp.pop %v4550
        %v4556 = vmul.f32 1.0, %v4555
        %v4557 = vrcp.pop %v4551
        %v4558 = vmul.f32 1.0, %v4557
        %v4559 = vrcp.pop %v4552
        %v4560 = vmul.f32 1.0, %v4559
        %4562 = vset.pattern.permute.xlu0 0
        %4563 = vperm.xlu0 %4562, %v4554
        %v4564 = vpop.permute.xlu0 %4563
        %4567 = vset.pattern.permute.xlu0 0
        %4568 = vperm.xlu0 %4567, %v4556
        %v4569 = vpop.permute.xlu0 %4568
        %4572 = vset.pattern.permute.xlu0 0
        %4573 = vperm.xlu0 %4572, %v4558
        %v4574 = vpop.permute.xlu0 %4573
        %4577 = vset.pattern.permute.xlu0 0
        %4578 = vperm.xlu0 %4577, %v4560
        %v4579 = vpop.permute.xlu0 %4578
        %v4581 = vmul.f32 %v4468, %v4564
        %v4582 = vmul.f32 %v4469, %v4569
        %v4583 = vmul.f32 %v4470, %v4574
        %v4584 = vmul.f32 %v4471, %v4579
        %4589 = vrot.lane.b32.xlu0 %v4581, 64
        %v4590 = vpop.permute.xlu0 %4589
        %4591 = vrot.lane.b32.xlu0 %v4582, 64
        %v4592 = vpop.permute.xlu0 %4591
        %4593 = vrot.lane.b32.xlu0 %v4583, 64
        %v4594 = vpop.permute.xlu0 %4593
        %4595 = vrot.lane.b32.xlu0 %v4584, 64
        %v4596 = vpop.permute.xlu0 %4595
        %v4601 = vsel %vm2580, %v4225, %v4590
        %v4602 = vsel %vm2580, %v4226, %v4592
        %v4603 = vsel %vm2580, %v4227, %v4594
        %v4604 = vsel %vm2580, %v4228, %v4596
        %v4605 = vld [vmem:[%s21] sm:$0xf]
        %v4606 = vld [vmem:[%s21 + $0x4] sm:$0xf]
        %v4607 = vpack.c.bf16 %v4602, %v4601
        %v4608 = vpack.c.bf16 %v4604, %v4603
        %v4609 = vld [vmem:[%s22] sm:$0xff]
        %v4610 = vld [vmem:[%s22 + $0x8] sm:$0xff]
        %4612 = vset.pattern.permute.xlu0 0
        %4613 = vperm.xlu0 %4612, %v4609
        %v4614 = vpop.permute.xlu0 %4613
        %4617 = vset.pattern.permute.xlu0 0
        %4618 = vperm.xlu0 %4617, %v4610
        %v4619 = vpop.permute.xlu0 %4618
        %v4623 = vunpack.c.l.b16 %v4605
        %v4624 = vunpack.c.l.b16 %v4606
        %v4625 = vpack.c.b16 %v4624, %v4623
        %vm4626 = vcmask 261120
        %v4628 = vsel %vm4626, %v4625, 0
        %4630 = vmatprep.subr.bf16.mxu0 0
        %4631 = vmatpush1.bf16.msra.mxu0 0
        %4632 = vmatprep.subr.bf16.mxu0 0
        %4633 = vmatpush1.bf16.msra.mxu0 0
        %4634 = vmatprep.subr.bf16.mxu0 0
        %4635 = vmatpush1.bf16.msra.mxu0 0
        %4636 = vmatprep.subr.bf16.mxu0 0
        %4637 = vmatpush1.bf16.msra.mxu0 0
        %4638 = vmatprep.subr.bf16.mxu0 0
        %4639 = vmatpush1.bf16.msra.mxu0 0
        %4640 = vmatprep.subr.bf16.mxu0 0
        %4641 = vmatpush1.bf16.msra.mxu0 0
        %4642 = vmatprep.subr.bf16.mxu0 0
        %4643 = vmatpush1.bf16.msra.mxu0 %v4608
        %4644 = vmatprep.subr.bf16.mxu0 0
        %4645 = vmatpush1.bf16.msra.mxu0 %v4607
        %4646 = vmatprep.subr.bf16.mxu0 0
        %4647 = vmatpush2.bf16.msra.mxu0 0
        %4648 = vmatprep.subr.bf16.mxu0 0
        %4649 = vmatpush2.bf16.msra.mxu0 0
        %4650 = vmatprep.subr.bf16.mxu0 0
        %4651 = vmatpush2.bf16.msra.mxu0 0
        %4652 = vmatprep.subr.bf16.mxu0 0
        %4653 = vmatpush2.bf16.msra.mxu0 0
        %4654 = vmatprep.subr.bf16.mxu0 0
        %4655 = vmatpush2.bf16.msra.mxu0 0
        %4656 = vmatprep.subr.bf16.mxu0 0
        %4657 = vmatpush2.bf16.msra.mxu0 0
        %4658 = vmatprep.subr.bf16.mxu0 0
        %4659 = vmatpush2.bf16.msra.mxu0 0
        %4660 = vmatprep.subr.bf16.mxu0 0
        %4661 = vmatpush2.bf16.msra.mxu0 0
        %4662 = vmatprep.mubr.bf16.mxu0 0
        %4663 = vmatmul.mubr.bf16.gmra.mxu0 %v4628
        %v4664 = vpop.f32.mrf.mxu0
        %v4665 = vadd.f32 %v4614, %v4664
        %v4666 = vpop.f32.mrf.mxu0
        %v4667 = vpop.f32.mrf.mxu0
        %v4668 = vadd.f32 %v4619, %v4667
        %v4669 = vpop.f32.mrf.mxu0
        %4670 = vdwg.mxu0
        %v4671 = vadd.f32 %v4665, %v3219
        %v4672 = vadd.f32 %v4668, %v3222
        %4673 = vst [vmem:[%s703] sm:$0xff] %v4671
        %4674 = vst [vmem:[%s703 + $0x8] sm:$0xff] %v4672
        %s4675 = sand.u32 %s533, 1
        %s4676 = scalar_lea.sflag [#allocation3], %s4675
        %s4677 = sand.u32 %s533, 1
        %s4678 = smul.addr %s4677, 16
        %s4679 = scalar_lea.vmem [#allocation2], %s4678
        // Predicated region
        $region113: #{tpu_custom_call.1} parent=111 // pred_check
          %p4680 = pneg %p543
        $region114: #{tpu_custom_call.1} parent=111 // pred_check_branch
          %4682 = sbr.rel (%p4680) target = $region116
        $region115: #{tpu_custom_call.1} parent=111 // pred_region
          %s4684 = ssub.s32 256, 256
          %4685 = vsyncadd %s4676, %s4684
          %s4686 = smul.addr %s37, 2
          %s4687 = smul.addr %s4686, 128
          %s4688 = scalar_lea.hbm %s23, %s4687
          %s4689 = sshll.u32 %s4679, 4
          %s4690 = int_to_ptr.vmem [resolvable:$true] %s4689
          %4695 = dma.vmem_to_hbm [thread:$0]  %s4690, 256, %s4688, %s4676, 128, 128, 8
        $region116: #{tpu_custom_call.1} parent=111 // pred_fallthru
          _
      $region112: #{tpu_custom_call.1} parent=5 // pred_fallthru
        _
      %p4696 = scmp.le.s32.totalorder 2, %s32
      // Predicated region
      $region117: #{tpu_custom_call.1} parent=5 // pred_check
        %p4697 = pneg %p4696
      $region118: #{tpu_custom_call.1} parent=5 // pred_check_branch
        %4699 = sbr.rel (%p4697) target = $region120
      $region119: #{tpu_custom_call.1} parent=5 // pred_region
        %s4700 = ssub.s32 %s32, 2
        // Predicated region
        $region121: #{tpu_custom_call.1} parent=119 // pred_check
          %p4701 = pneg %p549
        $region122: #{tpu_custom_call.1} parent=119 // pred_check_branch
          %4703 = sbr.rel (%p4701) target = $region124
        $region123: #{tpu_custom_call.1} parent=119 // pred_region
          %s4704 = sand.u32 %s534, 1
          %s4705 = scalar_lea.sflag [#allocation3], %s4704
          %s4706 = sand.u32 %s534, 1
          %s4707 = smul.addr %s4706, 16
          %s4708 = scalar_lea.vmem [#allocation2], %s4707
          %4709 = dma.done %s4705, 256
        $region124: #{tpu_custom_call.1} parent=119 // pred_fallthru
          _
      $region120: #{tpu_custom_call.1} parent=5 // pred_fallthru
        _
    $region6: #{tpu_custom_call.1} parent=1 // loop_footer
      %s36 = sadd.s32 1, %s32
    $region7: #{tpu_custom_call.1} parent=1 // loop_footer_branch
      %31 = sbr.rel target = $region3
    $region8: #{tpu_custom_call.1} parent=1 // loop_exit
      _
    %4710 = vsyncpa [#allocation3], 1
    %s4711 = scalar_lea.sflag [#allocation3], 1
    %4712 = vsyncpa %s4711, 1

</llo_original>
